<compile_context>
chip_gen: v6e
topology: v6e:2x2x1
jax: 0.10.0
libtpu: 0.0.40
codegen_flags: <defaults>
</compile_context>

<pallas_src>
import jax
import jax.numpy as jnp
import numpy as np
from jax import lax
from jax.experimental import pallas as pl
from jax.experimental.pallas import tpu as pltpu


def _bilstm_kernel(x_ref, lens_ref, wi_ref, bi_ref, whf_ref, whb_ref,
                   out_ref,
                   pf_ref, pb_ref, hf, cf, hb, cb):
    T, Bp, I = x_ref.shape
    Hp = whf_ref.shape[0]
    G = 4 * Hp

    # ---- Hoisted input projection for BOTH directions in one big matmul
    #      (bias folded in).  Removes a matmul + broadcast-add from every step.
    x2d = x_ref[...].reshape(T * Bp, I)
    proj = (jnp.dot(x2d, wi_ref[...], preferred_element_type=jnp.float32)
            + bi_ref[...])                                   # (T*Bp, 2G) f32
    pf_ref[...] = proj[:, 0:G].reshape(T, Bp, G)
    pb_ref[...] = proj[:, G:2 * G].reshape(T, Bp, G)

    # ---- Init recurrent state.
    hf[...] = jnp.zeros_like(hf)
    cf[...] = jnp.zeros_like(cf)
    hb[...] = jnp.zeros_like(hb)
    cb[...] = jnp.zeros_like(cb)

    # Hoist loop-invariant loads out of the recurrence.
    lens = lens_ref[...]            # (Bp, 1) int32
    whf = whf_ref[...]              # (Hp, 4Hp)
    whb = whb_ref[...]
    wh_dtype = whf.dtype            # bf16 on v6e/v7x if requested; f32 otherwise

    def cell(gx, h, c, wh):
        gates = gx + jnp.dot(h.astype(wh_dtype), wh,
                             preferred_element_type=jnp.float32)
        i = jax.nn.sigmoid(gates[:, 0:Hp])          # lane-aligned gate slices
        f = jax.nn.sigmoid(gates[:, Hp:2 * Hp])
        g = jnp.tanh(gates[:, 2 * Hp:3 * Hp])
        o = jax.nn.sigmoid(gates[:, 3 * Hp:4 * Hp])
        c_new = f * c + i * g
        h_new = o * jnp.tanh(c_new)
        return h_new, c_new

    # ---- Fused forward + backward recurrence: two independent chains per
    #      iteration keep MXU/EUP/VPU fed during each other's latency stalls.
    #      Packed-sequence semantics: state updates only while t < length, so
    #      hf ends as the forward output at t = len-1 and hb as the backward
    #      output at t = 0 for every batch row.
    def step(s, carry):
        tf = s
        tb = T - 1 - s
        hfn, cfn = cell(pf_ref[tf], hf[...], cf[...], whf)
        hbn, cbn = cell(pb_ref[tb], hb[...], cb[...], whb)
        vf = tf < lens
        vb = tb < lens
        hf[...] = jnp.where(vf, hfn, hf[...])
        cf[...] = jnp.where(vf, cfn, cf[...])
        hb[...] = jnp.where(vb, hbn, hb[...])
        cb[...] = jnp.where(vb, cbn, cb[...])
        return carry

    unroll = True if T <= 16 else 4
    lax.fori_loop(0, T, step, 0, unroll=unroll)

    # ---- Lane-dense, full-tile output writes (one row per direction).
    out_ref[0, :, :] = hf[...]
    out_ref[1, :, :] = hb[...]


def _pad_gate_cols(w, H, Hp):
    """(R, 4H) with PyTorch gate order [i|f|g|o] -> (R, 4Hp); gate k occupies
    columns [k*Hp, k*Hp + H), remaining columns are zero (lane-aligned gates)."""
    gates = [jnp.pad(w[:, k * H:(k + 1) * H], ((0, 0), (0, Hp - H)))
             for k in range(4)]
    return jnp.concatenate(gates, axis=1)


def rnn_forward(x, lengths, params, *, matmul_dtype=jnp.float32):
    """x: [T, B, I] float32, lengths: [B] int32 -> [B, 2H] float32.

    matmul_dtype: dtype of the MXU operands (x / W_ih / W_hh / h).  Use
    jnp.bfloat16 on v6e / v7x for full-rate MXU (accumulation and all state
    stay f32); keep f32 to match the strict f32 reference tolerance.
    """
    T, B, I = x.shape
    H = params["wh_f"].shape[0]

    Bp = ((B + 7) // 8) * 8            # sublane-pad batch
    Hp = ((H + 127) // 128) * 128      # lane-pad hidden -> aligned gate slices
    G = 4 * Hp

    # Repack weights: gate-aligned columns, zero-padded rows for W_hh, both
    # directions' input projections concatenated into one matmul operand,
    # biases (b_ih + b_hh) folded into the projection.
    wi_f = _pad_gate_cols(params["wi_f"], H, Hp)                         # (I, G)
    wi_b = _pad_gate_cols(params["wi_b"], H, Hp)
    wh_f = jnp.zeros((Hp, G), jnp.float32).at[:H].set(
        _pad_gate_cols(params["wh_f"], H, Hp))
    wh_b = jnp.zeros((Hp, G), jnp.float32).at[:H].set(
        _pad_gate_cols(params["wh_b"], H, Hp))
    b_f = _pad_gate_cols(params["b_f"], H, Hp)                           # (1, G)
    b_b = _pad_gate_cols(params["b_b"], H, Hp)

    wi = jnp.concatenate([wi_f, wi_b], axis=1).astype(matmul_dtype)      # (I, 2G)
    bi = jnp.concatenate([b_f, b_b], axis=1).astype(jnp.float32)         # (1, 2G)
    wh_f = wh_f.astype(matmul_dtype)
    wh_b = wh_b.astype(matmul_dtype)

    # Zero-pad batch rows (finite padding; masked out by lens=0 anyway).
    x_p = jnp.zeros((T, Bp, I), matmul_dtype).at[:, :B, :].set(
        x.astype(matmul_dtype))
    lens_p = jnp.zeros((Bp, 1), jnp.int32).at[:B, 0].set(
        lengths.astype(jnp.int32))

    vmem = pl.BlockSpec(memory_space=pltpu.MemorySpace.VMEM)
    out = pl.pallas_call(
        _bilstm_kernel,
        out_shape=jax.ShapeDtypeStruct((2, Bp, Hp), jnp.float32),
        in_specs=[vmem] * 6,
        out_specs=vmem,
        scratch_shapes=[
            pltpu.VMEM((T, Bp, G), jnp.float32),   # fwd input projections
            pltpu.VMEM((T, Bp, G), jnp.float32),   # bwd input projections
            pltpu.VMEM((Bp, Hp), jnp.float32),     # h forward
            pltpu.VMEM((Bp, Hp), jnp.float32),     # c forward
            pltpu.VMEM((Bp, Hp), jnp.float32),     # h backward
            pltpu.VMEM((Bp, Hp), jnp.float32),     # c backward
        ],
    )(x_p, lens_p, wi, bi, wh_f, wh_b)

    return jnp.concatenate([out[0, :B, :H], out[1, :B, :H]], axis=-1)


def rnn_forward_ref(x, lengths, p):
    """Pure-JAX reference of the same packed-sequence bi-LSTM semantics."""
    T, B, I = x.shape
    H = p["wh_f"].shape[0]

    def cell(xt, h, c, wi, wh, b):
        gates = xt @ wi + h @ wh + b
        i = jax.nn.sigmoid(gates[:, :H])
        f = jax.nn.sigmoid(gates[:, H:2 * H])
        g = jnp.tanh(gates[:, 2 * H:3 * H])
        o = jax.nn.sigmoid(gates[:, 3 * H:])
        c = f * c + i * g
        return o * jnp.tanh(c), c

    hf = jnp.zeros((B, H), jnp.float32)
    cf = jnp.zeros((B, H), jnp.float32)
    for t in range(T):
        hn, cn = cell(x[t], hf, cf, p["wi_f"], p["wh_f"], p["b_f"])
        m = (t < lengths)[:, None]
        hf = jnp.where(m, hn, hf)
        cf = jnp.where(m, cn, cf)

    hb = jnp.zeros((B, H), jnp.float32)
    cb = jnp.zeros((B, H), jnp.float32)
    for t in range(T - 1, -1, -1):
        hn, cn = cell(x[t], hb, cb, p["wi_b"], p["wh_b"], p["b_b"])
        m = (t < lengths)[:, None]
        hb = jnp.where(m, hn, hb)
        cb = jnp.where(m, cn, cb)

    return jnp.concatenate([hf, hb], axis=-1)


def init_params(key, input_size, hidden_size):
    """Deterministic init mirroring nn.LSTM's U(-1/sqrt(H), 1/sqrt(H))."""
    k = 1.0 / np.sqrt(hidden_size)
    keys = jax.random.split(key, 8)

    def u(kk, shape):
        return jax.random.uniform(kk, shape, jnp.float32, -k, k)

    H4 = 4 * hidden_size
    return {
        # forward direction (weights already transposed for x @ W)
        "wi_f": u(keys[0], (input_size, H4)),
        "wh_f": u(keys[1], (hidden_size, H4)),
        "b_f": u(keys[2], (1, H4)) + u(keys[3], (1, H4)),   # b_ih + b_hh
        # backward direction
        "wi_b": u(keys[4], (input_size, H4)),
        "wh_b": u(keys[5], (hidden_size, H4)),
        "b_b": u(keys[6], (1, H4)) + u(keys[7], (1, H4)),
    }


if __name__ == "__main__":
    T, B, I, H = 8, 2, 16, 32  # seq=8, batch=2, input_size=16, hidden_size=32

    key = jax.random.PRNGKey(0)
    kx, kp = jax.random.split(key)
    x = jax.random.normal(kx, (T, B, I), jnp.float32)
    lengths = jnp.array([8, 5], jnp.int32)  # variable-length (packed) sequences
    params = init_params(kp, I, H)

    out = rnn_forward(x, lengths, params)   # matmul_dtype=jnp.bfloat16 on v6e/v7x
    out = jax.block_until_ready(out)

    ref = rnn_forward_ref(x, lengths, params)
    np.testing.assert_allclose(np.asarray(out), np.asarray(ref),
                               rtol=1e-5, atol=1e-5)
    assert out.shape == (B, 2 * H)
    print("KERNEL_OK")
</pallas_src>

<mosaic_0001>
module attributes {stable_mosaic.version = 11 : i64} {
  func.func @_bilstm_kernel(%arg0: memref<8x8x16xf32, #tpu.memory_space<vmem>>, %arg1: memref<8x1xi32, #tpu.memory_space<vmem>>, %arg2: memref<16x1024xf32, #tpu.memory_space<vmem>>, %arg3: memref<1x1024xf32, #tpu.memory_space<vmem>>, %arg4: memref<128x512xf32, #tpu.memory_space<vmem>>, %arg5: memref<128x512xf32, #tpu.memory_space<vmem>>, %arg6: memref<2x8x128xf32, #tpu.memory_space<vmem>>, %arg7: memref<8x8x512xf32, #tpu.memory_space<vmem>>, %arg8: memref<8x8x512xf32, #tpu.memory_space<vmem>>, %arg9: memref<8x128xf32, #tpu.memory_space<vmem>>, %arg10: memref<8x128xf32, #tpu.memory_space<vmem>>, %arg11: memref<8x128xf32, #tpu.memory_space<vmem>>, %arg12: memref<8x128xf32, #tpu.memory_space<vmem>>) attributes {dimension_semantics = [], scalar_prefetch = 0 : i64, scratch_operands = 6 : i64, tpu.core_type = #tpu.core_type<tc>} {
    %c0 = arith.constant 0 : index
    %c0_0 = arith.constant 0 : index
    %c0_1 = arith.constant 0 : index
    %0 = vector.load %arg0[%c0, %c0_0, %c0_1] : memref<8x8x16xf32, #tpu.memory_space<vmem>>, vector<8x8x16xf32>
    %1 = vector.shape_cast %0 : vector<8x8x16xf32> to vector<64x16xf32>
    %c0_2 = arith.constant 0 : index
    %c0_3 = arith.constant 0 : index
    %2 = vector.load %arg2[%c0_2, %c0_3] : memref<16x1024xf32, #tpu.memory_space<vmem>>, vector<16x1024xf32>
    %cst = arith.constant dense<0.000000e+00> : vector<64x1024xf32>
    %3 = tpu.matmul %1, %2, %cst {dimension_numbers = #tpu.dot_dimension_numbers<[1], [0], [0], [1], [0, 0, 1, 1], [], []>} : vector<64x16xf32>, vector<16x1024xf32>, vector<64x1024xf32> -> vector<64x1024xf32>
    %c0_4 = arith.constant 0 : index
    %c0_5 = arith.constant 0 : index
    %4 = vector.load %arg3[%c0_4, %c0_5] : memref<1x1024xf32, #tpu.memory_space<vmem>>, vector<1x1024xf32>
    %5 = vector.broadcast %4 : vector<1x1024xf32> to vector<64x1024xf32>
    %6 = arith.addf %3, %5 : vector<64x1024xf32>
    %7 = vector.extract_strided_slice %6 {offsets = [0, 0], sizes = [64, 512], strides = [1, 1]} : vector<64x1024xf32> to vector<64x512xf32>
    %8 = vector.shape_cast %7 : vector<64x512xf32> to vector<8x8x512xf32>
    %c0_6 = arith.constant 0 : index
    %c0_7 = arith.constant 0 : index
    %c0_8 = arith.constant 0 : index
    %9 = vector.load %arg7[%c0_6, %c0_7, %c0_8] : memref<8x8x512xf32, #tpu.memory_space<vmem>>, vector<8x8x512xf32>
    tpu.vector_store %arg7[%c0_6, %c0_7, %c0_8], %8 {strides = array<i32>} : memref<8x8x512xf32, #tpu.memory_space<vmem>>, vector<8x8x512xf32>,
    %10 = vector.extract_strided_slice %6 {offsets = [0, 512], sizes = [64, 512], strides = [1, 1]} : vector<64x1024xf32> to vector<64x512xf32>
    %11 = vector.shape_cast %10 : vector<64x512xf32> to vector<8x8x512xf32>
    %c0_9 = arith.constant 0 : index
    %c0_10 = arith.constant 0 : index
    %c0_11 = arith.constant 0 : index
    %12 = vector.load %arg8[%c0_9, %c0_10, %c0_11] : memref<8x8x512xf32, #tpu.memory_space<vmem>>, vector<8x8x512xf32>
    tpu.vector_store %arg8[%c0_9, %c0_10, %c0_11], %11 {strides = array<i32>} : memref<8x8x512xf32, #tpu.memory_space<vmem>>, vector<8x8x512xf32>,
    %cst_12 = arith.constant 0.000000e+00 : f32
    %13 = vector.broadcast %cst_12 : f32 to vector<8x128xf32>
    %c0_13 = arith.constant 0 : index
    %c0_14 = arith.constant 0 : index
    %14 = vector.load %arg9[%c0_13, %c0_14] : memref<8x128xf32, #tpu.memory_space<vmem>>, vector<8x128xf32>
    tpu.vector_store %arg9[%c0_13, %c0_14], %13 {strides = array<i32>} : memref<8x128xf32, #tpu.memory_space<vmem>>, vector<8x128xf32>,
    %cst_15 = arith.constant 0.000000e+00 : f32
    %15 = vector.broadcast %cst_15 : f32 to vector<8x128xf32>
    %c0_16 = arith.constant 0 : index
    %c0_17 = arith.constant 0 : index
    %16 = vector.load %arg10[%c0_16, %c0_17] : memref<8x128xf32, #tpu.memory_space<vmem>>, vector<8x128xf32>
    tpu.vector_store %arg10[%c0_16, %c0_17], %15 {strides = array<i32>} : memref<8x128xf32, #tpu.memory_space<vmem>>, vector<8x128xf32>,
    %cst_18 = arith.constant 0.000000e+00 : f32
    %17 = vector.broadcast %cst_18 : f32 to vector<8x128xf32>
    %c0_19 = arith.constant 0 : index
    %c0_20 = arith.constant 0 : index
    %18 = vector.load %arg11[%c0_19, %c0_20] : memref<8x128xf32, #tpu.memory_space<vmem>>, vector<8x128xf32>
    tpu.vector_store %arg11[%c0_19, %c0_20], %17 {strides = array<i32>} : memref<8x128xf32, #tpu.memory_space<vmem>>, vector<8x128xf32>,
    %cst_21 = arith.constant 0.000000e+00 : f32
    %19 = vector.broadcast %cst_21 : f32 to vector<8x128xf32>
    %c0_22 = arith.constant 0 : index
    %c0_23 = arith.constant 0 : index
    %20 = vector.load %arg12[%c0_22, %c0_23] : memref<8x128xf32, #tpu.memory_space<vmem>>, vector<8x128xf32>
    tpu.vector_store %arg12[%c0_22, %c0_23], %19 {strides = array<i32>} : memref<8x128xf32, #tpu.memory_space<vmem>>, vector<8x128xf32>,
    %c0_24 = arith.constant 0 : index
    %c0_25 = arith.constant 0 : index
    %21 = vector.load %arg1[%c0_24, %c0_25] : memref<8x1xi32, #tpu.memory_space<vmem>>, vector<8x1xi32>
    %c0_26 = arith.constant 0 : index
    %c0_27 = arith.constant 0 : index
    %22 = vector.load %arg4[%c0_26, %c0_27] : memref<128x512xf32, #tpu.memory_space<vmem>>, vector<128x512xf32>
    %c0_28 = arith.constant 0 : index
    %c0_29 = arith.constant 0 : index
    %23 = vector.load %arg5[%c0_28, %c0_29] : memref<128x512xf32, #tpu.memory_space<vmem>>, vector<128x512xf32>
    %c0_i32 = arith.constant 0 : i32
    %c7_i32 = arith.constant 7 : i32
    %24 = arith.subi %c7_i32, %c0_i32 : i32
    %25 = arith.index_cast %c0_i32 : i32 to index
    %c0_30 = arith.constant 0 : index
    %c0_31 = arith.constant 0 : index
    %26 = vector.load %arg7[%25, %c0_30, %c0_31] : memref<8x8x512xf32, #tpu.memory_space<vmem>>, vector<1x8x512xf32>
    %27 = vector.shape_cast %26 : vector<1x8x512xf32> to vector<8x512xf32>
    %c0_32 = arith.constant 0 : index
    %c0_33 = arith.constant 0 : index
    %28 = vector.load %arg9[%c0_32, %c0_33] : memref<8x128xf32, #tpu.memory_space<vmem>>, vector<8x128xf32>
    %c0_34 = arith.constant 0 : index
    %c0_35 = arith.constant 0 : index
    %29 = vector.load %arg10[%c0_34, %c0_35] : memref<8x128xf32, #tpu.memory_space<vmem>>, vector<8x128xf32>
    %cst_36 = arith.constant dense<0.000000e+00> : vector<8x512xf32>
    %30 = tpu.matmul %28, %22, %cst_36 {dimension_numbers = #tpu.dot_dimension_numbers<[1], [0], [0], [1], [0, 0, 1, 1], [], []>} : vector<8x128xf32>, vector<128x512xf32>, vector<8x512xf32> -> vector<8x512xf32>
    %31 = arith.addf %27, %30 : vector<8x512xf32>
    %32 = vector.extract_strided_slice %31 {offsets = [0, 0], sizes = [8, 128], strides = [1, 1]} : vector<8x512xf32> to vector<8x128xf32>
    %33 = arith.negf %32 : vector<8x128xf32>
    %34 = math.exp %33 : vector<8x128xf32>
    %cst_37 = arith.constant 1.000000e+00 : f32
    %35 = vector.broadcast %cst_37 : f32 to vector<8x128xf32>
    %36 = arith.addf %35, %34 : vector<8x128xf32>
    %37 = arith.divf %35, %36 : vector<8x128xf32>
    %38 = vector.extract_strided_slice %31 {offsets = [0, 128], sizes = [8, 128], strides = [1, 1]} : vector<8x512xf32> to vector<8x128xf32>
    %39 = arith.negf %38 : vector<8x128xf32>
    %40 = math.exp %39 : vector<8x128xf32>
    %cst_38 = arith.constant 1.000000e+00 : f32
    %41 = vector.broadcast %cst_38 : f32 to vector<8x128xf32>
    %42 = arith.addf %41, %40 : vector<8x128xf32>
    %43 = arith.divf %41, %42 : vector<8x128xf32>
    %44 = vector.extract_strided_slice %31 {offsets = [0, 256], sizes = [8, 128], strides = [1, 1]} : vector<8x512xf32> to vector<8x128xf32>
    %45 = math.tanh %44 : vector<8x128xf32>
    %46 = vector.extract_strided_slice %31 {offsets = [0, 384], sizes = [8, 128], strides = [1, 1]} : vector<8x512xf32> to vector<8x128xf32>
    %47 = arith.negf %46 : vector<8x128xf32>
    %48 = math.exp %47 : vector<8x128xf32>
    %cst_39 = arith.constant 1.000000e+00 : f32
    %49 = vector.broadcast %cst_39 : f32 to vector<8x128xf32>
    %50 = arith.addf %49, %48 : vector<8x128xf32>
    %51 = arith.divf %49, %50 : vector<8x128xf32>
    %52 = arith.mulf %43, %29 : vector<8x128xf32>
    %53 = arith.mulf %37, %45 : vector<8x128xf32>
    %54 = arith.addf %52, %53 : vector<8x128xf32>
    %55 = math.tanh %54 : vector<8x128xf32>
    %56 = arith.mulf %51, %55 : vector<8x128xf32>
    %57 = arith.index_cast %24 : i32 to index
    %c0_40 = arith.constant 0 : index
    %c0_41 = arith.constant 0 : index
    %58 = vector.load %arg8[%57, %c0_40, %c0_41] : memref<8x8x512xf32, #tpu.memory_space<vmem>>, vector<1x8x512xf32>
    %59 = vector.shape_cast %58 : vector<1x8x512xf32> to vector<8x512xf32>
    %c0_42 = arith.constant 0 : index
    %c0_43 = arith.constant 0 : index
    %60 = vector.load %arg11[%c0_42, %c0_43] : memref<8x128xf32, #tpu.memory_space<vmem>>, vector<8x128xf32>
    %c0_44 = arith.constant 0 : index
    %c0_45 = arith.constant 0 : index
    %61 = vector.load %arg12[%c0_44, %c0_45] : memref<8x128xf32, #tpu.memory_space<vmem>>, vector<8x128xf32>
    %cst_46 = arith.constant dense<0.000000e+00> : vector<8x512xf32>
    %62 = tpu.matmul %60, %23, %cst_46 {dimension_numbers = #tpu.dot_dimension_numbers<[1], [0], [0], [1], [0, 0, 1, 1], [], []>} : vector<8x128xf32>, vector<128x512xf32>, vector<8x512xf32> -> vector<8x512xf32>
    %63 = arith.addf %59, %62 : vector<8x512xf32>
    %64 = vector.extract_strided_slice %63 {offsets = [0, 0], sizes = [8, 128], strides = [1, 1]} : vector<8x512xf32> to vector<8x128xf32>
    %65 = arith.negf %64 : vector<8x128xf32>
    %66 = math.exp %65 : vector<8x128xf32>
    %cst_47 = arith.constant 1.000000e+00 : f32
    %67 = vector.broadcast %cst_47 : f32 to vector<8x128xf32>
    %68 = arith.addf %67, %66 : vector<8x128xf32>
    %69 = arith.divf %67, %68 : vector<8x128xf32>
    %70 = vector.extract_strided_slice %63 {offsets = [0, 128], sizes = [8, 128], strides = [1, 1]} : vector<8x512xf32> to vector<8x128xf32>
    %71 = arith.negf %70 : vector<8x128xf32>
    %72 = math.exp %71 : vector<8x128xf32>
    %cst_48 = arith.constant 1.000000e+00 : f32
    %73 = vector.broadcast %cst_48 : f32 to vector<8x128xf32>
    %74 = arith.addf %73, %72 : vector<8x128xf32>
    %75 = arith.divf %73, %74 : vector<8x128xf32>
    %76 = vector.extract_strided_slice %63 {offsets = [0, 256], sizes = [8, 128], strides = [1, 1]} : vector<8x512xf32> to vector<8x128xf32>
    %77 = math.tanh %76 : vector<8x128xf32>
    %78 = vector.extract_strided_slice %63 {offsets = [0, 384], sizes = [8, 128], strides = [1, 1]} : vector<8x512xf32> to vector<8x128xf32>
    %79 = arith.negf %78 : vector<8x128xf32>
    %80 = math.exp %79 : vector<8x128xf32>
    %cst_49 = arith.constant 1.000000e+00 : f32
    %81 = vector.broadcast %cst_49 : f32 to vector<8x128xf32>
    %82 = arith.addf %81, %80 : vector<8x128xf32>
    %83 = arith.divf %81, %82 : vector<8x128xf32>
    %84 = arith.mulf %75, %61 : vector<8x128xf32>
    %85 = arith.mulf %69, %77 : vector<8x128xf32>
    %86 = arith.addf %84, %85 : vector<8x128xf32>
    %87 = math.tanh %86 : vector<8x128xf32>
    %88 = arith.mulf %83, %87 : vector<8x128xf32>
    %89 = vector.broadcast %c0_i32 : i32 to vector<8x1xi32>
    %90 = arith.cmpi slt, %89, %21 : vector<8x1xi32>
    %91 = vector.broadcast %24 : i32 to vector<8x1xi32>
    %92 = arith.cmpi slt, %91, %21 : vector<8x1xi32>
    %c0_50 = arith.constant 0 : index
    %c0_51 = arith.constant 0 : index
    %93 = vector.load %arg9[%c0_50, %c0_51] : memref<8x128xf32, #tpu.memory_space<vmem>>, vector<8x128xf32>
    %94 = vector.shape_cast %90 : vector<8x1xi1> to vector<8x1xi1>
    %95 = vector.broadcast %94 : vector<8x1xi1> to vector<8x128xi1>
    %96 = arith.select %95, %56, %93 : vector<8x128xi1>, vector<8x128xf32>
    %c0_52 = arith.constant 0 : index
    %c0_53 = arith.constant 0 : index
    %97 = vector.load %arg9[%c0_52, %c0_53] : memref<8x128xf32, #tpu.memory_space<vmem>>, vector<8x128xf32>
    tpu.vector_store %arg9[%c0_52, %c0_53], %96 {strides = array<i32>} : memref<8x128xf32, #tpu.memory_space<vmem>>, vector<8x128xf32>,
    %c0_54 = arith.constant 0 : index
    %c0_55 = arith.constant 0 : index
    %98 = vector.load %arg10[%c0_54, %c0_55] : memref<8x128xf32, #tpu.memory_space<vmem>>, vector<8x128xf32>
    %99 = vector.shape_cast %90 : vector<8x1xi1> to vector<8x1xi1>
    %100 = vector.broadcast %99 : vector<8x1xi1> to vector<8x128xi1>
    %101 = arith.select %100, %54, %98 : vector<8x128xi1>, vector<8x128xf32>
    %c0_56 = arith.constant 0 : index
    %c0_57 = arith.constant 0 : index
    %102 = vector.load %arg10[%c0_56, %c0_57] : memref<8x128xf32, #tpu.memory_space<vmem>>, vector<8x128xf32>
    tpu.vector_store %arg10[%c0_56, %c0_57], %101 {strides = array<i32>} : memref<8x128xf32, #tpu.memory_space<vmem>>, vector<8x128xf32>,
    %c0_58 = arith.constant 0 : index
    %c0_59 = arith.constant 0 : index
    %103 = vector.load %arg11[%c0_58, %c0_59] : memref<8x128xf32, #tpu.memory_space<vmem>>, vector<8x128xf32>
    %104 = vector.shape_cast %92 : vector<8x1xi1> to vector<8x1xi1>
    %105 = vector.broadcast %104 : vector<8x1xi1> to vector<8x128xi1>
    %106 = arith.select %105, %88, %103 : vector<8x128xi1>, vector<8x128xf32>
    %c0_60 = arith.constant 0 : index
    %c0_61 = arith.constant 0 : index
    %107 = vector.load %arg11[%c0_60, %c0_61] : memref<8x128xf32, #tpu.memory_space<vmem>>, vector<8x128xf32>
    tpu.vector_store %arg11[%c0_60, %c0_61], %106 {strides = array<i32>} : memref<8x128xf32, #tpu.memory_space<vmem>>, vector<8x128xf32>,
    %c0_62 = arith.constant 0 : index
    %c0_63 = arith.constant 0 : index
    %108 = vector.load %arg12[%c0_62, %c0_63] : memref<8x128xf32, #tpu.memory_space<vmem>>, vector<8x128xf32>
    %109 = vector.shape_cast %92 : vector<8x1xi1> to vector<8x1xi1>
    %110 = vector.broadcast %109 : vector<8x1xi1> to vector<8x128xi1>
    %111 = arith.select %110, %86, %108 : vector<8x128xi1>, vector<8x128xf32>
    %c0_64 = arith.constant 0 : index
    %c0_65 = arith.constant 0 : index
    %112 = vector.load %arg12[%c0_64, %c0_65] : memref<8x128xf32, #tpu.memory_space<vmem>>, vector<8x128xf32>
    tpu.vector_store %arg12[%c0_64, %c0_65], %111 {strides = array<i32>} : memref<8x128xf32, #tpu.memory_space<vmem>>, vector<8x128xf32>,
    %c1_i32 = arith.constant 1 : i32
    %c7_i32_66 = arith.constant 7 : i32
    %113 = arith.subi %c7_i32_66, %c1_i32 : i32
    %114 = arith.index_cast %c1_i32 : i32 to index
    %c0_67 = arith.constant 0 : index
    %c0_68 = arith.constant 0 : index
    %115 = vector.load %arg7[%114, %c0_67, %c0_68] : memref<8x8x512xf32, #tpu.memory_space<vmem>>, vector<1x8x512xf32>
    %116 = vector.shape_cast %115 : vector<1x8x512xf32> to vector<8x512xf32>
    %c0_69 = arith.constant 0 : index
    %c0_70 = arith.constant 0 : index
    %117 = vector.load %arg9[%c0_69, %c0_70] : memref<8x128xf32, #tpu.memory_space<vmem>>, vector<8x128xf32>
    %c0_71 = arith.constant 0 : index
    %c0_72 = arith.constant 0 : index
    %118 = vector.load %arg10[%c0_71, %c0_72] : memref<8x128xf32, #tpu.memory_space<vmem>>, vector<8x128xf32>
    %cst_73 = arith.constant dense<0.000000e+00> : vector<8x512xf32>
    %119 = tpu.matmul %117, %22, %cst_73 {dimension_numbers = #tpu.dot_dimension_numbers<[1], [0], [0], [1], [0, 0, 1, 1], [], []>} : vector<8x128xf32>, vector<128x512xf32>, vector<8x512xf32> -> vector<8x512xf32>
    %120 = arith.addf %116, %119 : vector<8x512xf32>
    %121 = vector.extract_strided_slice %120 {offsets = [0, 0], sizes = [8, 128], strides = [1, 1]} : vector<8x512xf32> to vector<8x128xf32>
    %122 = arith.negf %121 : vector<8x128xf32>
    %123 = math.exp %122 : vector<8x128xf32>
    %cst_74 = arith.constant 1.000000e+00 : f32
    %124 = vector.broadcast %cst_74 : f32 to vector<8x128xf32>
    %125 = arith.addf %124, %123 : vector<8x128xf32>
    %126 = arith.divf %124, %125 : vector<8x128xf32>
    %127 = vector.extract_strided_slice %120 {offsets = [0, 128], sizes = [8, 128], strides = [1, 1]} : vector<8x512xf32> to vector<8x128xf32>
    %128 = arith.negf %127 : vector<8x128xf32>
    %129 = math.exp %128 : vector<8x128xf32>
    %cst_75 = arith.constant 1.000000e+00 : f32
    %130 = vector.broadcast %cst_75 : f32 to vector<8x128xf32>
    %131 = arith.addf %130, %129 : vector<8x128xf32>
    %132 = arith.divf %130, %131 : vector<8x128xf32>
    %133 = vector.extract_strided_slice %120 {offsets = [0, 256], sizes = [8, 128], strides = [1, 1]} : vector<8x512xf32> to vector<8x128xf32>
    %134 = math.tanh %133 : vector<8x128xf32>
    %135 = vector.extract_strided_slice %120 {offsets = [0, 384], sizes = [8, 128], strides = [1, 1]} : vector<8x512xf32> to vector<8x128xf32>
    %136 = arith.negf %135 : vector<8x128xf32>
    %137 = math.exp %136 : vector<8x128xf32>
    %cst_76 = arith.constant 1.000000e+00 : f32
    %138 = vector.broadcast %cst_76 : f32 to vector<8x128xf32>
    %139 = arith.addf %138, %137 : vector<8x128xf32>
    %140 = arith.divf %138, %139 : vector<8x128xf32>
    %141 = arith.mulf %132, %118 : vector<8x128xf32>
    %142 = arith.mulf %126, %134 : vector<8x128xf32>
    %143 = arith.addf %141, %142 : vector<8x128xf32>
    %144 = math.tanh %143 : vector<8x128xf32>
    %145 = arith.mulf %140, %144 : vector<8x128xf32>
    %146 = arith.index_cast %113 : i32 to index
    %c0_77 = arith.constant 0 : index
    %c0_78 = arith.constant 0 : index
    %147 = vector.load %arg8[%146, %c0_77, %c0_78] : memref<8x8x512xf32, #tpu.memory_space<vmem>>, vector<1x8x512xf32>
    %148 = vector.shape_cast %147 : vector<1x8x512xf32> to vector<8x512xf32>
    %c0_79 = arith.constant 0 : index
    %c0_80 = arith.constant 0 : index
    %149 = vector.load %arg11[%c0_79, %c0_80] : memref<8x128xf32, #tpu.memory_space<vmem>>, vector<8x128xf32>
    %c0_81 = arith.constant 0 : index
    %c0_82 = arith.constant 0 : index
    %150 = vector.load %arg12[%c0_81, %c0_82] : memref<8x128xf32, #tpu.memory_space<vmem>>, vector<8x128xf32>
    %cst_83 = arith.constant dense<0.000000e+00> : vector<8x512xf32>
    %151 = tpu.matmul %149, %23, %cst_83 {dimension_numbers = #tpu.dot_dimension_numbers<[1], [0], [0], [1], [0, 0, 1, 1], [], []>} : vector<8x128xf32>, vector<128x512xf32>, vector<8x512xf32> -> vector<8x512xf32>
    %152 = arith.addf %148, %151 : vector<8x512xf32>
    %153 = vector.extract_strided_slice %152 {offsets = [0, 0], sizes = [8, 128], strides = [1, 1]} : vector<8x512xf32> to vector<8x128xf32>
    %154 = arith.negf %153 : vector<8x128xf32>
    %155 = math.exp %154 : vector<8x128xf32>
    %cst_84 = arith.constant 1.000000e+00 : f32
    %156 = vector.broadcast %cst_84 : f32 to vector<8x128xf32>
    %157 = arith.addf %156, %155 : vector<8x128xf32>
    %158 = arith.divf %156, %157 : vector<8x128xf32>
    %159 = vector.extract_strided_slice %152 {offsets = [0, 128], sizes = [8, 128], strides = [1, 1]} : vector<8x512xf32> to vector<8x128xf32>
    %160 = arith.negf %159 : vector<8x128xf32>
    %161 = math.exp %160 : vector<8x128xf32>
    %cst_85 = arith.constant 1.000000e+00 : f32
    %162 = vector.broadcast %cst_85 : f32 to vector<8x128xf32>
    %163 = arith.addf %162, %161 : vector<8x128xf32>
    %164 = arith.divf %162, %163 : vector<8x128xf32>
    %165 = vector.extract_strided_slice %152 {offsets = [0, 256], sizes = [8, 128], strides = [1, 1]} : vector<8x512xf32> to vector<8x128xf32>
    %166 = math.tanh %165 : vector<8x128xf32>
    %167 = vector.extract_strided_slice %152 {offsets = [0, 384], sizes = [8, 128], strides = [1, 1]} : vector<8x512xf32> to vector<8x128xf32>
    %168 = arith.negf %167 : vector<8x128xf32>
    %169 = math.exp %168 : vector<8x128xf32>
    %cst_86 = arith.constant 1.000000e+00 : f32
    %170 = vector.broadcast %cst_86 : f32 to vector<8x128xf32>
    %171 = arith.addf %170, %169 : vector<8x128xf32>
    %172 = arith.divf %170, %171 : vector<8x128xf32>
    %173 = arith.mulf %164, %150 : vector<8x128xf32>
    %174 = arith.mulf %158, %166 : vector<8x128xf32>
    %175 = arith.addf %173, %174 : vector<8x128xf32>
    %176 = math.tanh %175 : vector<8x128xf32>
    %177 = arith.mulf %172, %176 : vector<8x128xf32>
    %178 = vector.broadcast %c1_i32 : i32 to vector<8x1xi32>
    %179 = arith.cmpi slt, %178, %21 : vector<8x1xi32>
    %180 = vector.broadcast %113 : i32 to vector<8x1xi32>
    %181 = arith.cmpi slt, %180, %21 : vector<8x1xi32>
    %c0_87 = arith.constant 0 : index
    %c0_88 = arith.constant 0 : index
    %182 = vector.load %arg9[%c0_87, %c0_88] : memref<8x128xf32, #tpu.memory_space<vmem>>, vector<8x128xf32>
    %183 = vector.shape_cast %179 : vector<8x1xi1> to vector<8x1xi1>
    %184 = vector.broadcast %183 : vector<8x1xi1> to vector<8x128xi1>
    %185 = arith.select %184, %145, %182 : vector<8x128xi1>, vector<8x128xf32>
    %c0_89 = arith.constant 0 : index
    %c0_90 = arith.constant 0 : index
    %186 = vector.load %arg9[%c0_89, %c0_90] : memref<8x128xf32, #tpu.memory_space<vmem>>, vector<8x128xf32>
    tpu.vector_store %arg9[%c0_89, %c0_90], %185 {strides = array<i32>} : memref<8x128xf32, #tpu.memory_space<vmem>>, vector<8x128xf32>,
    %c0_91 = arith.constant 0 : index
    %c0_92 = arith.constant 0 : index
    %187 = vector.load %arg10[%c0_91, %c0_92] : memref<8x128xf32, #tpu.memory_space<vmem>>, vector<8x128xf32>
    %188 = vector.shape_cast %179 : vector<8x1xi1> to vector<8x1xi1>
    %189 = vector.broadcast %188 : vector<8x1xi1> to vector<8x128xi1>
    %190 = arith.select %189, %143, %187 : vector<8x128xi1>, vector<8x128xf32>
    %c0_93 = arith.constant 0 : index
    %c0_94 = arith.constant 0 : index
    %191 = vector.load %arg10[%c0_93, %c0_94] : memref<8x128xf32, #tpu.memory_space<vmem>>, vector<8x128xf32>
    tpu.vector_store %arg10[%c0_93, %c0_94], %190 {strides = array<i32>} : memref<8x128xf32, #tpu.memory_space<vmem>>, vector<8x128xf32>,
    %c0_95 = arith.constant 0 : index
    %c0_96 = arith.constant 0 : index
    %192 = vector.load %arg11[%c0_95, %c0_96] : memref<8x128xf32, #tpu.memory_space<vmem>>, vector<8x128xf32>
    %193 = vector.shape_cast %181 : vector<8x1xi1> to vector<8x1xi1>
    %194 = vector.broadcast %193 : vector<8x1xi1> to vector<8x128xi1>
    %195 = arith.select %194, %177, %192 : vector<8x128xi1>, vector<8x128xf32>
    %c0_97 = arith.constant 0 : index
    %c0_98 = arith.constant 0 : index
    %196 = vector.load %arg11[%c0_97, %c0_98] : memref<8x128xf32, #tpu.memory_space<vmem>>, vector<8x128xf32>
    tpu.vector_store %arg11[%c0_97, %c0_98], %195 {strides = array<i32>} : memref<8x128xf32, #tpu.memory_space<vmem>>, vector<8x128xf32>,
    %c0_99 = arith.constant 0 : index
    %c0_100 = arith.constant 0 : index
    %197 = vector.load %arg12[%c0_99, %c0_100] : memref<8x128xf32, #tpu.memory_space<vmem>>, vector<8x128xf32>
    %198 = vector.shape_cast %181 : vector<8x1xi1> to vector<8x1xi1>
    %199 = vector.broadcast %198 : vector<8x1xi1> to vector<8x128xi1>
    %200 = arith.select %199, %175, %197 : vector<8x128xi1>, vector<8x128xf32>
    %c0_101 = arith.constant 0 : index
    %c0_102 = arith.constant 0 : index
    %201 = vector.load %arg12[%c0_101, %c0_102] : memref<8x128xf32, #tpu.memory_space<vmem>>, vector<8x128xf32>
    tpu.vector_store %arg12[%c0_101, %c0_102], %200 {strides = array<i32>} : memref<8x128xf32, #tpu.memory_space<vmem>>, vector<8x128xf32>,
    %c2_i32 = arith.constant 2 : i32
    %c7_i32_103 = arith.constant 7 : i32
    %202 = arith.subi %c7_i32_103, %c2_i32 : i32
    %203 = arith.index_cast %c2_i32 : i32 to index
    %c0_104 = arith.constant 0 : index
    %c0_105 = arith.constant 0 : index
    %204 = vector.load %arg7[%203, %c0_104, %c0_105] : memref<8x8x512xf32, #tpu.memory_space<vmem>>, vector<1x8x512xf32>
    %205 = vector.shape_cast %204 : vector<1x8x512xf32> to vector<8x512xf32>
    %c0_106 = arith.constant 0 : index
    %c0_107 = arith.constant 0 : index
    %206 = vector.load %arg9[%c0_106, %c0_107] : memref<8x128xf32, #tpu.memory_space<vmem>>, vector<8x128xf32>
    %c0_108 = arith.constant 0 : index
    %c0_109 = arith.constant 0 : index
    %207 = vector.load %arg10[%c0_108, %c0_109] : memref<8x128xf32, #tpu.memory_space<vmem>>, vector<8x128xf32>
    %cst_110 = arith.constant dense<0.000000e+00> : vector<8x512xf32>
    %208 = tpu.matmul %206, %22, %cst_110 {dimension_numbers = #tpu.dot_dimension_numbers<[1], [0], [0], [1], [0, 0, 1, 1], [], []>} : vector<8x128xf32>, vector<128x512xf32>, vector<8x512xf32> -> vector<8x512xf32>
    %209 = arith.addf %205, %208 : vector<8x512xf32>
    %210 = vector.extract_strided_slice %209 {offsets = [0, 0], sizes = [8, 128], strides = [1, 1]} : vector<8x512xf32> to vector<8x128xf32>
    %211 = arith.negf %210 : vector<8x128xf32>
    %212 = math.exp %211 : vector<8x128xf32>
    %cst_111 = arith.constant 1.000000e+00 : f32
    %213 = vector.broadcast %cst_111 : f32 to vector<8x128xf32>
    %214 = arith.addf %213, %212 : vector<8x128xf32>
    %215 = arith.divf %213, %214 : vector<8x128xf32>
    %216 = vector.extract_strided_slice %209 {offsets = [0, 128], sizes = [8, 128], strides = [1, 1]} : vector<8x512xf32> to vector<8x128xf32>
    %217 = arith.negf %216 : vector<8x128xf32>
    %218 = math.exp %217 : vector<8x128xf32>
    %cst_112 = arith.constant 1.000000e+00 : f32
    %219 = vector.broadcast %cst_112 : f32 to vector<8x128xf32>
    %220 = arith.addf %219, %218 : vector<8x128xf32>
    %221 = arith.divf %219, %220 : vector<8x128xf32>
    %222 = vector.extract_strided_slice %209 {offsets = [0, 256], sizes = [8, 128], strides = [1, 1]} : vector<8x512xf32> to vector<8x128xf32>
    %223 = math.tanh %222 : vector<8x128xf32>
    %224 = vector.extract_strided_slice %209 {offsets = [0, 384], sizes = [8, 128], strides = [1, 1]} : vector<8x512xf32> to vector<8x128xf32>
    %225 = arith.negf %224 : vector<8x128xf32>
    %226 = math.exp %225 : vector<8x128xf32>
    %cst_113 = arith.constant 1.000000e+00 : f32
    %227 = vector.broadcast %cst_113 : f32 to vector<8x128xf32>
    %228 = arith.addf %227, %226 : vector<8x128xf32>
    %229 = arith.divf %227, %228 : vector<8x128xf32>
    %230 = arith.mulf %221, %207 : vector<8x128xf32>
    %231 = arith.mulf %215, %223 : vector<8x128xf32>
    %232 = arith.addf %230, %231 : vector<8x128xf32>
    %233 = math.tanh %232 : vector<8x128xf32>
    %234 = arith.mulf %229, %233 : vector<8x128xf32>
    %235 = arith.index_cast %202 : i32 to index
    %c0_114 = arith.constant 0 : index
    %c0_115 = arith.constant 0 : index
    %236 = vector.load %arg8[%235, %c0_114, %c0_115] : memref<8x8x512xf32, #tpu.memory_space<vmem>>, vector<1x8x512xf32>
    %237 = vector.shape_cast %236 : vector<1x8x512xf32> to vector<8x512xf32>
    %c0_116 = arith.constant 0 : index
    %c0_117 = arith.constant 0 : index
    %238 = vector.load %arg11[%c0_116, %c0_117] : memref<8x128xf32, #tpu.memory_space<vmem>>, vector<8x128xf32>
    %c0_118 = arith.constant 0 : index
    %c0_119 = arith.constant 0 : index
    %239 = vector.load %arg12[%c0_118, %c0_119] : memref<8x128xf32, #tpu.memory_space<vmem>>, vector<8x128xf32>
    %cst_120 = arith.constant dense<0.000000e+00> : vector<8x512xf32>
    %240 = tpu.matmul %238, %23, %cst_120 {dimension_numbers = #tpu.dot_dimension_numbers<[1], [0], [0], [1], [0, 0, 1, 1], [], []>} : vector<8x128xf32>, vector<128x512xf32>, vector<8x512xf32> -> vector<8x512xf32>
    %241 = arith.addf %237, %240 : vector<8x512xf32>
    %242 = vector.extract_strided_slice %241 {offsets = [0, 0], sizes = [8, 128], strides = [1, 1]} : vector<8x512xf32> to vector<8x128xf32>
    %243 = arith.negf %242 : vector<8x128xf32>
    %244 = math.exp %243 : vector<8x128xf32>
    %cst_121 = arith.constant 1.000000e+00 : f32
    %245 = vector.broadcast %cst_121 : f32 to vector<8x128xf32>
    %246 = arith.addf %245, %244 : vector<8x128xf32>
    %247 = arith.divf %245, %246 : vector<8x128xf32>
    %248 = vector.extract_strided_slice %241 {offsets = [0, 128], sizes = [8, 128], strides = [1, 1]} : vector<8x512xf32> to vector<8x128xf32>
    %249 = arith.negf %248 : vector<8x128xf32>
    %250 = math.exp %249 : vector<8x128xf32>
    %cst_122 = arith.constant 1.000000e+00 : f32
    %251 = vector.broadcast %cst_122 : f32 to vector<8x128xf32>
    %252 = arith.addf %251, %250 : vector<8x128xf32>
    %253 = arith.divf %251, %252 : vector<8x128xf32>
    %254 = vector.extract_strided_slice %241 {offsets = [0, 256], sizes = [8, 128], strides = [1, 1]} : vector<8x512xf32> to vector<8x128xf32>
    %255 = math.tanh %254 : vector<8x128xf32>
    %256 = vector.extract_strided_slice %241 {offsets = [0, 384], sizes = [8, 128], strides = [1, 1]} : vector<8x512xf32> to vector<8x128xf32>
    %257 = arith.negf %256 : vector<8x128xf32>
    %258 = math.exp %257 : vector<8x128xf32>
    %cst_123 = arith.constant 1.000000e+00 : f32
    %259 = vector.broadcast %cst_123 : f32 to vector<8x128xf32>
    %260 = arith.addf %259, %258 : vector<8x128xf32>
    %261 = arith.divf %259, %260 : vector<8x128xf32>
    %262 = arith.mulf %253, %239 : vector<8x128xf32>
    %263 = arith.mulf %247, %255 : vector<8x128xf32>
    %264 = arith.addf %262, %263 : vector<8x128xf32>
    %265 = math.tanh %264 : vector<8x128xf32>
    %266 = arith.mulf %261, %265 : vector<8x128xf32>
    %267 = vector.broadcast %c2_i32 : i32 to vector<8x1xi32>
    %268 = arith.cmpi slt, %267, %21 : vector<8x1xi32>
    %269 = vector.broadcast %202 : i32 to vector<8x1xi32>
    %270 = arith.cmpi slt, %269, %21 : vector<8x1xi32>
    %c0_124 = arith.constant 0 : index
    %c0_125 = arith.constant 0 : index
    %271 = vector.load %arg9[%c0_124, %c0_125] : memref<8x128xf32, #tpu.memory_space<vmem>>, vector<8x128xf32>
    %272 = vector.shape_cast %268 : vector<8x1xi1> to vector<8x1xi1>
    %273 = vector.broadcast %272 : vector<8x1xi1> to vector<8x128xi1>
    %274 = arith.select %273, %234, %271 : vector<8x128xi1>, vector<8x128xf32>
    %c0_126 = arith.constant 0 : index
    %c0_127 = arith.constant 0 : index
    %275 = vector.load %arg9[%c0_126, %c0_127] : memref<8x128xf32, #tpu.memory_space<vmem>>, vector<8x128xf32>
    tpu.vector_store %arg9[%c0_126, %c0_127], %274 {strides = array<i32>} : memref<8x128xf32, #tpu.memory_space<vmem>>, vector<8x128xf32>,
    %c0_128 = arith.constant 0 : index
    %c0_129 = arith.constant 0 : index
    %276 = vector.load %arg10[%c0_128, %c0_129] : memref<8x128xf32, #tpu.memory_space<vmem>>, vector<8x128xf32>
    %277 = vector.shape_cast %268 : vector<8x1xi1> to vector<8x1xi1>
    %278 = vector.broadcast %277 : vector<8x1xi1> to vector<8x128xi1>
    %279 = arith.select %278, %232, %276 : vector<8x128xi1>, vector<8x128xf32>
    %c0_130 = arith.constant 0 : index
    %c0_131 = arith.constant 0 : index
    %280 = vector.load %arg10[%c0_130, %c0_131] : memref<8x128xf32, #tpu.memory_space<vmem>>, vector<8x128xf32>
    tpu.vector_store %arg10[%c0_130, %c0_131], %279 {strides = array<i32>} : memref<8x128xf32, #tpu.memory_space<vmem>>, vector<8x128xf32>,
    %c0_132 = arith.constant 0 : index
    %c0_133 = arith.constant 0 : index
    %281 = vector.load %arg11[%c0_132, %c0_133] : memref<8x128xf32, #tpu.memory_space<vmem>>, vector<8x128xf32>
    %282 = vector.shape_cast %270 : vector<8x1xi1> to vector<8x1xi1>
    %283 = vector.broadcast %282 : vector<8x1xi1> to vector<8x128xi1>
    %284 = arith.select %283, %266, %281 : vector<8x128xi1>, vector<8x128xf32>
    %c0_134 = arith.constant 0 : index
    %c0_135 = arith.constant 0 : index
    %285 = vector.load %arg11[%c0_134, %c0_135] : memref<8x128xf32, #tpu.memory_space<vmem>>, vector<8x128xf32>
    tpu.vector_store %arg11[%c0_134, %c0_135], %284 {strides = array<i32>} : memref<8x128xf32, #tpu.memory_space<vmem>>, vector<8x128xf32>,
    %c0_136 = arith.constant 0 : index
    %c0_137 = arith.constant 0 : index
    %286 = vector.load %arg12[%c0_136, %c0_137] : memref<8x128xf32, #tpu.memory_space<vmem>>, vector<8x128xf32>
    %287 = vector.shape_cast %270 : vector<8x1xi1> to vector<8x1xi1>
    %288 = vector.broadcast %287 : vector<8x1xi1> to vector<8x128xi1>
    %289 = arith.select %288, %264, %286 : vector<8x128xi1>, vector<8x128xf32>
    %c0_138 = arith.constant 0 : index
    %c0_139 = arith.constant 0 : index
    %290 = vector.load %arg12[%c0_138, %c0_139] : memref<8x128xf32, #tpu.memory_space<vmem>>, vector<8x128xf32>
    tpu.vector_store %arg12[%c0_138, %c0_139], %289 {strides = array<i32>} : memref<8x128xf32, #tpu.memory_space<vmem>>, vector<8x128xf32>,
    %c3_i32 = arith.constant 3 : i32
    %c7_i32_140 = arith.constant 7 : i32
    %291 = arith.subi %c7_i32_140, %c3_i32 : i32
    %292 = arith.index_cast %c3_i32 : i32 to index
    %c0_141 = arith.constant 0 : index
    %c0_142 = arith.constant 0 : index
    %293 = vector.load %arg7[%292, %c0_141, %c0_142] : memref<8x8x512xf32, #tpu.memory_space<vmem>>, vector<1x8x512xf32>
    %294 = vector.shape_cast %293 : vector<1x8x512xf32> to vector<8x512xf32>
    %c0_143 = arith.constant 0 : index
    %c0_144 = arith.constant 0 : index
    %295 = vector.load %arg9[%c0_143, %c0_144] : memref<8x128xf32, #tpu.memory_space<vmem>>, vector<8x128xf32>
    %c0_145 = arith.constant 0 : index
    %c0_146 = arith.constant 0 : index
    %296 = vector.load %arg10[%c0_145, %c0_146] : memref<8x128xf32, #tpu.memory_space<vmem>>, vector<8x128xf32>
    %cst_147 = arith.constant dense<0.000000e+00> : vector<8x512xf32>
    %297 = tpu.matmul %295, %22, %cst_147 {dimension_numbers = #tpu.dot_dimension_numbers<[1], [0], [0], [1], [0, 0, 1, 1], [], []>} : vector<8x128xf32>, vector<128x512xf32>, vector<8x512xf32> -> vector<8x512xf32>
    %298 = arith.addf %294, %297 : vector<8x512xf32>
    %299 = vector.extract_strided_slice %298 {offsets = [0, 0], sizes = [8, 128], strides = [1, 1]} : vector<8x512xf32> to vector<8x128xf32>
    %300 = arith.negf %299 : vector<8x128xf32>
    %301 = math.exp %300 : vector<8x128xf32>
    %cst_148 = arith.constant 1.000000e+00 : f32
    %302 = vector.broadcast %cst_148 : f32 to vector<8x128xf32>
    %303 = arith.addf %302, %301 : vector<8x128xf32>
    %304 = arith.divf %302, %303 : vector<8x128xf32>
    %305 = vector.extract_strided_slice %298 {offsets = [0, 128], sizes = [8, 128], strides = [1, 1]} : vector<8x512xf32> to vector<8x128xf32>
    %306 = arith.negf %305 : vector<8x128xf32>
    %307 = math.exp %306 : vector<8x128xf32>
    %cst_149 = arith.constant 1.000000e+00 : f32
    %308 = vector.broadcast %cst_149 : f32 to vector<8x128xf32>
    %309 = arith.addf %308, %307 : vector<8x128xf32>
    %310 = arith.divf %308, %309 : vector<8x128xf32>
    %311 = vector.extract_strided_slice %298 {offsets = [0, 256], sizes = [8, 128], strides = [1, 1]} : vector<8x512xf32> to vector<8x128xf32>
    %312 = math.tanh %311 : vector<8x128xf32>
    %313 = vector.extract_strided_slice %298 {offsets = [0, 384], sizes = [8, 128], strides = [1, 1]} : vector<8x512xf32> to vector<8x128xf32>
    %314 = arith.negf %313 : vector<8x128xf32>
    %315 = math.exp %314 : vector<8x128xf32>
    %cst_150 = arith.constant 1.000000e+00 : f32
    %316 = vector.broadcast %cst_150 : f32 to vector<8x128xf32>
    %317 = arith.addf %316, %315 : vector<8x128xf32>
    %318 = arith.divf %316, %317 : vector<8x128xf32>
    %319 = arith.mulf %310, %296 : vector<8x128xf32>
    %320 = arith.mulf %304, %312 : vector<8x128xf32>
    %321 = arith.addf %319, %320 : vector<8x128xf32>
    %322 = math.tanh %321 : vector<8x128xf32>
    %323 = arith.mulf %318, %322 : vector<8x128xf32>
    %324 = arith.index_cast %291 : i32 to index
    %c0_151 = arith.constant 0 : index
    %c0_152 = arith.constant 0 : index
    %325 = vector.load %arg8[%324, %c0_151, %c0_152] : memref<8x8x512xf32, #tpu.memory_space<vmem>>, vector<1x8x512xf32>
    %326 = vector.shape_cast %325 : vector<1x8x512xf32> to vector<8x512xf32>
    %c0_153 = arith.constant 0 : index
    %c0_154 = arith.constant 0 : index
    %327 = vector.load %arg11[%c0_153, %c0_154] : memref<8x128xf32, #tpu.memory_space<vmem>>, vector<8x128xf32>
    %c0_155 = arith.constant 0 : index
    %c0_156 = arith.constant 0 : index
    %328 = vector.load %arg12[%c0_155, %c0_156] : memref<8x128xf32, #tpu.memory_space<vmem>>, vector<8x128xf32>
    %cst_157 = arith.constant dense<0.000000e+00> : vector<8x512xf32>
    %329 = tpu.matmul %327, %23, %cst_157 {dimension_numbers = #tpu.dot_dimension_numbers<[1], [0], [0], [1], [0, 0, 1, 1], [], []>} : vector<8x128xf32>, vector<128x512xf32>, vector<8x512xf32> -> vector<8x512xf32>
    %330 = arith.addf %326, %329 : vector<8x512xf32>
    %331 = vector.extract_strided_slice %330 {offsets = [0, 0], sizes = [8, 128], strides = [1, 1]} : vector<8x512xf32> to vector<8x128xf32>
    %332 = arith.negf %331 : vector<8x128xf32>
    %333 = math.exp %332 : vector<8x128xf32>
    %cst_158 = arith.constant 1.000000e+00 : f32
    %334 = vector.broadcast %cst_158 : f32 to vector<8x128xf32>
    %335 = arith.addf %334, %333 : vector<8x128xf32>
    %336 = arith.divf %334, %335 : vector<8x128xf32>
    %337 = vector.extract_strided_slice %330 {offsets = [0, 128], sizes = [8, 128], strides = [1, 1]} : vector<8x512xf32> to vector<8x128xf32>
    %338 = arith.negf %337 : vector<8x128xf32>
    %339 = math.exp %338 : vector<8x128xf32>
    %cst_159 = arith.constant 1.000000e+00 : f32
    %340 = vector.broadcast %cst_159 : f32 to vector<8x128xf32>
    %341 = arith.addf %340, %339 : vector<8x128xf32>
    %342 = arith.divf %340, %341 : vector<8x128xf32>
    %343 = vector.extract_strided_slice %330 {offsets = [0, 256], sizes = [8, 128], strides = [1, 1]} : vector<8x512xf32> to vector<8x128xf32>
    %344 = math.tanh %343 : vector<8x128xf32>
    %345 = vector.extract_strided_slice %330 {offsets = [0, 384], sizes = [8, 128], strides = [1, 1]} : vector<8x512xf32> to vector<8x128xf32>
    %346 = arith.negf %345 : vector<8x128xf32>
    %347 = math.exp %346 : vector<8x128xf32>
    %cst_160 = arith.constant 1.000000e+00 : f32
    %348 = vector.broadcast %cst_160 : f32 to vector<8x128xf32>
    %349 = arith.addf %348, %347 : vector<8x128xf32>
    %350 = arith.divf %348, %349 : vector<8x128xf32>
    %351 = arith.mulf %342, %328 : vector<8x128xf32>
    %352 = arith.mulf %336, %344 : vector<8x128xf32>
    %353 = arith.addf %351, %352 : vector<8x128xf32>
    %354 = math.tanh %353 : vector<8x128xf32>
    %355 = arith.mulf %350, %354 : vector<8x128xf32>
    %356 = vector.broadcast %c3_i32 : i32 to vector<8x1xi32>
    %357 = arith.cmpi slt, %356, %21 : vector<8x1xi32>
    %358 = vector.broadcast %291 : i32 to vector<8x1xi32>
    %359 = arith.cmpi slt, %358, %21 : vector<8x1xi32>
    %c0_161 = arith.constant 0 : index
    %c0_162 = arith.constant 0 : index
    %360 = vector.load %arg9[%c0_161, %c0_162] : memref<8x128xf32, #tpu.memory_space<vmem>>, vector<8x128xf32>
    %361 = vector.shape_cast %357 : vector<8x1xi1> to vector<8x1xi1>
    %362 = vector.broadcast %361 : vector<8x1xi1> to vector<8x128xi1>
    %363 = arith.select %362, %323, %360 : vector<8x128xi1>, vector<8x128xf32>
    %c0_163 = arith.constant 0 : index
    %c0_164 = arith.constant 0 : index
    %364 = vector.load %arg9[%c0_163, %c0_164] : memref<8x128xf32, #tpu.memory_space<vmem>>, vector<8x128xf32>
    tpu.vector_store %arg9[%c0_163, %c0_164], %363 {strides = array<i32>} : memref<8x128xf32, #tpu.memory_space<vmem>>, vector<8x128xf32>,
    %c0_165 = arith.constant 0 : index
    %c0_166 = arith.constant 0 : index
    %365 = vector.load %arg10[%c0_165, %c0_166] : memref<8x128xf32, #tpu.memory_space<vmem>>, vector<8x128xf32>
    %366 = vector.shape_cast %357 : vector<8x1xi1> to vector<8x1xi1>
    %367 = vector.broadcast %366 : vector<8x1xi1> to vector<8x128xi1>
    %368 = arith.select %367, %321, %365 : vector<8x128xi1>, vector<8x128xf32>
    %c0_167 = arith.constant 0 : index
    %c0_168 = arith.constant 0 : index
    %369 = vector.load %arg10[%c0_167, %c0_168] : memref<8x128xf32, #tpu.memory_space<vmem>>, vector<8x128xf32>
    tpu.vector_store %arg10[%c0_167, %c0_168], %368 {strides = array<i32>} : memref<8x128xf32, #tpu.memory_space<vmem>>, vector<8x128xf32>,
    %c0_169 = arith.constant 0 : index
    %c0_170 = arith.constant 0 : index
    %370 = vector.load %arg11[%c0_169, %c0_170] : memref<8x128xf32, #tpu.memory_space<vmem>>, vector<8x128xf32>
    %371 = vector.shape_cast %359 : vector<8x1xi1> to vector<8x1xi1>
    %372 = vector.broadcast %371 : vector<8x1xi1> to vector<8x128xi1>
    %373 = arith.select %372, %355, %370 : vector<8x128xi1>, vector<8x128xf32>
    %c0_171 = arith.constant 0 : index
    %c0_172 = arith.constant 0 : index
    %374 = vector.load %arg11[%c0_171, %c0_172] : memref<8x128xf32, #tpu.memory_space<vmem>>, vector<8x128xf32>
    tpu.vector_store %arg11[%c0_171, %c0_172], %373 {strides = array<i32>} : memref<8x128xf32, #tpu.memory_space<vmem>>, vector<8x128xf32>,
    %c0_173 = arith.constant 0 : index
    %c0_174 = arith.constant 0 : index
    %375 = vector.load %arg12[%c0_173, %c0_174] : memref<8x128xf32, #tpu.memory_space<vmem>>, vector<8x128xf32>
    %376 = vector.shape_cast %359 : vector<8x1xi1> to vector<8x1xi1>
    %377 = vector.broadcast %376 : vector<8x1xi1> to vector<8x128xi1>
    %378 = arith.select %377, %353, %375 : vector<8x128xi1>, vector<8x128xf32>
    %c0_175 = arith.constant 0 : index
    %c0_176 = arith.constant 0 : index
    %379 = vector.load %arg12[%c0_175, %c0_176] : memref<8x128xf32, #tpu.memory_space<vmem>>, vector<8x128xf32>
    tpu.vector_store %arg12[%c0_175, %c0_176], %378 {strides = array<i32>} : memref<8x128xf32, #tpu.memory_space<vmem>>, vector<8x128xf32>,
    %c4_i32 = arith.constant 4 : i32
    %c7_i32_177 = arith.constant 7 : i32
    %380 = arith.subi %c7_i32_177, %c4_i32 : i32
    %381 = arith.index_cast %c4_i32 : i32 to index
    %c0_178 = arith.constant 0 : index
    %c0_179 = arith.constant 0 : index
    %382 = vector.load %arg7[%381, %c0_178, %c0_179] : memref<8x8x512xf32, #tpu.memory_space<vmem>>, vector<1x8x512xf32>
    %383 = vector.shape_cast %382 : vector<1x8x512xf32> to vector<8x512xf32>
    %c0_180 = arith.constant 0 : index
    %c0_181 = arith.constant 0 : index
    %384 = vector.load %arg9[%c0_180, %c0_181] : memref<8x128xf32, #tpu.memory_space<vmem>>, vector<8x128xf32>
    %c0_182 = arith.constant 0 : index
    %c0_183 = arith.constant 0 : index
    %385 = vector.load %arg10[%c0_182, %c0_183] : memref<8x128xf32, #tpu.memory_space<vmem>>, vector<8x128xf32>
    %cst_184 = arith.constant dense<0.000000e+00> : vector<8x512xf32>
    %386 = tpu.matmul %384, %22, %cst_184 {dimension_numbers = #tpu.dot_dimension_numbers<[1], [0], [0], [1], [0, 0, 1, 1], [], []>} : vector<8x128xf32>, vector<128x512xf32>, vector<8x512xf32> -> vector<8x512xf32>
    %387 = arith.addf %383, %386 : vector<8x512xf32>
    %388 = vector.extract_strided_slice %387 {offsets = [0, 0], sizes = [8, 128], strides = [1, 1]} : vector<8x512xf32> to vector<8x128xf32>
    %389 = arith.negf %388 : vector<8x128xf32>
    %390 = math.exp %389 : vector<8x128xf32>
    %cst_185 = arith.constant 1.000000e+00 : f32
    %391 = vector.broadcast %cst_185 : f32 to vector<8x128xf32>
    %392 = arith.addf %391, %390 : vector<8x128xf32>
    %393 = arith.divf %391, %392 : vector<8x128xf32>
    %394 = vector.extract_strided_slice %387 {offsets = [0, 128], sizes = [8, 128], strides = [1, 1]} : vector<8x512xf32> to vector<8x128xf32>
    %395 = arith.negf %394 : vector<8x128xf32>
    %396 = math.exp %395 : vector<8x128xf32>
    %cst_186 = arith.constant 1.000000e+00 : f32
    %397 = vector.broadcast %cst_186 : f32 to vector<8x128xf32>
    %398 = arith.addf %397, %396 : vector<8x128xf32>
    %399 = arith.divf %397, %398 : vector<8x128xf32>
    %400 = vector.extract_strided_slice %387 {offsets = [0, 256], sizes = [8, 128], strides = [1, 1]} : vector<8x512xf32> to vector<8x128xf32>
    %401 = math.tanh %400 : vector<8x128xf32>
    %402 = vector.extract_strided_slice %387 {offsets = [0, 384], sizes = [8, 128], strides = [1, 1]} : vector<8x512xf32> to vector<8x128xf32>
    %403 = arith.negf %402 : vector<8x128xf32>
    %404 = math.exp %403 : vector<8x128xf32>
    %cst_187 = arith.constant 1.000000e+00 : f32
    %405 = vector.broadcast %cst_187 : f32 to vector<8x128xf32>
    %406 = arith.addf %405, %404 : vector<8x128xf32>
    %407 = arith.divf %405, %406 : vector<8x128xf32>
    %408 = arith.mulf %399, %385 : vector<8x128xf32>
    %409 = arith.mulf %393, %401 : vector<8x128xf32>
    %410 = arith.addf %408, %409 : vector<8x128xf32>
    %411 = math.tanh %410 : vector<8x128xf32>
    %412 = arith.mulf %407, %411 : vector<8x128xf32>
    %413 = arith.index_cast %380 : i32 to index
    %c0_188 = arith.constant 0 : index
    %c0_189 = arith.constant 0 : index
    %414 = vector.load %arg8[%413, %c0_188, %c0_189] : memref<8x8x512xf32, #tpu.memory_space<vmem>>, vector<1x8x512xf32>
    %415 = vector.shape_cast %414 : vector<1x8x512xf32> to vector<8x512xf32>
    %c0_190 = arith.constant 0 : index
    %c0_191 = arith.constant 0 : index
    %416 = vector.load %arg11[%c0_190, %c0_191] : memref<8x128xf32, #tpu.memory_space<vmem>>, vector<8x128xf32>
    %c0_192 = arith.constant 0 : index
    %c0_193 = arith.constant 0 : index
    %417 = vector.load %arg12[%c0_192, %c0_193] : memref<8x128xf32, #tpu.memory_space<vmem>>, vector<8x128xf32>
    %cst_194 = arith.constant dense<0.000000e+00> : vector<8x512xf32>
    %418 = tpu.matmul %416, %23, %cst_194 {dimension_numbers = #tpu.dot_dimension_numbers<[1], [0], [0], [1], [0, 0, 1, 1], [], []>} : vector<8x128xf32>, vector<128x512xf32>, vector<8x512xf32> -> vector<8x512xf32>
    %419 = arith.addf %415, %418 : vector<8x512xf32>
    %420 = vector.extract_strided_slice %419 {offsets = [0, 0], sizes = [8, 128], strides = [1, 1]} : vector<8x512xf32> to vector<8x128xf32>
    %421 = arith.negf %420 : vector<8x128xf32>
    %422 = math.exp %421 : vector<8x128xf32>
    %cst_195 = arith.constant 1.000000e+00 : f32
    %423 = vector.broadcast %cst_195 : f32 to vector<8x128xf32>
    %424 = arith.addf %423, %422 : vector<8x128xf32>
    %425 = arith.divf %423, %424 : vector<8x128xf32>
    %426 = vector.extract_strided_slice %419 {offsets = [0, 128], sizes = [8, 128], strides = [1, 1]} : vector<8x512xf32> to vector<8x128xf32>
    %427 = arith.negf %426 : vector<8x128xf32>
    %428 = math.exp %427 : vector<8x128xf32>
    %cst_196 = arith.constant 1.000000e+00 : f32
    %429 = vector.broadcast %cst_196 : f32 to vector<8x128xf32>
    %430 = arith.addf %429, %428 : vector<8x128xf32>
    %431 = arith.divf %429, %430 : vector<8x128xf32>
    %432 = vector.extract_strided_slice %419 {offsets = [0, 256], sizes = [8, 128], strides = [1, 1]} : vector<8x512xf32> to vector<8x128xf32>
    %433 = math.tanh %432 : vector<8x128xf32>
    %434 = vector.extract_strided_slice %419 {offsets = [0, 384], sizes = [8, 128], strides = [1, 1]} : vector<8x512xf32> to vector<8x128xf32>
    %435 = arith.negf %434 : vector<8x128xf32>
    %436 = math.exp %435 : vector<8x128xf32>
    %cst_197 = arith.constant 1.000000e+00 : f32
    %437 = vector.broadcast %cst_197 : f32 to vector<8x128xf32>
    %438 = arith.addf %437, %436 : vector<8x128xf32>
    %439 = arith.divf %437, %438 : vector<8x128xf32>
    %440 = arith.mulf %431, %417 : vector<8x128xf32>
    %441 = arith.mulf %425, %433 : vector<8x128xf32>
    %442 = arith.addf %440, %441 : vector<8x128xf32>
    %443 = math.tanh %442 : vector<8x128xf32>
    %444 = arith.mulf %439, %443 : vector<8x128xf32>
    %445 = vector.broadcast %c4_i32 : i32 to vector<8x1xi32>
    %446 = arith.cmpi slt, %445, %21 : vector<8x1xi32>
    %447 = vector.broadcast %380 : i32 to vector<8x1xi32>
    %448 = arith.cmpi slt, %447, %21 : vector<8x1xi32>
    %c0_198 = arith.constant 0 : index
    %c0_199 = arith.constant 0 : index
    %449 = vector.load %arg9[%c0_198, %c0_199] : memref<8x128xf32, #tpu.memory_space<vmem>>, vector<8x128xf32>
    %450 = vector.shape_cast %446 : vector<8x1xi1> to vector<8x1xi1>
    %451 = vector.broadcast %450 : vector<8x1xi1> to vector<8x128xi1>
    %452 = arith.select %451, %412, %449 : vector<8x128xi1>, vector<8x128xf32>
    %c0_200 = arith.constant 0 : index
    %c0_201 = arith.constant 0 : index
    %453 = vector.load %arg9[%c0_200, %c0_201] : memref<8x128xf32, #tpu.memory_space<vmem>>, vector<8x128xf32>
    tpu.vector_store %arg9[%c0_200, %c0_201], %452 {strides = array<i32>} : memref<8x128xf32, #tpu.memory_space<vmem>>, vector<8x128xf32>,
    %c0_202 = arith.constant 0 : index
    %c0_203 = arith.constant 0 : index
    %454 = vector.load %arg10[%c0_202, %c0_203] : memref<8x128xf32, #tpu.memory_space<vmem>>, vector<8x128xf32>
    %455 = vector.shape_cast %446 : vector<8x1xi1> to vector<8x1xi1>
    %456 = vector.broadcast %455 : vector<8x1xi1> to vector<8x128xi1>
    %457 = arith.select %456, %410, %454 : vector<8x128xi1>, vector<8x128xf32>
    %c0_204 = arith.constant 0 : index
    %c0_205 = arith.constant 0 : index
    %458 = vector.load %arg10[%c0_204, %c0_205] : memref<8x128xf32, #tpu.memory_space<vmem>>, vector<8x128xf32>
    tpu.vector_store %arg10[%c0_204, %c0_205], %457 {strides = array<i32>} : memref<8x128xf32, #tpu.memory_space<vmem>>, vector<8x128xf32>,
    %c0_206 = arith.constant 0 : index
    %c0_207 = arith.constant 0 : index
    %459 = vector.load %arg11[%c0_206, %c0_207] : memref<8x128xf32, #tpu.memory_space<vmem>>, vector<8x128xf32>
    %460 = vector.shape_cast %448 : vector<8x1xi1> to vector<8x1xi1>
    %461 = vector.broadcast %460 : vector<8x1xi1> to vector<8x128xi1>
    %462 = arith.select %461, %444, %459 : vector<8x128xi1>, vector<8x128xf32>
    %c0_208 = arith.constant 0 : index
    %c0_209 = arith.constant 0 : index
    %463 = vector.load %arg11[%c0_208, %c0_209] : memref<8x128xf32, #tpu.memory_space<vmem>>, vector<8x128xf32>
    tpu.vector_store %arg11[%c0_208, %c0_209], %462 {strides = array<i32>} : memref<8x128xf32, #tpu.memory_space<vmem>>, vector<8x128xf32>,
    %c0_210 = arith.constant 0 : index
    %c0_211 = arith.constant 0 : index
    %464 = vector.load %arg12[%c0_210, %c0_211] : memref<8x128xf32, #tpu.memory_space<vmem>>, vector<8x128xf32>
    %465 = vector.shape_cast %448 : vector<8x1xi1> to vector<8x1xi1>
    %466 = vector.broadcast %465 : vector<8x1xi1> to vector<8x128xi1>
    %467 = arith.select %466, %442, %464 : vector<8x128xi1>, vector<8x128xf32>
    %c0_212 = arith.constant 0 : index
    %c0_213 = arith.constant 0 : index
    %468 = vector.load %arg12[%c0_212, %c0_213] : memref<8x128xf32, #tpu.memory_space<vmem>>, vector<8x128xf32>
    tpu.vector_store %arg12[%c0_212, %c0_213], %467 {strides = array<i32>} : memref<8x128xf32, #tpu.memory_space<vmem>>, vector<8x128xf32>,
    %c5_i32 = arith.constant 5 : i32
    %c7_i32_214 = arith.constant 7 : i32
    %469 = arith.subi %c7_i32_214, %c5_i32 : i32
    %470 = arith.index_cast %c5_i32 : i32 to index
    %c0_215 = arith.constant 0 : index
    %c0_216 = arith.constant 0 : index
    %471 = vector.load %arg7[%470, %c0_215, %c0_216] : memref<8x8x512xf32, #tpu.memory_space<vmem>>, vector<1x8x512xf32>
    %472 = vector.shape_cast %471 : vector<1x8x512xf32> to vector<8x512xf32>
    %c0_217 = arith.constant 0 : index
    %c0_218 = arith.constant 0 : index
    %473 = vector.load %arg9[%c0_217, %c0_218] : memref<8x128xf32, #tpu.memory_space<vmem>>, vector<8x128xf32>
    %c0_219 = arith.constant 0 : index
    %c0_220 = arith.constant 0 : index
    %474 = vector.load %arg10[%c0_219, %c0_220] : memref<8x128xf32, #tpu.memory_space<vmem>>, vector<8x128xf32>
    %cst_221 = arith.constant dense<0.000000e+00> : vector<8x512xf32>
    %475 = tpu.matmul %473, %22, %cst_221 {dimension_numbers = #tpu.dot_dimension_numbers<[1], [0], [0], [1], [0, 0, 1, 1], [], []>} : vector<8x128xf32>, vector<128x512xf32>, vector<8x512xf32> -> vector<8x512xf32>
    %476 = arith.addf %472, %475 : vector<8x512xf32>
    %477 = vector.extract_strided_slice %476 {offsets = [0, 0], sizes = [8, 128], strides = [1, 1]} : vector<8x512xf32> to vector<8x128xf32>
    %478 = arith.negf %477 : vector<8x128xf32>
    %479 = math.exp %478 : vector<8x128xf32>
    %cst_222 = arith.constant 1.000000e+00 : f32
    %480 = vector.broadcast %cst_222 : f32 to vector<8x128xf32>
    %481 = arith.addf %480, %479 : vector<8x128xf32>
    %482 = arith.divf %480, %481 : vector<8x128xf32>
    %483 = vector.extract_strided_slice %476 {offsets = [0, 128], sizes = [8, 128], strides = [1, 1]} : vector<8x512xf32> to vector<8x128xf32>
    %484 = arith.negf %483 : vector<8x128xf32>
    %485 = math.exp %484 : vector<8x128xf32>
    %cst_223 = arith.constant 1.000000e+00 : f32
    %486 = vector.broadcast %cst_223 : f32 to vector<8x128xf32>
    %487 = arith.addf %486, %485 : vector<8x128xf32>
    %488 = arith.divf %486, %487 : vector<8x128xf32>
    %489 = vector.extract_strided_slice %476 {offsets = [0, 256], sizes = [8, 128], strides = [1, 1]} : vector<8x512xf32> to vector<8x128xf32>
    %490 = math.tanh %489 : vector<8x128xf32>
    %491 = vector.extract_strided_slice %476 {offsets = [0, 384], sizes = [8, 128], strides = [1, 1]} : vector<8x512xf32> to vector<8x128xf32>
    %492 = arith.negf %491 : vector<8x128xf32>
    %493 = math.exp %492 : vector<8x128xf32>
    %cst_224 = arith.constant 1.000000e+00 : f32
    %494 = vector.broadcast %cst_224 : f32 to vector<8x128xf32>
    %495 = arith.addf %494, %493 : vector<8x128xf32>
    %496 = arith.divf %494, %495 : vector<8x128xf32>
    %497 = arith.mulf %488, %474 : vector<8x128xf32>
    %498 = arith.mulf %482, %490 : vector<8x128xf32>
    %499 = arith.addf %497, %498 : vector<8x128xf32>
    %500 = math.tanh %499 : vector<8x128xf32>
    %501 = arith.mulf %496, %500 : vector<8x128xf32>
    %502 = arith.index_cast %469 : i32 to index
    %c0_225 = arith.constant 0 : index
    %c0_226 = arith.constant 0 : index
    %503 = vector.load %arg8[%502, %c0_225, %c0_226] : memref<8x8x512xf32, #tpu.memory_space<vmem>>, vector<1x8x512xf32>
    %504 = vector.shape_cast %503 : vector<1x8x512xf32> to vector<8x512xf32>
    %c0_227 = arith.constant 0 : index
    %c0_228 = arith.constant 0 : index
    %505 = vector.load %arg11[%c0_227, %c0_228] : memref<8x128xf32, #tpu.memory_space<vmem>>, vector<8x128xf32>
    %c0_229 = arith.constant 0 : index
    %c0_230 = arith.constant 0 : index
    %506 = vector.load %arg12[%c0_229, %c0_230] : memref<8x128xf32, #tpu.memory_space<vmem>>, vector<8x128xf32>
    %cst_231 = arith.constant dense<0.000000e+00> : vector<8x512xf32>
    %507 = tpu.matmul %505, %23, %cst_231 {dimension_numbers = #tpu.dot_dimension_numbers<[1], [0], [0], [1], [0, 0, 1, 1], [], []>} : vector<8x128xf32>, vector<128x512xf32>, vector<8x512xf32> -> vector<8x512xf32>
    %508 = arith.addf %504, %507 : vector<8x512xf32>
    %509 = vector.extract_strided_slice %508 {offsets = [0, 0], sizes = [8, 128], strides = [1, 1]} : vector<8x512xf32> to vector<8x128xf32>
    %510 = arith.negf %509 : vector<8x128xf32>
    %511 = math.exp %510 : vector<8x128xf32>
    %cst_232 = arith.constant 1.000000e+00 : f32
    %512 = vector.broadcast %cst_232 : f32 to vector<8x128xf32>
    %513 = arith.addf %512, %511 : vector<8x128xf32>
    %514 = arith.divf %512, %513 : vector<8x128xf32>
    %515 = vector.extract_strided_slice %508 {offsets = [0, 128], sizes = [8, 128], strides = [1, 1]} : vector<8x512xf32> to vector<8x128xf32>
    %516 = arith.negf %515 : vector<8x128xf32>
    %517 = math.exp %516 : vector<8x128xf32>
    %cst_233 = arith.constant 1.000000e+00 : f32
    %518 = vector.broadcast %cst_233 : f32 to vector<8x128xf32>
    %519 = arith.addf %518, %517 : vector<8x128xf32>
    %520 = arith.divf %518, %519 : vector<8x128xf32>
    %521 = vector.extract_strided_slice %508 {offsets = [0, 256], sizes = [8, 128], strides = [1, 1]} : vector<8x512xf32> to vector<8x128xf32>
    %522 = math.tanh %521 : vector<8x128xf32>
    %523 = vector.extract_strided_slice %508 {offsets = [0, 384], sizes = [8, 128], strides = [1, 1]} : vector<8x512xf32> to vector<8x128xf32>
    %524 = arith.negf %523 : vector<8x128xf32>
    %525 = math.exp %524 : vector<8x128xf32>
    %cst_234 = arith.constant 1.000000e+00 : f32
    %526 = vector.broadcast %cst_234 : f32 to vector<8x128xf32>
    %527 = arith.addf %526, %525 : vector<8x128xf32>
    %528 = arith.divf %526, %527 : vector<8x128xf32>
    %529 = arith.mulf %520, %506 : vector<8x128xf32>
    %530 = arith.mulf %514, %522 : vector<8x128xf32>
    %531 = arith.addf %529, %530 : vector<8x128xf32>
    %532 = math.tanh %531 : vector<8x128xf32>
    %533 = arith.mulf %528, %532 : vector<8x128xf32>
    %534 = vector.broadcast %c5_i32 : i32 to vector<8x1xi32>
    %535 = arith.cmpi slt, %534, %21 : vector<8x1xi32>
    %536 = vector.broadcast %469 : i32 to vector<8x1xi32>
    %537 = arith.cmpi slt, %536, %21 : vector<8x1xi32>
    %c0_235 = arith.constant 0 : index
    %c0_236 = arith.constant 0 : index
    %538 = vector.load %arg9[%c0_235, %c0_236] : memref<8x128xf32, #tpu.memory_space<vmem>>, vector<8x128xf32>
    %539 = vector.shape_cast %535 : vector<8x1xi1> to vector<8x1xi1>
    %540 = vector.broadcast %539 : vector<8x1xi1> to vector<8x128xi1>
    %541 = arith.select %540, %501, %538 : vector<8x128xi1>, vector<8x128xf32>
    %c0_237 = arith.constant 0 : index
    %c0_238 = arith.constant 0 : index
    %542 = vector.load %arg9[%c0_237, %c0_238] : memref<8x128xf32, #tpu.memory_space<vmem>>, vector<8x128xf32>
    tpu.vector_store %arg9[%c0_237, %c0_238], %541 {strides = array<i32>} : memref<8x128xf32, #tpu.memory_space<vmem>>, vector<8x128xf32>,
    %c0_239 = arith.constant 0 : index
    %c0_240 = arith.constant 0 : index
    %543 = vector.load %arg10[%c0_239, %c0_240] : memref<8x128xf32, #tpu.memory_space<vmem>>, vector<8x128xf32>
    %544 = vector.shape_cast %535 : vector<8x1xi1> to vector<8x1xi1>
    %545 = vector.broadcast %544 : vector<8x1xi1> to vector<8x128xi1>
    %546 = arith.select %545, %499, %543 : vector<8x128xi1>, vector<8x128xf32>
    %c0_241 = arith.constant 0 : index
    %c0_242 = arith.constant 0 : index
    %547 = vector.load %arg10[%c0_241, %c0_242] : memref<8x128xf32, #tpu.memory_space<vmem>>, vector<8x128xf32>
    tpu.vector_store %arg10[%c0_241, %c0_242], %546 {strides = array<i32>} : memref<8x128xf32, #tpu.memory_space<vmem>>, vector<8x128xf32>,
    %c0_243 = arith.constant 0 : index
    %c0_244 = arith.constant 0 : index
    %548 = vector.load %arg11[%c0_243, %c0_244] : memref<8x128xf32, #tpu.memory_space<vmem>>, vector<8x128xf32>
    %549 = vector.shape_cast %537 : vector<8x1xi1> to vector<8x1xi1>
    %550 = vector.broadcast %549 : vector<8x1xi1> to vector<8x128xi1>
    %551 = arith.select %550, %533, %548 : vector<8x128xi1>, vector<8x128xf32>
    %c0_245 = arith.constant 0 : index
    %c0_246 = arith.constant 0 : index
    %552 = vector.load %arg11[%c0_245, %c0_246] : memref<8x128xf32, #tpu.memory_space<vmem>>, vector<8x128xf32>
    tpu.vector_store %arg11[%c0_245, %c0_246], %551 {strides = array<i32>} : memref<8x128xf32, #tpu.memory_space<vmem>>, vector<8x128xf32>,
    %c0_247 = arith.constant 0 : index
    %c0_248 = arith.constant 0 : index
    %553 = vector.load %arg12[%c0_247, %c0_248] : memref<8x128xf32, #tpu.memory_space<vmem>>, vector<8x128xf32>
    %554 = vector.shape_cast %537 : vector<8x1xi1> to vector<8x1xi1>
    %555 = vector.broadcast %554 : vector<8x1xi1> to vector<8x128xi1>
    %556 = arith.select %555, %531, %553 : vector<8x128xi1>, vector<8x128xf32>
    %c0_249 = arith.constant 0 : index
    %c0_250 = arith.constant 0 : index
    %557 = vector.load %arg12[%c0_249, %c0_250] : memref<8x128xf32, #tpu.memory_space<vmem>>, vector<8x128xf32>
    tpu.vector_store %arg12[%c0_249, %c0_250], %556 {strides = array<i32>} : memref<8x128xf32, #tpu.memory_space<vmem>>, vector<8x128xf32>,
    %c6_i32 = arith.constant 6 : i32
    %c7_i32_251 = arith.constant 7 : i32
    %558 = arith.subi %c7_i32_251, %c6_i32 : i32
    %559 = arith.index_cast %c6_i32 : i32 to index
    %c0_252 = arith.constant 0 : index
    %c0_253 = arith.constant 0 : index
    %560 = vector.load %arg7[%559, %c0_252, %c0_253] : memref<8x8x512xf32, #tpu.memory_space<vmem>>, vector<1x8x512xf32>
    %561 = vector.shape_cast %560 : vector<1x8x512xf32> to vector<8x512xf32>
    %c0_254 = arith.constant 0 : index
    %c0_255 = arith.constant 0 : index
    %562 = vector.load %arg9[%c0_254, %c0_255] : memref<8x128xf32, #tpu.memory_space<vmem>>, vector<8x128xf32>
    %c0_256 = arith.constant 0 : index
    %c0_257 = arith.constant 0 : index
    %563 = vector.load %arg10[%c0_256, %c0_257] : memref<8x128xf32, #tpu.memory_space<vmem>>, vector<8x128xf32>
    %cst_258 = arith.constant dense<0.000000e+00> : vector<8x512xf32>
    %564 = tpu.matmul %562, %22, %cst_258 {dimension_numbers = #tpu.dot_dimension_numbers<[1], [0], [0], [1], [0, 0, 1, 1], [], []>} : vector<8x128xf32>, vector<128x512xf32>, vector<8x512xf32> -> vector<8x512xf32>
    %565 = arith.addf %561, %564 : vector<8x512xf32>
    %566 = vector.extract_strided_slice %565 {offsets = [0, 0], sizes = [8, 128], strides = [1, 1]} : vector<8x512xf32> to vector<8x128xf32>
    %567 = arith.negf %566 : vector<8x128xf32>
    %568 = math.exp %567 : vector<8x128xf32>
    %cst_259 = arith.constant 1.000000e+00 : f32
    %569 = vector.broadcast %cst_259 : f32 to vector<8x128xf32>
    %570 = arith.addf %569, %568 : vector<8x128xf32>
    %571 = arith.divf %569, %570 : vector<8x128xf32>
    %572 = vector.extract_strided_slice %565 {offsets = [0, 128], sizes = [8, 128], strides = [1, 1]} : vector<8x512xf32> to vector<8x128xf32>
    %573 = arith.negf %572 : vector<8x128xf32>
    %574 = math.exp %573 : vector<8x128xf32>
    %cst_260 = arith.constant 1.000000e+00 : f32
    %575 = vector.broadcast %cst_260 : f32 to vector<8x128xf32>
    %576 = arith.addf %575, %574 : vector<8x128xf32>
    %577 = arith.divf %575, %576 : vector<8x128xf32>
    %578 = vector.extract_strided_slice %565 {offsets = [0, 256], sizes = [8, 128], strides = [1, 1]} : vector<8x512xf32> to vector<8x128xf32>
    %579 = math.tanh %578 : vector<8x128xf32>
    %580 = vector.extract_strided_slice %565 {offsets = [0, 384], sizes = [8, 128], strides = [1, 1]} : vector<8x512xf32> to vector<8x128xf32>
    %581 = arith.negf %580 : vector<8x128xf32>
    %582 = math.exp %581 : vector<8x128xf32>
    %cst_261 = arith.constant 1.000000e+00 : f32
    %583 = vector.broadcast %cst_261 : f32 to vector<8x128xf32>
    %584 = arith.addf %583, %582 : vector<8x128xf32>
    %585 = arith.divf %583, %584 : vector<8x128xf32>
    %586 = arith.mulf %577, %563 : vector<8x128xf32>
    %587 = arith.mulf %571, %579 : vector<8x128xf32>
    %588 = arith.addf %586, %587 : vector<8x128xf32>
    %589 = math.tanh %588 : vector<8x128xf32>
    %590 = arith.mulf %585, %589 : vector<8x128xf32>
    %591 = arith.index_cast %558 : i32 to index
    %c0_262 = arith.constant 0 : index
    %c0_263 = arith.constant 0 : index
    %592 = vector.load %arg8[%591, %c0_262, %c0_263] : memref<8x8x512xf32, #tpu.memory_space<vmem>>, vector<1x8x512xf32>
    %593 = vector.shape_cast %592 : vector<1x8x512xf32> to vector<8x512xf32>
    %c0_264 = arith.constant 0 : index
    %c0_265 = arith.constant 0 : index
    %594 = vector.load %arg11[%c0_264, %c0_265] : memref<8x128xf32, #tpu.memory_space<vmem>>, vector<8x128xf32>
    %c0_266 = arith.constant 0 : index
    %c0_267 = arith.constant 0 : index
    %595 = vector.load %arg12[%c0_266, %c0_267] : memref<8x128xf32, #tpu.memory_space<vmem>>, vector<8x128xf32>
    %cst_268 = arith.constant dense<0.000000e+00> : vector<8x512xf32>
    %596 = tpu.matmul %594, %23, %cst_268 {dimension_numbers = #tpu.dot_dimension_numbers<[1], [0], [0], [1], [0, 0, 1, 1], [], []>} : vector<8x128xf32>, vector<128x512xf32>, vector<8x512xf32> -> vector<8x512xf32>
    %597 = arith.addf %593, %596 : vector<8x512xf32>
    %598 = vector.extract_strided_slice %597 {offsets = [0, 0], sizes = [8, 128], strides = [1, 1]} : vector<8x512xf32> to vector<8x128xf32>
    %599 = arith.negf %598 : vector<8x128xf32>
    %600 = math.exp %599 : vector<8x128xf32>
    %cst_269 = arith.constant 1.000000e+00 : f32
    %601 = vector.broadcast %cst_269 : f32 to vector<8x128xf32>
    %602 = arith.addf %601, %600 : vector<8x128xf32>
    %603 = arith.divf %601, %602 : vector<8x128xf32>
    %604 = vector.extract_strided_slice %597 {offsets = [0, 128], sizes = [8, 128], strides = [1, 1]} : vector<8x512xf32> to vector<8x128xf32>
    %605 = arith.negf %604 : vector<8x128xf32>
    %606 = math.exp %605 : vector<8x128xf32>
    %cst_270 = arith.constant 1.000000e+00 : f32
    %607 = vector.broadcast %cst_270 : f32 to vector<8x128xf32>
    %608 = arith.addf %607, %606 : vector<8x128xf32>
    %609 = arith.divf %607, %608 : vector<8x128xf32>
    %610 = vector.extract_strided_slice %597 {offsets = [0, 256], sizes = [8, 128], strides = [1, 1]} : vector<8x512xf32> to vector<8x128xf32>
    %611 = math.tanh %610 : vector<8x128xf32>
    %612 = vector.extract_strided_slice %597 {offsets = [0, 384], sizes = [8, 128], strides = [1, 1]} : vector<8x512xf32> to vector<8x128xf32>
    %613 = arith.negf %612 : vector<8x128xf32>
    %614 = math.exp %613 : vector<8x128xf32>
    %cst_271 = arith.constant 1.000000e+00 : f32
    %615 = vector.broadcast %cst_271 : f32 to vector<8x128xf32>
    %616 = arith.addf %615, %614 : vector<8x128xf32>
    %617 = arith.divf %615, %616 : vector<8x128xf32>
    %618 = arith.mulf %609, %595 : vector<8x128xf32>
    %619 = arith.mulf %603, %611 : vector<8x128xf32>
    %620 = arith.addf %618, %619 : vector<8x128xf32>
    %621 = math.tanh %620 : vector<8x128xf32>
    %622 = arith.mulf %617, %621 : vector<8x128xf32>
    %623 = vector.broadcast %c6_i32 : i32 to vector<8x1xi32>
    %624 = arith.cmpi slt, %623, %21 : vector<8x1xi32>
    %625 = vector.broadcast %558 : i32 to vector<8x1xi32>
    %626 = arith.cmpi slt, %625, %21 : vector<8x1xi32>
    %c0_272 = arith.constant 0 : index
    %c0_273 = arith.constant 0 : index
    %627 = vector.load %arg9[%c0_272, %c0_273] : memref<8x128xf32, #tpu.memory_space<vmem>>, vector<8x128xf32>
    %628 = vector.shape_cast %624 : vector<8x1xi1> to vector<8x1xi1>
    %629 = vector.broadcast %628 : vector<8x1xi1> to vector<8x128xi1>
    %630 = arith.select %629, %590, %627 : vector<8x128xi1>, vector<8x128xf32>
    %c0_274 = arith.constant 0 : index
    %c0_275 = arith.constant 0 : index
    %631 = vector.load %arg9[%c0_274, %c0_275] : memref<8x128xf32, #tpu.memory_space<vmem>>, vector<8x128xf32>
    tpu.vector_store %arg9[%c0_274, %c0_275], %630 {strides = array<i32>} : memref<8x128xf32, #tpu.memory_space<vmem>>, vector<8x128xf32>,
    %c0_276 = arith.constant 0 : index
    %c0_277 = arith.constant 0 : index
    %632 = vector.load %arg10[%c0_276, %c0_277] : memref<8x128xf32, #tpu.memory_space<vmem>>, vector<8x128xf32>
    %633 = vector.shape_cast %624 : vector<8x1xi1> to vector<8x1xi1>
    %634 = vector.broadcast %633 : vector<8x1xi1> to vector<8x128xi1>
    %635 = arith.select %634, %588, %632 : vector<8x128xi1>, vector<8x128xf32>
    %c0_278 = arith.constant 0 : index
    %c0_279 = arith.constant 0 : index
    %636 = vector.load %arg10[%c0_278, %c0_279] : memref<8x128xf32, #tpu.memory_space<vmem>>, vector<8x128xf32>
    tpu.vector_store %arg10[%c0_278, %c0_279], %635 {strides = array<i32>} : memref<8x128xf32, #tpu.memory_space<vmem>>, vector<8x128xf32>,
    %c0_280 = arith.constant 0 : index
    %c0_281 = arith.constant 0 : index
    %637 = vector.load %arg11[%c0_280, %c0_281] : memref<8x128xf32, #tpu.memory_space<vmem>>, vector<8x128xf32>
    %638 = vector.shape_cast %626 : vector<8x1xi1> to vector<8x1xi1>
    %639 = vector.broadcast %638 : vector<8x1xi1> to vector<8x128xi1>
    %640 = arith.select %639, %622, %637 : vector<8x128xi1>, vector<8x128xf32>
    %c0_282 = arith.constant 0 : index
    %c0_283 = arith.constant 0 : index
    %641 = vector.load %arg11[%c0_282, %c0_283] : memref<8x128xf32, #tpu.memory_space<vmem>>, vector<8x128xf32>
    tpu.vector_store %arg11[%c0_282, %c0_283], %640 {strides = array<i32>} : memref<8x128xf32, #tpu.memory_space<vmem>>, vector<8x128xf32>,
    %c0_284 = arith.constant 0 : index
    %c0_285 = arith.constant 0 : index
    %642 = vector.load %arg12[%c0_284, %c0_285] : memref<8x128xf32, #tpu.memory_space<vmem>>, vector<8x128xf32>
    %643 = vector.shape_cast %626 : vector<8x1xi1> to vector<8x1xi1>
    %644 = vector.broadcast %643 : vector<8x1xi1> to vector<8x128xi1>
    %645 = arith.select %644, %620, %642 : vector<8x128xi1>, vector<8x128xf32>
    %c0_286 = arith.constant 0 : index
    %c0_287 = arith.constant 0 : index
    %646 = vector.load %arg12[%c0_286, %c0_287] : memref<8x128xf32, #tpu.memory_space<vmem>>, vector<8x128xf32>
    tpu.vector_store %arg12[%c0_286, %c0_287], %645 {strides = array<i32>} : memref<8x128xf32, #tpu.memory_space<vmem>>, vector<8x128xf32>,
    %c7_i32_288 = arith.constant 7 : i32
    %c7_i32_289 = arith.constant 7 : i32
    %647 = arith.subi %c7_i32_289, %c7_i32_288 : i32
    %648 = arith.index_cast %c7_i32_288 : i32 to index
    %c0_290 = arith.constant 0 : index
    %c0_291 = arith.constant 0 : index
    %649 = vector.load %arg7[%648, %c0_290, %c0_291] : memref<8x8x512xf32, #tpu.memory_space<vmem>>, vector<1x8x512xf32>
    %650 = vector.shape_cast %649 : vector<1x8x512xf32> to vector<8x512xf32>
    %c0_292 = arith.constant 0 : index
    %c0_293 = arith.constant 0 : index
    %651 = vector.load %arg9[%c0_292, %c0_293] : memref<8x128xf32, #tpu.memory_space<vmem>>, vector<8x128xf32>
    %c0_294 = arith.constant 0 : index
    %c0_295 = arith.constant 0 : index
    %652 = vector.load %arg10[%c0_294, %c0_295] : memref<8x128xf32, #tpu.memory_space<vmem>>, vector<8x128xf32>
    %cst_296 = arith.constant dense<0.000000e+00> : vector<8x512xf32>
    %653 = tpu.matmul %651, %22, %cst_296 {dimension_numbers = #tpu.dot_dimension_numbers<[1], [0], [0], [1], [0, 0, 1, 1], [], []>} : vector<8x128xf32>, vector<128x512xf32>, vector<8x512xf32> -> vector<8x512xf32>
    %654 = arith.addf %650, %653 : vector<8x512xf32>
    %655 = vector.extract_strided_slice %654 {offsets = [0, 0], sizes = [8, 128], strides = [1, 1]} : vector<8x512xf32> to vector<8x128xf32>
    %656 = arith.negf %655 : vector<8x128xf32>
    %657 = math.exp %656 : vector<8x128xf32>
    %cst_297 = arith.constant 1.000000e+00 : f32
    %658 = vector.broadcast %cst_297 : f32 to vector<8x128xf32>
    %659 = arith.addf %658, %657 : vector<8x128xf32>
    %660 = arith.divf %658, %659 : vector<8x128xf32>
    %661 = vector.extract_strided_slice %654 {offsets = [0, 128], sizes = [8, 128], strides = [1, 1]} : vector<8x512xf32> to vector<8x128xf32>
    %662 = arith.negf %661 : vector<8x128xf32>
    %663 = math.exp %662 : vector<8x128xf32>
    %cst_298 = arith.constant 1.000000e+00 : f32
    %664 = vector.broadcast %cst_298 : f32 to vector<8x128xf32>
    %665 = arith.addf %664, %663 : vector<8x128xf32>
    %666 = arith.divf %664, %665 : vector<8x128xf32>
    %667 = vector.extract_strided_slice %654 {offsets = [0, 256], sizes = [8, 128], strides = [1, 1]} : vector<8x512xf32> to vector<8x128xf32>
    %668 = math.tanh %667 : vector<8x128xf32>
    %669 = vector.extract_strided_slice %654 {offsets = [0, 384], sizes = [8, 128], strides = [1, 1]} : vector<8x512xf32> to vector<8x128xf32>
    %670 = arith.negf %669 : vector<8x128xf32>
    %671 = math.exp %670 : vector<8x128xf32>
    %cst_299 = arith.constant 1.000000e+00 : f32
    %672 = vector.broadcast %cst_299 : f32 to vector<8x128xf32>
    %673 = arith.addf %672, %671 : vector<8x128xf32>
    %674 = arith.divf %672, %673 : vector<8x128xf32>
    %675 = arith.mulf %666, %652 : vector<8x128xf32>
    %676 = arith.mulf %660, %668 : vector<8x128xf32>
    %677 = arith.addf %675, %676 : vector<8x128xf32>
    %678 = math.tanh %677 : vector<8x128xf32>
    %679 = arith.mulf %674, %678 : vector<8x128xf32>
    %680 = arith.index_cast %647 : i32 to index
    %c0_300 = arith.constant 0 : index
    %c0_301 = arith.constant 0 : index
    %681 = vector.load %arg8[%680, %c0_300, %c0_301] : memref<8x8x512xf32, #tpu.memory_space<vmem>>, vector<1x8x512xf32>
    %682 = vector.shape_cast %681 : vector<1x8x512xf32> to vector<8x512xf32>
    %c0_302 = arith.constant 0 : index
    %c0_303 = arith.constant 0 : index
    %683 = vector.load %arg11[%c0_302, %c0_303] : memref<8x128xf32, #tpu.memory_space<vmem>>, vector<8x128xf32>
    %c0_304 = arith.constant 0 : index
    %c0_305 = arith.constant 0 : index
    %684 = vector.load %arg12[%c0_304, %c0_305] : memref<8x128xf32, #tpu.memory_space<vmem>>, vector<8x128xf32>
    %cst_306 = arith.constant dense<0.000000e+00> : vector<8x512xf32>
    %685 = tpu.matmul %683, %23, %cst_306 {dimension_numbers = #tpu.dot_dimension_numbers<[1], [0], [0], [1], [0, 0, 1, 1], [], []>} : vector<8x128xf32>, vector<128x512xf32>, vector<8x512xf32> -> vector<8x512xf32>
    %686 = arith.addf %682, %685 : vector<8x512xf32>
    %687 = vector.extract_strided_slice %686 {offsets = [0, 0], sizes = [8, 128], strides = [1, 1]} : vector<8x512xf32> to vector<8x128xf32>
    %688 = arith.negf %687 : vector<8x128xf32>
    %689 = math.exp %688 : vector<8x128xf32>
    %cst_307 = arith.constant 1.000000e+00 : f32
    %690 = vector.broadcast %cst_307 : f32 to vector<8x128xf32>
    %691 = arith.addf %690, %689 : vector<8x128xf32>
    %692 = arith.divf %690, %691 : vector<8x128xf32>
    %693 = vector.extract_strided_slice %686 {offsets = [0, 128], sizes = [8, 128], strides = [1, 1]} : vector<8x512xf32> to vector<8x128xf32>
    %694 = arith.negf %693 : vector<8x128xf32>
    %695 = math.exp %694 : vector<8x128xf32>
    %cst_308 = arith.constant 1.000000e+00 : f32
    %696 = vector.broadcast %cst_308 : f32 to vector<8x128xf32>
    %697 = arith.addf %696, %695 : vector<8x128xf32>
    %698 = arith.divf %696, %697 : vector<8x128xf32>
    %699 = vector.extract_strided_slice %686 {offsets = [0, 256], sizes = [8, 128], strides = [1, 1]} : vector<8x512xf32> to vector<8x128xf32>
    %700 = math.tanh %699 : vector<8x128xf32>
    %701 = vector.extract_strided_slice %686 {offsets = [0, 384], sizes = [8, 128], strides = [1, 1]} : vector<8x512xf32> to vector<8x128xf32>
    %702 = arith.negf %701 : vector<8x128xf32>
    %703 = math.exp %702 : vector<8x128xf32>
    %cst_309 = arith.constant 1.000000e+00 : f32
    %704 = vector.broadcast %cst_309 : f32 to vector<8x128xf32>
    %705 = arith.addf %704, %703 : vector<8x128xf32>
    %706 = arith.divf %704, %705 : vector<8x128xf32>
    %707 = arith.mulf %698, %684 : vector<8x128xf32>
    %708 = arith.mulf %692, %700 : vector<8x128xf32>
    %709 = arith.addf %707, %708 : vector<8x128xf32>
    %710 = math.tanh %709 : vector<8x128xf32>
    %711 = arith.mulf %706, %710 : vector<8x128xf32>
    %712 = vector.broadcast %c7_i32_288 : i32 to vector<8x1xi32>
    %713 = arith.cmpi slt, %712, %21 : vector<8x1xi32>
    %714 = vector.broadcast %647 : i32 to vector<8x1xi32>
    %715 = arith.cmpi slt, %714, %21 : vector<8x1xi32>
    %c0_310 = arith.constant 0 : index
    %c0_311 = arith.constant 0 : index
    %716 = vector.load %arg9[%c0_310, %c0_311] : memref<8x128xf32, #tpu.memory_space<vmem>>, vector<8x128xf32>
    %717 = vector.shape_cast %713 : vector<8x1xi1> to vector<8x1xi1>
    %718 = vector.broadcast %717 : vector<8x1xi1> to vector<8x128xi1>
    %719 = arith.select %718, %679, %716 : vector<8x128xi1>, vector<8x128xf32>
    %c0_312 = arith.constant 0 : index
    %c0_313 = arith.constant 0 : index
    %720 = vector.load %arg9[%c0_312, %c0_313] : memref<8x128xf32, #tpu.memory_space<vmem>>, vector<8x128xf32>
    tpu.vector_store %arg9[%c0_312, %c0_313], %719 {strides = array<i32>} : memref<8x128xf32, #tpu.memory_space<vmem>>, vector<8x128xf32>,
    %c0_314 = arith.constant 0 : index
    %c0_315 = arith.constant 0 : index
    %721 = vector.load %arg10[%c0_314, %c0_315] : memref<8x128xf32, #tpu.memory_space<vmem>>, vector<8x128xf32>
    %722 = vector.shape_cast %713 : vector<8x1xi1> to vector<8x1xi1>
    %723 = vector.broadcast %722 : vector<8x1xi1> to vector<8x128xi1>
    %724 = arith.select %723, %677, %721 : vector<8x128xi1>, vector<8x128xf32>
    %c0_316 = arith.constant 0 : index
    %c0_317 = arith.constant 0 : index
    %725 = vector.load %arg10[%c0_316, %c0_317] : memref<8x128xf32, #tpu.memory_space<vmem>>, vector<8x128xf32>
    tpu.vector_store %arg10[%c0_316, %c0_317], %724 {strides = array<i32>} : memref<8x128xf32, #tpu.memory_space<vmem>>, vector<8x128xf32>,
    %c0_318 = arith.constant 0 : index
    %c0_319 = arith.constant 0 : index
    %726 = vector.load %arg11[%c0_318, %c0_319] : memref<8x128xf32, #tpu.memory_space<vmem>>, vector<8x128xf32>
    %727 = vector.shape_cast %715 : vector<8x1xi1> to vector<8x1xi1>
    %728 = vector.broadcast %727 : vector<8x1xi1> to vector<8x128xi1>
    %729 = arith.select %728, %711, %726 : vector<8x128xi1>, vector<8x128xf32>
    %c0_320 = arith.constant 0 : index
    %c0_321 = arith.constant 0 : index
    %730 = vector.load %arg11[%c0_320, %c0_321] : memref<8x128xf32, #tpu.memory_space<vmem>>, vector<8x128xf32>
    tpu.vector_store %arg11[%c0_320, %c0_321], %729 {strides = array<i32>} : memref<8x128xf32, #tpu.memory_space<vmem>>, vector<8x128xf32>,
    %c0_322 = arith.constant 0 : index
    %c0_323 = arith.constant 0 : index
    %731 = vector.load %arg12[%c0_322, %c0_323] : memref<8x128xf32, #tpu.memory_space<vmem>>, vector<8x128xf32>
    %732 = vector.shape_cast %715 : vector<8x1xi1> to vector<8x1xi1>
    %733 = vector.broadcast %732 : vector<8x1xi1> to vector<8x128xi1>
    %734 = arith.select %733, %709, %731 : vector<8x128xi1>, vector<8x128xf32>
    %c0_324 = arith.constant 0 : index
    %c0_325 = arith.constant 0 : index
    %735 = vector.load %arg12[%c0_324, %c0_325] : memref<8x128xf32, #tpu.memory_space<vmem>>, vector<8x128xf32>
    tpu.vector_store %arg12[%c0_324, %c0_325], %734 {strides = array<i32>} : memref<8x128xf32, #tpu.memory_space<vmem>>, vector<8x128xf32>,
    %c8_i32 = arith.constant 8 : i32
    %c0_326 = arith.constant 0 : index
    %c0_327 = arith.constant 0 : index
    %736 = vector.load %arg9[%c0_326, %c0_327] : memref<8x128xf32, #tpu.memory_space<vmem>>, vector<8x128xf32>
    %c0_328 = arith.constant 0 : index
    %c0_329 = arith.constant 0 : index
    %c0_330 = arith.constant 0 : index
    %737 = vector.load %arg6[%c0_328, %c0_329, %c0_330] : memref<2x8x128xf32, #tpu.memory_space<vmem>>, vector<1x8x128xf32>
    %738 = vector.shape_cast %737 : vector<1x8x128xf32> to vector<8x128xf32>
    %739 = vector.shape_cast %736 : vector<8x128xf32> to vector<1x8x128xf32>
    tpu.vector_store %arg6[%c0_328, %c0_329, %c0_330], %739 {strides = array<i32>} : memref<2x8x128xf32, #tpu.memory_space<vmem>>, vector<1x8x128xf32>,
    %c0_331 = arith.constant 0 : index
    %c0_332 = arith.constant 0 : index
    %740 = vector.load %arg11[%c0_331, %c0_332] : memref<8x128xf32, #tpu.memory_space<vmem>>, vector<8x128xf32>
    %c1 = arith.constant 1 : index
    %c0_333 = arith.constant 0 : index
    %c0_334 = arith.constant 0 : index
    %741 = vector.load %arg6[%c1, %c0_333, %c0_334] : memref<2x8x128xf32, #tpu.memory_space<vmem>>, vector<1x8x128xf32>
    %742 = vector.shape_cast %741 : vector<1x8x128xf32> to vector<8x128xf32>
    %743 = vector.shape_cast %740 : vector<8x128xf32> to vector<1x8x128xf32>
    tpu.vector_store %arg6[%c1, %c0_333, %c0_334], %743 {strides = array<i32>} : memref<2x8x128xf32, #tpu.memory_space<vmem>>, vector<1x8x128xf32>,
    return
  }
}

</mosaic_0001>

<llo_original>
// kernel: tpu_custom_call.1
$region0: #{tpu_custom_call.1}
  #allocation0 [shape = 'u32[]', space=smem, size = 0x4, offset = 0x4, fixed_abs, tag = 'smem constant byte address 0x4 - core index']
  #allocation1 [shape = 'u32[144,128]{1,0:T(1,128)}', space=vmem, size = 0x12000, scoped, tag = 'internal scratch']
  #allocation2 [shape = 'f32[8,8,512]{2,1,0:T(8,128)}', space=vmem, size = 0x20000, scoped, tag = 'scratch operand']
  #allocation3 [shape = 'f32[8,8,512]{2,1,0:T(8,128)}', space=vmem, size = 0x20000, scoped, tag = 'scratch operand']
  #allocation4 [shape = 'f32[8,128]{1,0:T(8,128)}', space=vmem, size = 0x1000, scoped, tag = 'scratch operand']
  #allocation5 [shape = 'f32[8,128]{1,0:T(8,128)}', space=vmem, size = 0x1000, scoped, tag = 'scratch operand']
  #allocation6 [shape = 'f32[8,128]{1,0:T(8,128)}', space=vmem, size = 0x1000, scoped, tag = 'scratch operand']
  #allocation7 [shape = 'f32[8,128]{1,0:T(8,128)}', space=vmem, size = 0x1000, scoped, tag = 'scratch operand']
  %s0 = inlined_call_operand.hbm [shape: f32[8,8,16], index: 0, kind: input, shape index: {}]
  %s1 = inlined_call_operand.vmem [shape: s32[8,1], index: 1, kind: input, shape index: {}]
  %s2 = inlined_call_operand.hbm [shape: f32[16,1024], index: 2, kind: input, shape index: {}]
  %s3 = inlined_call_operand.vmem [shape: f32[1,1024], index: 3, kind: input, shape index: {}]
  %s4 = inlined_call_operand.hbm [shape: f32[128,512], index: 4, kind: input, shape index: {}]
  %s5 = inlined_call_operand.hbm [shape: f32[128,512], index: 5, kind: input, shape index: {}]
  %s6 = inlined_call_operand.hbm [shape: f32[2,8,128], index: 6, kind: output, shape index: {}]
  %s7 = sld [smem:[#allocation0]]
  $region50: #{tpu_custom_call.1} parent=0
    _
  %s9 = ssub.s32 1, %s7
  %s10 = scalar_select 0, %s9, %s7
  $region1: #{tpu_custom_call.1} parent=0
    #allocation8 [shape = 'u8[32768]{0}', space=vmem, size = 0x8000, scoped, tag = 'input window, operand 0, single buffered']
    #allocation9 [shape = 's32[1]{0}', space=sflag, size = 0x4, scoped, tag = 'scoped memory for tpu_custom_call.1']
    #allocation10 [shape = 's32[1]{0}', space=sflag, size = 0x4, scoped, tag = 'scoped memory for tpu_custom_call.1']
    #allocation11 [shape = 'u8[65536]{0}', space=vmem, size = 0x10000, scoped, tag = 'input window, operand 2, single buffered']
    #allocation12 [shape = 's32[1]{0}', space=sflag, size = 0x4, scoped, tag = 'scoped memory for tpu_custom_call.1']
    #allocation13 [shape = 'u8[262144]{0}', space=vmem, size = 0x40000, scoped, tag = 'input window, operand 4, single buffered']
    #allocation14 [shape = 'u8[262144]{0}', space=vmem, size = 0x40000, scoped, tag = 'input window, operand 5, single buffered']
    #allocation15 [shape = 's32[1]{0}', space=sflag, size = 0x4, scoped, tag = 'scoped memory for tpu_custom_call.1']
    #allocation16 [shape = 'u8[8192]{0}', space=vmem, size = 0x2000, scoped, tag = 'output window, operand 0, single buffered']
    %11 = vsyncpa [#allocation9], 0
    %12 = vsyncpa [#allocation12], 0
    %13 = vsyncpa [#allocation15], 0
    %14 = vsyncpa [#allocation10], 0
    // Predicated region
    $region2: #{tpu_custom_call.1} parent=1 // pred_check
      _
    $region3: #{tpu_custom_call.1} parent=1 // pred_check_branch
      %16 = sbr.rel (0) target = $region5
    $region4: #{tpu_custom_call.1} parent=1 // pred_region
      %s18 = ssub.s32 1024, 1024
      %19 = vsyncadd [#allocation9], %s18
      %s20 = sshll.u32 [#allocation8], 4
      %s21 = int_to_ptr.vmem [resolvable:$true] %s20
      %26 = dma.hbm_to_vmem [thread:$0]  %s0, 1024, %s21, [#allocation9], 128, 128, 8
    $region5: #{tpu_custom_call.1} parent=1 // pred_fallthru
      _
    // Predicated region
    $region6: #{tpu_custom_call.1} parent=1 // pred_check
      _
    $region7: #{tpu_custom_call.1} parent=1 // pred_check_branch
      %28 = sbr.rel (0) target = $region9
    $region8: #{tpu_custom_call.1} parent=1 // pred_region
      _
    $region9: #{tpu_custom_call.1} parent=1 // pred_fallthru
      _
    // Predicated region
    $region10: #{tpu_custom_call.1} parent=1 // pred_check
      _
    $region11: #{tpu_custom_call.1} parent=1 // pred_check_branch
      %30 = sbr.rel (0) target = $region13
    $region12: #{tpu_custom_call.1} parent=1 // pred_region
      %s32 = ssub.s32 2048, 2048
      %33 = vsyncadd [#allocation12], %s32
      %s34 = sshll.u32 [#allocation11], 4
      %s35 = int_to_ptr.vmem [resolvable:$true] %s34
      %40 = dma.hbm_to_vmem [thread:$0]  %s2, 2048, %s35, [#allocation12], 1024, 1024, 64
    $region13: #{tpu_custom_call.1} parent=1 // pred_fallthru
      _
    // Predicated region
    $region14: #{tpu_custom_call.1} parent=1 // pred_check
      _
    $region15: #{tpu_custom_call.1} parent=1 // pred_check_branch
      %42 = sbr.rel (0) target = $region17
    $region16: #{tpu_custom_call.1} parent=1 // pred_region
      _
    $region17: #{tpu_custom_call.1} parent=1 // pred_fallthru
      _
    // Predicated region
    $region18: #{tpu_custom_call.1} parent=1 // pred_check
      _
    $region19: #{tpu_custom_call.1} parent=1 // pred_check_branch
      %44 = sbr.rel (0) target = $region21
    $region20: #{tpu_custom_call.1} parent=1 // pred_region
      %s46 = ssub.s32 8192, 8192
      %47 = vsyncadd [#allocation12], %s46
      %s48 = sshll.u32 [#allocation13], 4
      %s49 = int_to_ptr.vmem [resolvable:$true] %s48
      %54 = dma.hbm_to_vmem [thread:$0]  %s4, 8192, %s49, [#allocation12], 512, 512, 32
    $region21: #{tpu_custom_call.1} parent=1 // pred_fallthru
      _
    // Predicated region
    $region22: #{tpu_custom_call.1} parent=1 // pred_check
      _
    $region23: #{tpu_custom_call.1} parent=1 // pred_check_branch
      %56 = sbr.rel (0) target = $region25
    $region24: #{tpu_custom_call.1} parent=1 // pred_region
      %s58 = ssub.s32 8192, 8192
      %59 = vsyncadd [#allocation15], %s58
      %s60 = sshll.u32 [#allocation14], 4
      %s61 = int_to_ptr.vmem [resolvable:$true] %s60
      %66 = dma.hbm_to_vmem [thread:$0]  %s5, 8192, %s61, [#allocation15], 512, 512, 32
    $region25: #{tpu_custom_call.1} parent=1 // pred_fallthru
      _
    // Predicated region
    $region26: #{tpu_custom_call.1} parent=1 // pred_check
      _
    $region27: #{tpu_custom_call.1} parent=1 // pred_check_branch
      %68 = sbr.rel (0) target = $region29
    $region28: #{tpu_custom_call.1} parent=1 // pred_region
      %69 = dma.done [#allocation9], 1024
    $region29: #{tpu_custom_call.1} parent=1 // pred_fallthru
      _
    // Predicated region
    $region30: #{tpu_custom_call.1} parent=1 // pred_check
      _
    $region31: #{tpu_custom_call.1} parent=1 // pred_check_branch
      %71 = sbr.rel (0) target = $region33
    $region32: #{tpu_custom_call.1} parent=1 // pred_region
      %72 = dma.done [#allocation12], 2048
    $region33: #{tpu_custom_call.1} parent=1 // pred_fallthru
      _
    // Predicated region
    $region34: #{tpu_custom_call.1} parent=1 // pred_check
      _
    $region35: #{tpu_custom_call.1} parent=1 // pred_check_branch
      %74 = sbr.rel (0) target = $region37
    $region36: #{tpu_custom_call.1} parent=1 // pred_region
      %75 = dma.done [#allocation12], 8192
    $region37: #{tpu_custom_call.1} parent=1 // pred_fallthru
      _
    // Predicated region
    $region38: #{tpu_custom_call.1} parent=1 // pred_check
      _
    $region39: #{tpu_custom_call.1} parent=1 // pred_check_branch
      %77 = sbr.rel (0) target = $region41
    $region40: #{tpu_custom_call.1} parent=1 // pred_region
      %78 = dma.done [#allocation15], 8192
    $region41: #{tpu_custom_call.1} parent=1 // pred_fallthru
      _
    %v79 = vld [vmem:[#allocation8] sm:$0xff]
    %v80 = vld [vmem:[#allocation8 + $0x8] sm:$0xff]
    %v81 = vld [vmem:[#allocation8 + $0x10] sm:$0xff]
    %v82 = vld [vmem:[#allocation8 + $0x18] sm:$0xff]
    %v83 = vld [vmem:[#allocation8 + $0x20] sm:$0xff]
    %v84 = vld [vmem:[#allocation8 + $0x28] sm:$0xff]
    %v85 = vld [vmem:[#allocation8 + $0x30] sm:$0xff]
    %v86 = vld [vmem:[#allocation8 + $0x38] sm:$0xff]
    %v87 = vld [vmem:[#allocation11] sm:$0xff]
    %v88 = vld [vmem:[#allocation11 + $0x8] sm:$0xff]
    %v89 = vld [vmem:[#allocation11 + $0x10] sm:$0xff]
    %v90 = vld [vmem:[#allocation11 + $0x18] sm:$0xff]
    %v91 = vld [vmem:[#allocation11 + $0x20] sm:$0xff]
    %v92 = vld [vmem:[#allocation11 + $0x28] sm:$0xff]
    %v93 = vld [vmem:[#allocation11 + $0x30] sm:$0xff]
    %v94 = vld [vmem:[#allocation11 + $0x38] sm:$0xff]
    %v95 = vld [vmem:[#allocation11 + $0x40] sm:$0xff]
    %v96 = vld [vmem:[#allocation11 + $0x48] sm:$0xff]
    %v97 = vld [vmem:[#allocation11 + $0x50] sm:$0xff]
    %v98 = vld [vmem:[#allocation11 + $0x58] sm:$0xff]
    %v99 = vld [vmem:[#allocation11 + $0x60] sm:$0xff]
    %v100 = vld [vmem:[#allocation11 + $0x68] sm:$0xff]
    %v101 = vld [vmem:[#allocation11 + $0x70] sm:$0xff]
    %v102 = vld [vmem:[#allocation11 + $0x78] sm:$0xff]
    %v103 = vld [vmem:[%s3] sm:$0xff]
    %v105 = vlaneseq
    %v106 = vshrl.u32 %v105, 7
    %v107 = vsub.s32 0, %v106
    %v108 = vrot.slane %v103, %v107
    %v109 = vlaneseq
    %v110 = vshrl.u32 %v109, 7
    %v111 = vsub.s32 1, %v110
    %v112 = vrot.slane %v103, %v111
    %v113 = vlaneseq
    %v114 = vshrl.u32 %v113, 7
    %v115 = vsub.s32 2, %v114
    %v116 = vrot.slane %v103, %v115
    %v117 = vlaneseq
    %v118 = vshrl.u32 %v117, 7
    %v119 = vsub.s32 3, %v118
    %v120 = vrot.slane %v103, %v119
    %v121 = vlaneseq
    %v122 = vshrl.u32 %v121, 7
    %v123 = vsub.s32 4, %v122
    %v124 = vrot.slane %v103, %v123
    %v125 = vlaneseq
    %v126 = vshrl.u32 %v125, 7
    %v127 = vsub.s32 5, %v126
    %v128 = vrot.slane %v103, %v127
    %v129 = vlaneseq
    %v130 = vshrl.u32 %v129, 7
    %v131 = vsub.s32 6, %v130
    %v132 = vrot.slane %v103, %v131
    %v133 = vlaneseq
    %v134 = vshrl.u32 %v133, 7
    %v135 = vsub.s32 7, %v134
    %v136 = vrot.slane %v103, %v135
    %vm145 = vcmask 130048
    %v147 = vsel %vm145, %v79, 0
    %v150 = vsel %vm145, %v80, 0
    %v153 = vsel %vm145, %v81, 0
    %v156 = vsel %vm145, %v82, 0
    %v159 = vsel %vm145, %v83, 0
    %v162 = vsel %vm145, %v84, 0
    %v165 = vsel %vm145, %v85, 0
    %v168 = vsel %vm145, %v86, 0
    %170 = vmatprep.subr.mxu0 0.0
    %171 = vmatpush1.msra.mxu0 0.0
    %172 = vmatprep.subr.mxu0 0.0
    %173 = vmatpush1.msra.mxu0 0.0
    %174 = vmatprep.subr.mxu0 0.0
    %175 = vmatpush1.msra.mxu0 0.0
    %176 = vmatprep.subr.mxu0 0.0
    %177 = vmatpush1.msra.mxu0 0.0
    %178 = vmatprep.subr.mxu0 0.0
    %179 = vmatpush1.msra.mxu0 0.0
    %180 = vmatprep.subr.mxu0 0.0
    %181 = vmatpush1.msra.mxu0 0.0
    %182 = vmatprep.subr.mxu0 0.0
    %183 = vmatpush1.msra.mxu0 0.0
    %184 = vmatprep.subr.mxu0 0.0
    %185 = vmatpush1.msra.mxu0 0.0
    %186 = vmatprep.subr.mxu0 0.0
    %187 = vmatpush1.msra.mxu0 0.0
    %188 = vmatprep.subr.mxu0 0.0
    %189 = vmatpush1.msra.mxu0 0.0
    %190 = vmatprep.subr.mxu0 0.0
    %191 = vmatpush1.msra.mxu0 0.0
    %192 = vmatprep.subr.mxu0 0.0
    %193 = vmatpush1.msra.mxu0 0.0
    %194 = vmatprep.subr.mxu0 0.0
    %195 = vmatpush1.msra.mxu0 0.0
    %196 = vmatprep.subr.mxu0 0.0
    %197 = vmatpush1.msra.mxu0 0.0
    %198 = vmatprep.subr.mxu0 %v96
    %199 = vmatpush1.msra.mxu0 %v95
    %200 = vmatprep.subr.mxu0 %v88
    %201 = vmatpush1.msra.mxu0 %v87
    %202 = vmatprep.subr.mxu0 0.0
    %203 = vmatpush2.msra.mxu0 0.0
    %204 = vmatprep.subr.mxu0 0.0
    %205 = vmatpush2.msra.mxu0 0.0
    %206 = vmatprep.subr.mxu0 0.0
    %207 = vmatpush2.msra.mxu0 0.0
    %208 = vmatprep.subr.mxu0 0.0
    %209 = vmatpush2.msra.mxu0 0.0
    %210 = vmatprep.subr.mxu0 0.0
    %211 = vmatpush2.msra.mxu0 0.0
    %212 = vmatprep.subr.mxu0 0.0
    %213 = vmatpush2.msra.mxu0 0.0
    %214 = vmatprep.subr.mxu0 0.0
    %215 = vmatpush2.msra.mxu0 0.0
    %216 = vmatprep.subr.mxu0 0.0
    %217 = vmatpush2.msra.mxu0 0.0
    %218 = vmatprep.subr.mxu0 0.0
    %219 = vmatpush2.msra.mxu0 0.0
    %220 = vmatprep.subr.mxu0 0.0
    %221 = vmatpush2.msra.mxu0 0.0
    %222 = vmatprep.subr.mxu0 0.0
    %223 = vmatpush2.msra.mxu0 0.0
    %224 = vmatprep.subr.mxu0 0.0
    %225 = vmatpush2.msra.mxu0 0.0
    %226 = vmatprep.subr.mxu0 0.0
    %227 = vmatpush2.msra.mxu0 0.0
    %228 = vmatprep.subr.mxu0 0.0
    %229 = vmatpush2.msra.mxu0 0.0
    %230 = vmatprep.subr.mxu0 0.0
    %231 = vmatpush2.msra.mxu0 0.0
    %232 = vmatprep.subr.mxu0 0.0
    %233 = vmatpush2.msra.mxu0 0.0
    %234 = vmatprep.mubr.f32.mxu0 0.0
    %235 = vmatmul.mubr.f32.gmra.mxu0 %v147
    %v236 = vpop.f32.mrf.mxu0
    %v237 = vadd.f32 %v108, %v236
    %v238 = vpop.f32.mrf.mxu0
    %v239 = vadd.f32 %v112, %v238
    %240 = vmatprep.mubr.f32.mxu0 0.0
    %241 = vmatmul.mubr.f32.gmra.mxu0 %v150
    %v242 = vpop.f32.mrf.mxu0
    %v243 = vadd.f32 %v108, %v242
    %v244 = vpop.f32.mrf.mxu0
    %v245 = vadd.f32 %v112, %v244
    %246 = vmatprep.mubr.f32.mxu0 0.0
    %247 = vmatmul.mubr.f32.gmra.mxu0 %v153
    %v248 = vpop.f32.mrf.mxu0
    %v249 = vadd.f32 %v108, %v248
    %v250 = vpop.f32.mrf.mxu0
    %v251 = vadd.f32 %v112, %v250
    %252 = vmatprep.mubr.f32.mxu0 0.0
    %253 = vmatmul.mubr.f32.gmra.mxu0 %v156
    %v254 = vpop.f32.mrf.mxu0
    %v255 = vadd.f32 %v108, %v254
    %v256 = vpop.f32.mrf.mxu0
    %v257 = vadd.f32 %v112, %v256
    %258 = vmatprep.mubr.f32.mxu0 0.0
    %259 = vmatmul.mubr.f32.gmra.mxu0 %v159
    %v260 = vpop.f32.mrf.mxu0
    %v261 = vadd.f32 %v108, %v260
    %v262 = vpop.f32.mrf.mxu0
    %v263 = vadd.f32 %v112, %v262
    %264 = vmatprep.mubr.f32.mxu0 0.0
    %265 = vmatmul.mubr.f32.gmra.mxu0 %v162
    %v266 = vpop.f32.mrf.mxu0
    %v267 = vadd.f32 %v108, %v266
    %v268 = vpop.f32.mrf.mxu0
    %v269 = vadd.f32 %v112, %v268
    %270 = vmatprep.mubr.f32.mxu0 0.0
    %271 = vmatmul.mubr.f32.gmra.mxu0 %v165
    %v272 = vpop.f32.mrf.mxu0
    %v273 = vadd.f32 %v108, %v272
    %v274 = vpop.f32.mrf.mxu0
    %v275 = vadd.f32 %v112, %v274
    %276 = vmatprep.mubr.f32.mxu0 0.0
    %277 = vmatmul.mubr.f32.gmra.mxu0 %v168
    %v278 = vpop.f32.mrf.mxu0
    %v279 = vadd.f32 %v108, %v278
    %v280 = vpop.f32.mrf.mxu0
    %v281 = vadd.f32 %v112, %v280
    %282 = vdwg.mxu0
    %283 = vmatprep.subr.mxu0 0.0
    %284 = vmatpush1.msra.mxu0 0.0
    %285 = vmatprep.subr.mxu0 0.0
    %286 = vmatpush1.msra.mxu0 0.0
    %287 = vmatprep.subr.mxu0 0.0
    %288 = vmatpush1.msra.mxu0 0.0
    %289 = vmatprep.subr.mxu0 0.0
    %290 = vmatpush1.msra.mxu0 0.0
    %291 = vmatprep.subr.mxu0 0.0
    %292 = vmatpush1.msra.mxu0 0.0
    %293 = vmatprep.subr.mxu0 0.0
    %294 = vmatpush1.msra.mxu0 0.0
    %295 = vmatprep.subr.mxu0 0.0
    %296 = vmatpush1.msra.mxu0 0.0
    %297 = vmatprep.subr.mxu0 0.0
    %298 = vmatpush1.msra.mxu0 0.0
    %299 = vmatprep.subr.mxu0 0.0
    %300 = vmatpush1.msra.mxu0 0.0
    %301 = vmatprep.subr.mxu0 0.0
    %302 = vmatpush1.msra.mxu0 0.0
    %303 = vmatprep.subr.mxu0 0.0
    %304 = vmatpush1.msra.mxu0 0.0
    %305 = vmatprep.subr.mxu0 0.0
    %306 = vmatpush1.msra.mxu0 0.0
    %307 = vmatprep.subr.mxu0 0.0
    %308 = vmatpush1.msra.mxu0 0.0
    %309 = vmatprep.subr.mxu0 0.0
    %310 = vmatpush1.msra.mxu0 0.0
    %311 = vmatprep.subr.mxu0 %v98
    %312 = vmatpush1.msra.mxu0 %v97
    %313 = vmatprep.subr.mxu0 %v90
    %314 = vmatpush1.msra.mxu0 %v89
    %315 = vmatprep.subr.mxu0 0.0
    %316 = vmatpush2.msra.mxu0 0.0
    %317 = vmatprep.subr.mxu0 0.0
    %318 = vmatpush2.msra.mxu0 0.0
    %319 = vmatprep.subr.mxu0 0.0
    %320 = vmatpush2.msra.mxu0 0.0
    %321 = vmatprep.subr.mxu0 0.0
    %322 = vmatpush2.msra.mxu0 0.0
    %323 = vmatprep.subr.mxu0 0.0
    %324 = vmatpush2.msra.mxu0 0.0
    %325 = vmatprep.subr.mxu0 0.0
    %326 = vmatpush2.msra.mxu0 0.0
    %327 = vmatprep.subr.mxu0 0.0
    %328 = vmatpush2.msra.mxu0 0.0
    %329 = vmatprep.subr.mxu0 0.0
    %330 = vmatpush2.msra.mxu0 0.0
    %331 = vmatprep.subr.mxu0 0.0
    %332 = vmatpush2.msra.mxu0 0.0
    %333 = vmatprep.subr.mxu0 0.0
    %334 = vmatpush2.msra.mxu0 0.0
    %335 = vmatprep.subr.mxu0 0.0
    %336 = vmatpush2.msra.mxu0 0.0
    %337 = vmatprep.subr.mxu0 0.0
    %338 = vmatpush2.msra.mxu0 0.0
    %339 = vmatprep.subr.mxu0 0.0
    %340 = vmatpush2.msra.mxu0 0.0
    %341 = vmatprep.subr.mxu0 0.0
    %342 = vmatpush2.msra.mxu0 0.0
    %343 = vmatprep.subr.mxu0 0.0
    %344 = vmatpush2.msra.mxu0 0.0
    %345 = vmatprep.subr.mxu0 0.0
    %346 = vmatpush2.msra.mxu0 0.0
    %347 = vmatprep.mubr.f32.mxu0 0.0
    %348 = vmatmul.mubr.f32.gmra.mxu0 %v147
    %v349 = vpop.f32.mrf.mxu0
    %v350 = vadd.f32 %v116, %v349
    %v351 = vpop.f32.mrf.mxu0
    %v352 = vadd.f32 %v120, %v351
    %353 = vmatprep.mubr.f32.mxu0 0.0
    %354 = vmatmul.mubr.f32.gmra.mxu0 %v150
    %v355 = vpop.f32.mrf.mxu0
    %v356 = vadd.f32 %v116, %v355
    %v357 = vpop.f32.mrf.mxu0
    %v358 = vadd.f32 %v120, %v357
    %359 = vmatprep.mubr.f32.mxu0 0.0
    %360 = vmatmul.mubr.f32.gmra.mxu0 %v153
    %v361 = vpop.f32.mrf.mxu0
    %v362 = vadd.f32 %v116, %v361
    %v363 = vpop.f32.mrf.mxu0
    %v364 = vadd.f32 %v120, %v363
    %365 = vmatprep.mubr.f32.mxu0 0.0
    %366 = vmatmul.mubr.f32.gmra.mxu0 %v156
    %v367 = vpop.f32.mrf.mxu0
    %v368 = vadd.f32 %v116, %v367
    %v369 = vpop.f32.mrf.mxu0
    %v370 = vadd.f32 %v120, %v369
    %371 = vmatprep.mubr.f32.mxu0 0.0
    %372 = vmatmul.mubr.f32.gmra.mxu0 %v159
    %v373 = vpop.f32.mrf.mxu0
    %v374 = vadd.f32 %v116, %v373
    %v375 = vpop.f32.mrf.mxu0
    %v376 = vadd.f32 %v120, %v375
    %377 = vmatprep.mubr.f32.mxu0 0.0
    %378 = vmatmul.mubr.f32.gmra.mxu0 %v162
    %v379 = vpop.f32.mrf.mxu0
    %v380 = vadd.f32 %v116, %v379
    %v381 = vpop.f32.mrf.mxu0
    %v382 = vadd.f32 %v120, %v381
    %383 = vmatprep.mubr.f32.mxu0 0.0
    %384 = vmatmul.mubr.f32.gmra.mxu0 %v165
    %v385 = vpop.f32.mrf.mxu0
    %v386 = vadd.f32 %v116, %v385
    %v387 = vpop.f32.mrf.mxu0
    %v388 = vadd.f32 %v120, %v387
    %389 = vmatprep.mubr.f32.mxu0 0.0
    %390 = vmatmul.mubr.f32.gmra.mxu0 %v168
    %v391 = vpop.f32.mrf.mxu0
    %v392 = vadd.f32 %v116, %v391
    %v393 = vpop.f32.mrf.mxu0
    %v394 = vadd.f32 %v120, %v393
    %395 = vdwg.mxu0
    %396 = vmatprep.subr.mxu0 0.0
    %397 = vmatpush1.msra.mxu0 0.0
    %398 = vmatprep.subr.mxu0 0.0
    %399 = vmatpush1.msra.mxu0 0.0
    %400 = vmatprep.subr.mxu0 0.0
    %401 = vmatpush1.msra.mxu0 0.0
    %402 = vmatprep.subr.mxu0 0.0
    %403 = vmatpush1.msra.mxu0 0.0
    %404 = vmatprep.subr.mxu0 0.0
    %405 = vmatpush1.msra.mxu0 0.0
    %406 = vmatprep.subr.mxu0 0.0
    %407 = vmatpush1.msra.mxu0 0.0
    %408 = vmatprep.subr.mxu0 0.0
    %409 = vmatpush1.msra.mxu0 0.0
    %410 = vmatprep.subr.mxu0 0.0
    %411 = vmatpush1.msra.mxu0 0.0
    %412 = vmatprep.subr.mxu0 0.0
    %413 = vmatpush1.msra.mxu0 0.0
    %414 = vmatprep.subr.mxu0 0.0
    %415 = vmatpush1.msra.mxu0 0.0
    %416 = vmatprep.subr.mxu0 0.0
    %417 = vmatpush1.msra.mxu0 0.0
    %418 = vmatprep.subr.mxu0 0.0
    %419 = vmatpush1.msra.mxu0 0.0
    %420 = vmatprep.subr.mxu0 0.0
    %421 = vmatpush1.msra.mxu0 0.0
    %422 = vmatprep.subr.mxu0 0.0
    %423 = vmatpush1.msra.mxu0 0.0
    %424 = vmatprep.subr.mxu0 %v100
    %425 = vmatpush1.msra.mxu0 %v99
    %426 = vmatprep.subr.mxu0 %v92
    %427 = vmatpush1.msra.mxu0 %v91
    %428 = vmatprep.subr.mxu0 0.0
    %429 = vmatpush2.msra.mxu0 0.0
    %430 = vmatprep.subr.mxu0 0.0
    %431 = vmatpush2.msra.mxu0 0.0
    %432 = vmatprep.subr.mxu0 0.0
    %433 = vmatpush2.msra.mxu0 0.0
    %434 = vmatprep.subr.mxu0 0.0
    %435 = vmatpush2.msra.mxu0 0.0
    %436 = vmatprep.subr.mxu0 0.0
    %437 = vmatpush2.msra.mxu0 0.0
    %438 = vmatprep.subr.mxu0 0.0
    %439 = vmatpush2.msra.mxu0 0.0
    %440 = vmatprep.subr.mxu0 0.0
    %441 = vmatpush2.msra.mxu0 0.0
    %442 = vmatprep.subr.mxu0 0.0
    %443 = vmatpush2.msra.mxu0 0.0
    %444 = vmatprep.subr.mxu0 0.0
    %445 = vmatpush2.msra.mxu0 0.0
    %446 = vmatprep.subr.mxu0 0.0
    %447 = vmatpush2.msra.mxu0 0.0
    %448 = vmatprep.subr.mxu0 0.0
    %449 = vmatpush2.msra.mxu0 0.0
    %450 = vmatprep.subr.mxu0 0.0
    %451 = vmatpush2.msra.mxu0 0.0
    %452 = vmatprep.subr.mxu0 0.0
    %453 = vmatpush2.msra.mxu0 0.0
    %454 = vmatprep.subr.mxu0 0.0
    %455 = vmatpush2.msra.mxu0 0.0
    %456 = vmatprep.subr.mxu0 0.0
    %457 = vmatpush2.msra.mxu0 0.0
    %458 = vmatprep.subr.mxu0 0.0
    %459 = vmatpush2.msra.mxu0 0.0
    %460 = vmatprep.mubr.f32.mxu0 0.0
    %461 = vmatmul.mubr.f32.gmra.mxu0 %v147
    %v462 = vpop.f32.mrf.mxu0
    %v463 = vadd.f32 %v124, %v462
    %v464 = vpop.f32.mrf.mxu0
    %v465 = vadd.f32 %v128, %v464
    %466 = vmatprep.mubr.f32.mxu0 0.0
    %467 = vmatmul.mubr.f32.gmra.mxu0 %v150
    %v468 = vpop.f32.mrf.mxu0
    %v469 = vadd.f32 %v124, %v468
    %v470 = vpop.f32.mrf.mxu0
    %v471 = vadd.f32 %v128, %v470
    %472 = vmatprep.mubr.f32.mxu0 0.0
    %473 = vmatmul.mubr.f32.gmra.mxu0 %v153
    %v474 = vpop.f32.mrf.mxu0
    %v475 = vadd.f32 %v124, %v474
    %v476 = vpop.f32.mrf.mxu0
    %v477 = vadd.f32 %v128, %v476
    %478 = vmatprep.mubr.f32.mxu0 0.0
    %479 = vmatmul.mubr.f32.gmra.mxu0 %v156
    %v480 = vpop.f32.mrf.mxu0
    %v481 = vadd.f32 %v124, %v480
    %v482 = vpop.f32.mrf.mxu0
    %v483 = vadd.f32 %v128, %v482
    %484 = vmatprep.mubr.f32.mxu0 0.0
    %485 = vmatmul.mubr.f32.gmra.mxu0 %v159
    %v486 = vpop.f32.mrf.mxu0
    %v487 = vadd.f32 %v124, %v486
    %v488 = vpop.f32.mrf.mxu0
    %v489 = vadd.f32 %v128, %v488
    %490 = vmatprep.mubr.f32.mxu0 0.0
    %491 = vmatmul.mubr.f32.gmra.mxu0 %v162
    %v492 = vpop.f32.mrf.mxu0
    %v493 = vadd.f32 %v124, %v492
    %v494 = vpop.f32.mrf.mxu0
    %v495 = vadd.f32 %v128, %v494
    %496 = vmatprep.mubr.f32.mxu0 0.0
    %497 = vmatmul.mubr.f32.gmra.mxu0 %v165
    %v498 = vpop.f32.mrf.mxu0
    %v499 = vadd.f32 %v124, %v498
    %v500 = vpop.f32.mrf.mxu0
    %v501 = vadd.f32 %v128, %v500
    %502 = vmatprep.mubr.f32.mxu0 0.0
    %503 = vmatmul.mubr.f32.gmra.mxu0 %v168
    %v504 = vpop.f32.mrf.mxu0
    %v505 = vadd.f32 %v124, %v504
    %v506 = vpop.f32.mrf.mxu0
    %v507 = vadd.f32 %v128, %v506
    %508 = vdwg.mxu0
    %509 = vmatprep.subr.mxu0 0.0
    %510 = vmatpush1.msra.mxu0 0.0
    %511 = vmatprep.subr.mxu0 0.0
    %512 = vmatpush1.msra.mxu0 0.0
    %513 = vmatprep.subr.mxu0 0.0
    %514 = vmatpush1.msra.mxu0 0.0
    %515 = vmatprep.subr.mxu0 0.0
    %516 = vmatpush1.msra.mxu0 0.0
    %517 = vmatprep.subr.mxu0 0.0
    %518 = vmatpush1.msra.mxu0 0.0
    %519 = vmatprep.subr.mxu0 0.0
    %520 = vmatpush1.msra.mxu0 0.0
    %521 = vmatprep.subr.mxu0 0.0
    %522 = vmatpush1.msra.mxu0 0.0
    %523 = vmatprep.subr.mxu0 0.0
    %524 = vmatpush1.msra.mxu0 0.0
    %525 = vmatprep.subr.mxu0 0.0
    %526 = vmatpush1.msra.mxu0 0.0
    %527 = vmatprep.subr.mxu0 0.0
    %528 = vmatpush1.msra.mxu0 0.0
    %529 = vmatprep.subr.mxu0 0.0
    %530 = vmatpush1.msra.mxu0 0.0
    %531 = vmatprep.subr.mxu0 0.0
    %532 = vmatpush1.msra.mxu0 0.0
    %533 = vmatprep.subr.mxu0 0.0
    %534 = vmatpush1.msra.mxu0 0.0
    %535 = vmatprep.subr.mxu0 0.0
    %536 = vmatpush1.msra.mxu0 0.0
    %537 = vmatprep.subr.mxu0 %v102
    %538 = vmatpush1.msra.mxu0 %v101
    %539 = vmatprep.subr.mxu0 %v94
    %540 = vmatpush1.msra.mxu0 %v93
    %541 = vmatprep.subr.mxu0 0.0
    %542 = vmatpush2.msra.mxu0 0.0
    %543 = vmatprep.subr.mxu0 0.0
    %544 = vmatpush2.msra.mxu0 0.0
    %545 = vmatprep.subr.mxu0 0.0
    %546 = vmatpush2.msra.mxu0 0.0
    %547 = vmatprep.subr.mxu0 0.0
    %548 = vmatpush2.msra.mxu0 0.0
    %549 = vmatprep.subr.mxu0 0.0
    %550 = vmatpush2.msra.mxu0 0.0
    %551 = vmatprep.subr.mxu0 0.0
    %552 = vmatpush2.msra.mxu0 0.0
    %553 = vmatprep.subr.mxu0 0.0
    %554 = vmatpush2.msra.mxu0 0.0
    %555 = vmatprep.subr.mxu0 0.0
    %556 = vmatpush2.msra.mxu0 0.0
    %557 = vmatprep.subr.mxu0 0.0
    %558 = vmatpush2.msra.mxu0 0.0
    %559 = vmatprep.subr.mxu0 0.0
    %560 = vmatpush2.msra.mxu0 0.0
    %561 = vmatprep.subr.mxu0 0.0
    %562 = vmatpush2.msra.mxu0 0.0
    %563 = vmatprep.subr.mxu0 0.0
    %564 = vmatpush2.msra.mxu0 0.0
    %565 = vmatprep.subr.mxu0 0.0
    %566 = vmatpush2.msra.mxu0 0.0
    %567 = vmatprep.subr.mxu0 0.0
    %568 = vmatpush2.msra.mxu0 0.0
    %569 = vmatprep.subr.mxu0 0.0
    %570 = vmatpush2.msra.mxu0 0.0
    %571 = vmatprep.subr.mxu0 0.0
    %572 = vmatpush2.msra.mxu0 0.0
    %573 = vmatprep.mubr.f32.mxu0 0.0
    %574 = vmatmul.mubr.f32.gmra.mxu0 %v147
    %v575 = vpop.f32.mrf.mxu0
    %v576 = vadd.f32 %v132, %v575
    %v577 = vpop.f32.mrf.mxu0
    %v578 = vadd.f32 %v136, %v577
    %579 = vmatprep.mubr.f32.mxu0 0.0
    %580 = vmatmul.mubr.f32.gmra.mxu0 %v150
    %v581 = vpop.f32.mrf.mxu0
    %v582 = vadd.f32 %v132, %v581
    %v583 = vpop.f32.mrf.mxu0
    %v584 = vadd.f32 %v136, %v583
    %585 = vmatprep.mubr.f32.mxu0 0.0
    %586 = vmatmul.mubr.f32.gmra.mxu0 %v153
    %v587 = vpop.f32.mrf.mxu0
    %v588 = vadd.f32 %v132, %v587
    %v589 = vpop.f32.mrf.mxu0
    %v590 = vadd.f32 %v136, %v589
    %591 = vmatprep.mubr.f32.mxu0 0.0
    %592 = vmatmul.mubr.f32.gmra.mxu0 %v156
    %v593 = vpop.f32.mrf.mxu0
    %v594 = vadd.f32 %v132, %v593
    %v595 = vpop.f32.mrf.mxu0
    %v596 = vadd.f32 %v136, %v595
    %597 = vmatprep.mubr.f32.mxu0 0.0
    %598 = vmatmul.mubr.f32.gmra.mxu0 %v159
    %v599 = vpop.f32.mrf.mxu0
    %v600 = vadd.f32 %v132, %v599
    %v601 = vpop.f32.mrf.mxu0
    %v602 = vadd.f32 %v136, %v601
    %603 = vmatprep.mubr.f32.mxu0 0.0
    %604 = vmatmul.mubr.f32.gmra.mxu0 %v162
    %v605 = vpop.f32.mrf.mxu0
    %v606 = vadd.f32 %v132, %v605
    %v607 = vpop.f32.mrf.mxu0
    %v608 = vadd.f32 %v136, %v607
    %609 = vmatprep.mubr.f32.mxu0 0.0
    %610 = vmatmul.mubr.f32.gmra.mxu0 %v165
    %v611 = vpop.f32.mrf.mxu0
    %v612 = vadd.f32 %v132, %v611
    %v613 = vpop.f32.mrf.mxu0
    %v614 = vadd.f32 %v136, %v613
    %615 = vmatprep.mubr.f32.mxu0 0.0
    %616 = vmatmul.mubr.f32.gmra.mxu0 %v168
    %v617 = vpop.f32.mrf.mxu0
    %v618 = vadd.f32 %v132, %v617
    %v619 = vpop.f32.mrf.mxu0
    %v620 = vadd.f32 %v136, %v619
    %621 = vdwg.mxu0
    %622 = vst [vmem:[#allocation2] sm:$0xff] %v237
    %623 = vst [vmem:[#allocation2 + $0x8] sm:$0xff] %v239
    %624 = vst [vmem:[#allocation2 + $0x10] sm:$0xff] %v350
    %625 = vst [vmem:[#allocation2 + $0x18] sm:$0xff] %v352
    %626 = vst [vmem:[#allocation2 + $0x20] sm:$0xff] %v243
    %627 = vst [vmem:[#allocation2 + $0x28] sm:$0xff] %v245
    %628 = vst [vmem:[#allocation2 + $0x30] sm:$0xff] %v356
    %629 = vst [vmem:[#allocation2 + $0x38] sm:$0xff] %v358
    %630 = vst [vmem:[#allocation2 + $0x40] sm:$0xff] %v249
    %631 = vst [vmem:[#allocation2 + $0x48] sm:$0xff] %v251
    %632 = vst [vmem:[#allocation2 + $0x50] sm:$0xff] %v362
    %633 = vst [vmem:[#allocation2 + $0x58] sm:$0xff] %v364
    %634 = vst [vmem:[#allocation2 + $0x60] sm:$0xff] %v255
    %635 = vst [vmem:[#allocation2 + $0x68] sm:$0xff] %v257
    %636 = vst [vmem:[#allocation2 + $0x70] sm:$0xff] %v368
    %637 = vst [vmem:[#allocation2 + $0x78] sm:$0xff] %v370
    %638 = vst [vmem:[#allocation2 + $0x80] sm:$0xff] %v261
    %639 = vst [vmem:[#allocation2 + $0x88] sm:$0xff] %v263
    %640 = vst [vmem:[#allocation2 + $0x90] sm:$0xff] %v374
    %641 = vst [vmem:[#allocation2 + $0x98] sm:$0xff] %v376
    %642 = vst [vmem:[#allocation2 + $0xa0] sm:$0xff] %v267
    %643 = vst [vmem:[#allocation2 + $0xa8] sm:$0xff] %v269
    %644 = vst [vmem:[#allocation2 + $0xb0] sm:$0xff] %v380
    %645 = vst [vmem:[#allocation2 + $0xb8] sm:$0xff] %v382
    %646 = vst [vmem:[#allocation2 + $0xc0] sm:$0xff] %v273
    %647 = vst [vmem:[#allocation2 + $0xc8] sm:$0xff] %v275
    %648 = vst [vmem:[#allocation2 + $0xd0] sm:$0xff] %v386
    %649 = vst [vmem:[#allocation2 + $0xd8] sm:$0xff] %v388
    %650 = vst [vmem:[#allocation2 + $0xe0] sm:$0xff] %v279
    %651 = vst [vmem:[#allocation2 + $0xe8] sm:$0xff] %v281
    %652 = vst [vmem:[#allocation2 + $0xf0] sm:$0xff] %v392
    %653 = vst [vmem:[#allocation2 + $0xf8] sm:$0xff] %v394
    %654 = vst [vmem:[#allocation3] sm:$0xff] %v463
    %655 = vst [vmem:[#allocation3 + $0x8] sm:$0xff] %v465
    %656 = vst [vmem:[#allocation3 + $0x10] sm:$0xff] %v576
    %657 = vst [vmem:[#allocation3 + $0x18] sm:$0xff] %v578
    %658 = vst [vmem:[#allocation3 + $0x20] sm:$0xff] %v469
    %659 = vst [vmem:[#allocation3 + $0x28] sm:$0xff] %v471
    %660 = vst [vmem:[#allocation3 + $0x30] sm:$0xff] %v582
    %661 = vst [vmem:[#allocation3 + $0x38] sm:$0xff] %v584
    %662 = vst [vmem:[#allocation3 + $0x40] sm:$0xff] %v475
    %663 = vst [vmem:[#allocation3 + $0x48] sm:$0xff] %v477
    %664 = vst [vmem:[#allocation3 + $0x50] sm:$0xff] %v588
    %665 = vst [vmem:[#allocation3 + $0x58] sm:$0xff] %v590
    %666 = vst [vmem:[#allocation3 + $0x60] sm:$0xff] %v481
    %667 = vst [vmem:[#allocation3 + $0x68] sm:$0xff] %v483
    %668 = vst [vmem:[#allocation3 + $0x70] sm:$0xff] %v594
    %669 = vst [vmem:[#allocation3 + $0x78] sm:$0xff] %v596
    %670 = vst [vmem:[#allocation3 + $0x80] sm:$0xff] %v487
    %671 = vst [vmem:[#allocation3 + $0x88] sm:$0xff] %v489
    %672 = vst [vmem:[#allocation3 + $0x90] sm:$0xff] %v600
    %673 = vst [vmem:[#allocation3 + $0x98] sm:$0xff] %v602
    %674 = vst [vmem:[#allocation3 + $0xa0] sm:$0xff] %v493
    %675 = vst [vmem:[#allocation3 + $0xa8] sm:$0xff] %v495
    %676 = vst [vmem:[#allocation3 + $0xb0] sm:$0xff] %v606
    %677 = vst [vmem:[#allocation3 + $0xb8] sm:$0xff] %v608
    %678 = vst [vmem:[#allocation3 + $0xc0] sm:$0xff] %v499
    %679 = vst [vmem:[#allocation3 + $0xc8] sm:$0xff] %v501
    %680 = vst [vmem:[#allocation3 + $0xd0] sm:$0xff] %v612
    %681 = vst [vmem:[#allocation3 + $0xd8] sm:$0xff] %v614
    %682 = vst [vmem:[#allocation3 + $0xe0] sm:$0xff] %v505
    %683 = vst [vmem:[#allocation3 + $0xe8] sm:$0xff] %v507
    %684 = vst [vmem:[#allocation3 + $0xf0] sm:$0xff] %v618
    %685 = vst [vmem:[#allocation3 + $0xf8] sm:$0xff] %v620
    %686 = vst [vmem:[#allocation4] sm:$0xff] 0.0
    %687 = vst [vmem:[#allocation5] sm:$0xff] 0.0
    %688 = vst [vmem:[#allocation6] sm:$0xff] 0.0
    %689 = vst [vmem:[#allocation7] sm:$0xff] 0.0
    %v690 = vld [vmem:[%s1] sm:$0xff]
    %v691 = vld [vmem:[#allocation13] sm:$0xff]
    %v692 = vld [vmem:[#allocation13 + $0x8] sm:$0xff]
    %v693 = vld [vmem:[#allocation13 + $0x10] sm:$0xff]
    %v694 = vld [vmem:[#allocation13 + $0x18] sm:$0xff]
    %v695 = vld [vmem:[#allocation13 + $0x20] sm:$0xff]
    %v696 = vld [vmem:[#allocation13 + $0x28] sm:$0xff]
    %v697 = vld [vmem:[#allocation13 + $0x30] sm:$0xff]
    %v698 = vld [vmem:[#allocation13 + $0x38] sm:$0xff]
    %v699 = vld [vmem:[#allocation13 + $0x40] sm:$0xff]
    %v700 = vld [vmem:[#allocation13 + $0x48] sm:$0xff]
    %v701 = vld [vmem:[#allocation13 + $0x50] sm:$0xff]
    %v702 = vld [vmem:[#allocation13 + $0x58] sm:$0xff]
    %v703 = vld [vmem:[#allocation13 + $0x60] sm:$0xff]
    %v704 = vld [vmem:[#allocation13 + $0x68] sm:$0xff]
    %v705 = vld [vmem:[#allocation13 + $0x70] sm:$0xff]
    %v706 = vld [vmem:[#allocation13 + $0x78] sm:$0xff]
    %v707 = vld [vmem:[#allocation13 + $0x80] sm:$0xff]
    %v708 = vld [vmem:[#allocation13 + $0x88] sm:$0xff]
    %v709 = vld [vmem:[#allocation13 + $0x90] sm:$0xff]
    %v710 = vld [vmem:[#allocation13 + $0x98] sm:$0xff]
    %v711 = vld [vmem:[#allocation13 + $0xa0] sm:$0xff]
    %v712 = vld [vmem:[#allocation13 + $0xa8] sm:$0xff]
    %v713 = vld [vmem:[#allocation13 + $0xb0] sm:$0xff]
    %v714 = vld [vmem:[#allocation13 + $0xb8] sm:$0xff]
    %v715 = vld [vmem:[#allocation13 + $0xc0] sm:$0xff]
    %v716 = vld [vmem:[#allocation13 + $0xc8] sm:$0xff]
    %v717 = vld [vmem:[#allocation13 + $0xd0] sm:$0xff]
    %v718 = vld [vmem:[#allocation13 + $0xd8] sm:$0xff]
    %v719 = vld [vmem:[#allocation13 + $0xe0] sm:$0xff]
    %v720 = vld [vmem:[#allocation13 + $0xe8] sm:$0xff]
    %v721 = vld [vmem:[#allocation13 + $0xf0] sm:$0xff]
    %v722 = vld [vmem:[#allocation13 + $0xf8] sm:$0xff]
    %v723 = vld [vmem:[#allocation13 + $0x100] sm:$0xff]
    %v724 = vld [vmem:[#allocation13 + $0x108] sm:$0xff]
    %v725 = vld [vmem:[#allocation13 + $0x110] sm:$0xff]
    %v726 = vld [vmem:[#allocation13 + $0x118] sm:$0xff]
    %v727 = vld [vmem:[#allocation13 + $0x120] sm:$0xff]
    %v728 = vld [vmem:[#allocation13 + $0x128] sm:$0xff]
    %v729 = vld [vmem:[#allocation13 + $0x130] sm:$0xff]
    %v730 = vld [vmem:[#allocation13 + $0x138] sm:$0xff]
    %v731 = vld [vmem:[#allocation13 + $0x140] sm:$0xff]
    %v732 = vld [vmem:[#allocation13 + $0x148] sm:$0xff]
    %v733 = vld [vmem:[#allocation13 + $0x150] sm:$0xff]
    %v734 = vld [vmem:[#allocation13 + $0x158] sm:$0xff]
    %v735 = vld [vmem:[#allocation13 + $0x160] sm:$0xff]
    %v736 = vld [vmem:[#allocation13 + $0x168] sm:$0xff]
    %v737 = vld [vmem:[#allocation13 + $0x170] sm:$0xff]
    %v738 = vld [vmem:[#allocation13 + $0x178] sm:$0xff]
    %v739 = vld [vmem:[#allocation13 + $0x180] sm:$0xff]
    %v740 = vld [vmem:[#allocation13 + $0x188] sm:$0xff]
    %v741 = vld [vmem:[#allocation13 + $0x190] sm:$0xff]
    %v742 = vld [vmem:[#allocation13 + $0x198] sm:$0xff]
    %v743 = vld [vmem:[#allocation13 + $0x1a0] sm:$0xff]
    %v744 = vld [vmem:[#allocation13 + $0x1a8] sm:$0xff]
    %v745 = vld [vmem:[#allocation13 + $0x1b0] sm:$0xff]
    %v746 = vld [vmem:[#allocation13 + $0x1b8] sm:$0xff]
    %v747 = vld [vmem:[#allocation13 + $0x1c0] sm:$0xff]
    %v748 = vld [vmem:[#allocation13 + $0x1c8] sm:$0xff]
    %v749 = vld [vmem:[#allocation13 + $0x1d0] sm:$0xff]
    %v750 = vld [vmem:[#allocation13 + $0x1d8] sm:$0xff]
    %v751 = vld [vmem:[#allocation13 + $0x1e0] sm:$0xff]
    %v752 = vld [vmem:[#allocation13 + $0x1e8] sm:$0xff]
    %v753 = vld [vmem:[#allocation13 + $0x1f0] sm:$0xff]
    %v754 = vld [vmem:[#allocation13 + $0x1f8] sm:$0xff]
    %v755 = vld [vmem:[#allocation14] sm:$0xff]
    %v756 = vld [vmem:[#allocation14 + $0x8] sm:$0xff]
    %v757 = vld [vmem:[#allocation14 + $0x10] sm:$0xff]
    %v758 = vld [vmem:[#allocation14 + $0x18] sm:$0xff]
    %v759 = vld [vmem:[#allocation14 + $0x20] sm:$0xff]
    %v760 = vld [vmem:[#allocation14 + $0x28] sm:$0xff]
    %v761 = vld [vmem:[#allocation14 + $0x30] sm:$0xff]
    %v762 = vld [vmem:[#allocation14 + $0x38] sm:$0xff]
    %v763 = vld [vmem:[#allocation14 + $0x40] sm:$0xff]
    %v764 = vld [vmem:[#allocation14 + $0x48] sm:$0xff]
    %v765 = vld [vmem:[#allocation14 + $0x50] sm:$0xff]
    %v766 = vld [vmem:[#allocation14 + $0x58] sm:$0xff]
    %v767 = vld [vmem:[#allocation14 + $0x60] sm:$0xff]
    %v768 = vld [vmem:[#allocation14 + $0x68] sm:$0xff]
    %v769 = vld [vmem:[#allocation14 + $0x70] sm:$0xff]
    %v770 = vld [vmem:[#allocation14 + $0x78] sm:$0xff]
    %v771 = vld [vmem:[#allocation14 + $0x80] sm:$0xff]
    %v772 = vld [vmem:[#allocation14 + $0x88] sm:$0xff]
    %v773 = vld [vmem:[#allocation14 + $0x90] sm:$0xff]
    %v774 = vld [vmem:[#allocation14 + $0x98] sm:$0xff]
    %v775 = vld [vmem:[#allocation14 + $0xa0] sm:$0xff]
    %v776 = vld [vmem:[#allocation14 + $0xa8] sm:$0xff]
    %v777 = vld [vmem:[#allocation14 + $0xb0] sm:$0xff]
    %v778 = vld [vmem:[#allocation14 + $0xb8] sm:$0xff]
    %v779 = vld [vmem:[#allocation14 + $0xc0] sm:$0xff]
    %v780 = vld [vmem:[#allocation14 + $0xc8] sm:$0xff]
    %v781 = vld [vmem:[#allocation14 + $0xd0] sm:$0xff]
    %v782 = vld [vmem:[#allocation14 + $0xd8] sm:$0xff]
    %v783 = vld [vmem:[#allocation14 + $0xe0] sm:$0xff]
    %v784 = vld [vmem:[#allocation14 + $0xe8] sm:$0xff]
    %v785 = vld [vmem:[#allocation14 + $0xf0] sm:$0xff]
    %v786 = vld [vmem:[#allocation14 + $0xf8] sm:$0xff]
    %v787 = vld [vmem:[#allocation14 + $0x100] sm:$0xff]
    %v788 = vld [vmem:[#allocation14 + $0x108] sm:$0xff]
    %v789 = vld [vmem:[#allocation14 + $0x110] sm:$0xff]
    %v790 = vld [vmem:[#allocation14 + $0x118] sm:$0xff]
    %v791 = vld [vmem:[#allocation14 + $0x120] sm:$0xff]
    %v792 = vld [vmem:[#allocation14 + $0x128] sm:$0xff]
    %v793 = vld [vmem:[#allocation14 + $0x130] sm:$0xff]
    %v794 = vld [vmem:[#allocation14 + $0x138] sm:$0xff]
    %v795 = vld [vmem:[#allocation14 + $0x140] sm:$0xff]
    %v796 = vld [vmem:[#allocation14 + $0x148] sm:$0xff]
    %v797 = vld [vmem:[#allocation14 + $0x150] sm:$0xff]
    %v798 = vld [vmem:[#allocation14 + $0x158] sm:$0xff]
    %v799 = vld [vmem:[#allocation14 + $0x160] sm:$0xff]
    %v800 = vld [vmem:[#allocation14 + $0x168] sm:$0xff]
    %v801 = vld [vmem:[#allocation14 + $0x170] sm:$0xff]
    %v802 = vld [vmem:[#allocation14 + $0x178] sm:$0xff]
    %v803 = vld [vmem:[#allocation14 + $0x180] sm:$0xff]
    %v804 = vld [vmem:[#allocation14 + $0x188] sm:$0xff]
    %v805 = vld [vmem:[#allocation14 + $0x190] sm:$0xff]
    %v806 = vld [vmem:[#allocation14 + $0x198] sm:$0xff]
    %v807 = vld [vmem:[#allocation14 + $0x1a0] sm:$0xff]
    %v808 = vld [vmem:[#allocation14 + $0x1a8] sm:$0xff]
    %v809 = vld [vmem:[#allocation14 + $0x1b0] sm:$0xff]
    %v810 = vld [vmem:[#allocation14 + $0x1b8] sm:$0xff]
    %v811 = vld [vmem:[#allocation14 + $0x1c0] sm:$0xff]
    %v812 = vld [vmem:[#allocation14 + $0x1c8] sm:$0xff]
    %v813 = vld [vmem:[#allocation14 + $0x1d0] sm:$0xff]
    %v814 = vld [vmem:[#allocation14 + $0x1d8] sm:$0xff]
    %v815 = vld [vmem:[#allocation14 + $0x1e0] sm:$0xff]
    %v816 = vld [vmem:[#allocation14 + $0x1e8] sm:$0xff]
    %v817 = vld [vmem:[#allocation14 + $0x1f0] sm:$0xff]
    %v818 = vld [vmem:[#allocation14 + $0x1f8] sm:$0xff]
    %v819 = vld [vmem:[#allocation2] sm:$0xff]
    %v820 = vld [vmem:[#allocation2 + $0x8] sm:$0xff]
    %v821 = vld [vmem:[#allocation2 + $0x10] sm:$0xff]
    %v822 = vld [vmem:[#allocation2 + $0x18] sm:$0xff]
    %v823 = vld [vmem:[#allocation4] sm:$0xff]
    %v824 = vld [vmem:[#allocation5] sm:$0xff]
    %825 = vmatprep.subr.mxu0 %v752
    %826 = vmatpush1.msra.mxu0 %v751
    %827 = vmatprep.subr.mxu0 %v748
    %828 = vmatpush1.msra.mxu0 %v747
    %829 = vmatprep.subr.mxu0 %v744
    %830 = vmatpush1.msra.mxu0 %v743
    %831 = vmatprep.subr.mxu0 %v740
    %832 = vmatpush1.msra.mxu0 %v739
    %833 = vmatprep.subr.mxu0 %v736
    %834 = vmatpush1.msra.mxu0 %v735
    %835 = vmatprep.subr.mxu0 %v732
    %836 = vmatpush1.msra.mxu0 %v731
    %837 = vmatprep.subr.mxu0 %v728
    %838 = vmatpush1.msra.mxu0 %v727
    %839 = vmatprep.subr.mxu0 %v724
    %840 = vmatpush1.msra.mxu0 %v723
    %841 = vmatprep.subr.mxu0 %v720
    %842 = vmatpush1.msra.mxu0 %v719
    %843 = vmatprep.subr.mxu0 %v716
    %844 = vmatpush1.msra.mxu0 %v715
    %845 = vmatprep.subr.mxu0 %v712
    %846 = vmatpush1.msra.mxu0 %v711
    %847 = vmatprep.subr.mxu0 %v708
    %848 = vmatpush1.msra.mxu0 %v707
    %849 = vmatprep.subr.mxu0 %v704
    %850 = vmatpush1.msra.mxu0 %v703
    %851 = vmatprep.subr.mxu0 %v700
    %852 = vmatpush1.msra.mxu0 %v699
    %853 = vmatprep.subr.mxu0 %v696
    %854 = vmatpush1.msra.mxu0 %v695
    %855 = vmatprep.subr.mxu0 %v692
    %856 = vmatpush1.msra.mxu0 %v691
    %857 = vmatprep.subr.mxu0 0.0
    %858 = vmatpush2.msra.mxu0 0.0
    %859 = vmatprep.subr.mxu0 0.0
    %860 = vmatpush2.msra.mxu0 0.0
    %861 = vmatprep.subr.mxu0 0.0
    %862 = vmatpush2.msra.mxu0 0.0
    %863 = vmatprep.subr.mxu0 0.0
    %864 = vmatpush2.msra.mxu0 0.0
    %865 = vmatprep.subr.mxu0 0.0
    %866 = vmatpush2.msra.mxu0 0.0
    %867 = vmatprep.subr.mxu0 0.0
    %868 = vmatpush2.msra.mxu0 0.0
    %869 = vmatprep.subr.mxu0 0.0
    %870 = vmatpush2.msra.mxu0 0.0
    %871 = vmatprep.subr.mxu0 0.0
    %872 = vmatpush2.msra.mxu0 0.0
    %873 = vmatprep.subr.mxu0 0.0
    %874 = vmatpush2.msra.mxu0 0.0
    %875 = vmatprep.subr.mxu0 0.0
    %876 = vmatpush2.msra.mxu0 0.0
    %877 = vmatprep.subr.mxu0 0.0
    %878 = vmatpush2.msra.mxu0 0.0
    %879 = vmatprep.subr.mxu0 0.0
    %880 = vmatpush2.msra.mxu0 0.0
    %881 = vmatprep.subr.mxu0 0.0
    %882 = vmatpush2.msra.mxu0 0.0
    %883 = vmatprep.subr.mxu0 0.0
    %884 = vmatpush2.msra.mxu0 0.0
    %885 = vmatprep.subr.mxu0 0.0
    %886 = vmatpush2.msra.mxu0 0.0
    %887 = vmatprep.subr.mxu0 0.0
    %888 = vmatpush2.msra.mxu0 0.0
    %889 = vmatprep.mubr.f32.mxu0 0.0
    %890 = vmatmul.mubr.f32.gmra.mxu0 %v823
    %v891 = vpop.f32.mrf.mxu0
    %v892 = vadd.f32 0.0, %v891
    %v893 = vpop.f32.mrf.mxu0
    %v894 = vadd.f32 0.0, %v893
    %895 = vdwg.mxu0
    %896 = vmatprep.subr.mxu0 %v754
    %897 = vmatpush1.msra.mxu0 %v753
    %898 = vmatprep.subr.mxu0 %v750
    %899 = vmatpush1.msra.mxu0 %v749
    %900 = vmatprep.subr.mxu0 %v746
    %901 = vmatpush1.msra.mxu0 %v745
    %902 = vmatprep.subr.mxu0 %v742
    %903 = vmatpush1.msra.mxu0 %v741
    %904 = vmatprep.subr.mxu0 %v738
    %905 = vmatpush1.msra.mxu0 %v737
    %906 = vmatprep.subr.mxu0 %v734
    %907 = vmatpush1.msra.mxu0 %v733
    %908 = vmatprep.subr.mxu0 %v730
    %909 = vmatpush1.msra.mxu0 %v729
    %910 = vmatprep.subr.mxu0 %v726
    %911 = vmatpush1.msra.mxu0 %v725
    %912 = vmatprep.subr.mxu0 %v722
    %913 = vmatpush1.msra.mxu0 %v721
    %914 = vmatprep.subr.mxu0 %v718
    %915 = vmatpush1.msra.mxu0 %v717
    %916 = vmatprep.subr.mxu0 %v714
    %917 = vmatpush1.msra.mxu0 %v713
    %918 = vmatprep.subr.mxu0 %v710
    %919 = vmatpush1.msra.mxu0 %v709
    %920 = vmatprep.subr.mxu0 %v706
    %921 = vmatpush1.msra.mxu0 %v705
    %922 = vmatprep.subr.mxu0 %v702
    %923 = vmatpush1.msra.mxu0 %v701
    %924 = vmatprep.subr.mxu0 %v698
    %925 = vmatpush1.msra.mxu0 %v697
    %926 = vmatprep.subr.mxu0 %v694
    %927 = vmatpush1.msra.mxu0 %v693
    %928 = vmatprep.subr.mxu0 0.0
    %929 = vmatpush2.msra.mxu0 0.0
    %930 = vmatprep.subr.mxu0 0.0
    %931 = vmatpush2.msra.mxu0 0.0
    %932 = vmatprep.subr.mxu0 0.0
    %933 = vmatpush2.msra.mxu0 0.0
    %934 = vmatprep.subr.mxu0 0.0
    %935 = vmatpush2.msra.mxu0 0.0
    %936 = vmatprep.subr.mxu0 0.0
    %937 = vmatpush2.msra.mxu0 0.0
    %938 = vmatprep.subr.mxu0 0.0
    %939 = vmatpush2.msra.mxu0 0.0
    %940 = vmatprep.subr.mxu0 0.0
    %941 = vmatpush2.msra.mxu0 0.0
    %942 = vmatprep.subr.mxu0 0.0
    %943 = vmatpush2.msra.mxu0 0.0
    %944 = vmatprep.subr.mxu0 0.0
    %945 = vmatpush2.msra.mxu0 0.0
    %946 = vmatprep.subr.mxu0 0.0
    %947 = vmatpush2.msra.mxu0 0.0
    %948 = vmatprep.subr.mxu0 0.0
    %949 = vmatpush2.msra.mxu0 0.0
    %950 = vmatprep.subr.mxu0 0.0
    %951 = vmatpush2.msra.mxu0 0.0
    %952 = vmatprep.subr.mxu0 0.0
    %953 = vmatpush2.msra.mxu0 0.0
    %954 = vmatprep.subr.mxu0 0.0
    %955 = vmatpush2.msra.mxu0 0.0
    %956 = vmatprep.subr.mxu0 0.0
    %957 = vmatpush2.msra.mxu0 0.0
    %958 = vmatprep.subr.mxu0 0.0
    %959 = vmatpush2.msra.mxu0 0.0
    %960 = vmatprep.mubr.f32.mxu0 0.0
    %961 = vmatmul.mubr.f32.gmra.mxu0 %v823
    %v962 = vpop.f32.mrf.mxu0
    %v963 = vadd.f32 0.0, %v962
    %v964 = vpop.f32.mrf.mxu0
    %v965 = vadd.f32 0.0, %v964
    %966 = vdwg.mxu0
    %v967 = vadd.f32 %v819, %v892
    %v968 = vadd.f32 %v820, %v894
    %v969 = vadd.f32 %v821, %v963
    %v970 = vadd.f32 %v822, %v965
    %v971 = vxor.u32 %v967, 2147483648
    %v972 = vmul.f32 %v971, 1.442695
    %v973 = vpow.pop %v972
    %v974 = vadd.f32 %v973, 1.0
    %v975 = vrcp.pop %v974
    %v976 = vmul.f32 1.0, %v975
    %v977 = vxor.u32 %v968, 2147483648
    %v978 = vmul.f32 %v977, 1.442695
    %v979 = vpow.pop %v978
    %v980 = vadd.f32 %v979, 1.0
    %v981 = vrcp.pop %v980
    %v982 = vmul.f32 1.0, %v981
    %v983 = vtanh.pop %v969
    %v984 = vxor.u32 %v970, 2147483648
    %v985 = vmul.f32 %v984, 1.442695
    %v986 = vpow.pop %v985
    %v987 = vadd.f32 %v986, 1.0
    %v988 = vrcp.pop %v987
    %v989 = vmul.f32 1.0, %v988
    %v990 = vmul.f32 %v982, %v824
    %v991 = vmul.f32 %v976, %v983
    %v992 = vadd.f32 %v990, %v991
    %v993 = vtanh.pop %v992
    %v994 = vmul.f32 %v989, %v993
    %s995 = scalar_lea.vmem [#allocation3], 224
    %v996 = vld [vmem:[%s995] sm:$0xff]
    %v997 = vld [vmem:[%s995 + $0x8] sm:$0xff]
    %v998 = vld [vmem:[%s995 + $0x10] sm:$0xff]
    %v999 = vld [vmem:[%s995 + $0x18] sm:$0xff]
    %v1000 = vld [vmem:[#allocation6] sm:$0xff]
    %v1001 = vld [vmem:[#allocation7] sm:$0xff]
    %1002 = vmatprep.subr.mxu0 %v816
    %1003 = vmatpush1.msra.mxu0 %v815
    %1004 = vmatprep.subr.mxu0 %v812
    %1005 = vmatpush1.msra.mxu0 %v811
    %1006 = vmatprep.subr.mxu0 %v808
    %1007 = vmatpush1.msra.mxu0 %v807
    %1008 = vmatprep.subr.mxu0 %v804
    %1009 = vmatpush1.msra.mxu0 %v803
    %1010 = vmatprep.subr.mxu0 %v800
    %1011 = vmatpush1.msra.mxu0 %v799
    %1012 = vmatprep.subr.mxu0 %v796
    %1013 = vmatpush1.msra.mxu0 %v795
    %1014 = vmatprep.subr.mxu0 %v792
    %1015 = vmatpush1.msra.mxu0 %v791
    %1016 = vmatprep.subr.mxu0 %v788
    %1017 = vmatpush1.msra.mxu0 %v787
    %1018 = vmatprep.subr.mxu0 %v784
    %1019 = vmatpush1.msra.mxu0 %v783
    %1020 = vmatprep.subr.mxu0 %v780
    %1021 = vmatpush1.msra.mxu0 %v779
    %1022 = vmatprep.subr.mxu0 %v776
    %1023 = vmatpush1.msra.mxu0 %v775
    %1024 = vmatprep.subr.mxu0 %v772
    %1025 = vmatpush1.msra.mxu0 %v771
    %1026 = vmatprep.subr.mxu0 %v768
    %1027 = vmatpush1.msra.mxu0 %v767
    %1028 = vmatprep.subr.mxu0 %v764
    %1029 = vmatpush1.msra.mxu0 %v763
    %1030 = vmatprep.subr.mxu0 %v760
    %1031 = vmatpush1.msra.mxu0 %v759
    %1032 = vmatprep.subr.mxu0 %v756
    %1033 = vmatpush1.msra.mxu0 %v755
    %1034 = vmatprep.subr.mxu0 0.0
    %1035 = vmatpush2.msra.mxu0 0.0
    %1036 = vmatprep.subr.mxu0 0.0
    %1037 = vmatpush2.msra.mxu0 0.0
    %1038 = vmatprep.subr.mxu0 0.0
    %1039 = vmatpush2.msra.mxu0 0.0
    %1040 = vmatprep.subr.mxu0 0.0
    %1041 = vmatpush2.msra.mxu0 0.0
    %1042 = vmatprep.subr.mxu0 0.0
    %1043 = vmatpush2.msra.mxu0 0.0
    %1044 = vmatprep.subr.mxu0 0.0
    %1045 = vmatpush2.msra.mxu0 0.0
    %1046 = vmatprep.subr.mxu0 0.0
    %1047 = vmatpush2.msra.mxu0 0.0
    %1048 = vmatprep.subr.mxu0 0.0
    %1049 = vmatpush2.msra.mxu0 0.0
    %1050 = vmatprep.subr.mxu0 0.0
    %1051 = vmatpush2.msra.mxu0 0.0
    %1052 = vmatprep.subr.mxu0 0.0
    %1053 = vmatpush2.msra.mxu0 0.0
    %1054 = vmatprep.subr.mxu0 0.0
    %1055 = vmatpush2.msra.mxu0 0.0
    %1056 = vmatprep.subr.mxu0 0.0
    %1057 = vmatpush2.msra.mxu0 0.0
    %1058 = vmatprep.subr.mxu0 0.0
    %1059 = vmatpush2.msra.mxu0 0.0
    %1060 = vmatprep.subr.mxu0 0.0
    %1061 = vmatpush2.msra.mxu0 0.0
    %1062 = vmatprep.subr.mxu0 0.0
    %1063 = vmatpush2.msra.mxu0 0.0
    %1064 = vmatprep.subr.mxu0 0.0
    %1065 = vmatpush2.msra.mxu0 0.0
    %1066 = vmatprep.mubr.f32.mxu0 0.0
    %1067 = vmatmul.mubr.f32.gmra.mxu0 %v1000
    %v1068 = vpop.f32.mrf.mxu0
    %v1069 = vadd.f32 0.0, %v1068
    %v1070 = vpop.f32.mrf.mxu0
    %v1071 = vadd.f32 0.0, %v1070
    %1072 = vdwg.mxu0
    %1073 = vmatprep.subr.mxu0 %v818
    %1074 = vmatpush1.msra.mxu0 %v817
    %1075 = vmatprep.subr.mxu0 %v814
    %1076 = vmatpush1.msra.mxu0 %v813
    %1077 = vmatprep.subr.mxu0 %v810
    %1078 = vmatpush1.msra.mxu0 %v809
    %1079 = vmatprep.subr.mxu0 %v806
    %1080 = vmatpush1.msra.mxu0 %v805
    %1081 = vmatprep.subr.mxu0 %v802
    %1082 = vmatpush1.msra.mxu0 %v801
    %1083 = vmatprep.subr.mxu0 %v798
    %1084 = vmatpush1.msra.mxu0 %v797
    %1085 = vmatprep.subr.mxu0 %v794
    %1086 = vmatpush1.msra.mxu0 %v793
    %1087 = vmatprep.subr.mxu0 %v790
    %1088 = vmatpush1.msra.mxu0 %v789
    %1089 = vmatprep.subr.mxu0 %v786
    %1090 = vmatpush1.msra.mxu0 %v785
    %1091 = vmatprep.subr.mxu0 %v782
    %1092 = vmatpush1.msra.mxu0 %v781
    %1093 = vmatprep.subr.mxu0 %v778
    %1094 = vmatpush1.msra.mxu0 %v777
    %1095 = vmatprep.subr.mxu0 %v774
    %1096 = vmatpush1.msra.mxu0 %v773
    %1097 = vmatprep.subr.mxu0 %v770
    %1098 = vmatpush1.msra.mxu0 %v769
    %1099 = vmatprep.subr.mxu0 %v766
    %1100 = vmatpush1.msra.mxu0 %v765
    %1101 = vmatprep.subr.mxu0 %v762
    %1102 = vmatpush1.msra.mxu0 %v761
    %1103 = vmatprep.subr.mxu0 %v758
    %1104 = vmatpush1.msra.mxu0 %v757
    %1105 = vmatprep.subr.mxu0 0.0
    %1106 = vmatpush2.msra.mxu0 0.0
    %1107 = vmatprep.subr.mxu0 0.0
    %1108 = vmatpush2.msra.mxu0 0.0
    %1109 = vmatprep.subr.mxu0 0.0
    %1110 = vmatpush2.msra.mxu0 0.0
    %1111 = vmatprep.subr.mxu0 0.0
    %1112 = vmatpush2.msra.mxu0 0.0
    %1113 = vmatprep.subr.mxu0 0.0
    %1114 = vmatpush2.msra.mxu0 0.0
    %1115 = vmatprep.subr.mxu0 0.0
    %1116 = vmatpush2.msra.mxu0 0.0
    %1117 = vmatprep.subr.mxu0 0.0
    %1118 = vmatpush2.msra.mxu0 0.0
    %1119 = vmatprep.subr.mxu0 0.0
    %1120 = vmatpush2.msra.mxu0 0.0
    %1121 = vmatprep.subr.mxu0 0.0
    %1122 = vmatpush2.msra.mxu0 0.0
    %1123 = vmatprep.subr.mxu0 0.0
    %1124 = vmatpush2.msra.mxu0 0.0
    %1125 = vmatprep.subr.mxu0 0.0
    %1126 = vmatpush2.msra.mxu0 0.0
    %1127 = vmatprep.subr.mxu0 0.0
    %1128 = vmatpush2.msra.mxu0 0.0
    %1129 = vmatprep.subr.mxu0 0.0
    %1130 = vmatpush2.msra.mxu0 0.0
    %1131 = vmatprep.subr.mxu0 0.0
    %1132 = vmatpush2.msra.mxu0 0.0
    %1133 = vmatprep.subr.mxu0 0.0
    %1134 = vmatpush2.msra.mxu0 0.0
    %1135 = vmatprep.subr.mxu0 0.0
    %1136 = vmatpush2.msra.mxu0 0.0
    %1137 = vmatprep.mubr.f32.mxu0 0.0
    %1138 = vmatmul.mubr.f32.gmra.mxu0 %v1000
    %v1139 = vpop.f32.mrf.mxu0
    %v1140 = vadd.f32 0.0, %v1139
    %v1141 = vpop.f32.mrf.mxu0
    %v1142 = vadd.f32 0.0, %v1141
    %1143 = vdwg.mxu0
    %v1144 = vadd.f32 %v996, %v1069
    %v1145 = vadd.f32 %v997, %v1071
    %v1146 = vadd.f32 %v998, %v1140
    %v1147 = vadd.f32 %v999, %v1142
    %v1148 = vxor.u32 %v1144, 2147483648
    %v1149 = vmul.f32 %v1148, 1.442695
    %v1150 = vpow.pop %v1149
    %v1151 = vadd.f32 %v1150, 1.0
    %v1152 = vrcp.pop %v1151
    %v1153 = vmul.f32 1.0, %v1152
    %v1154 = vxor.u32 %v1145, 2147483648
    %v1155 = vmul.f32 %v1154, 1.442695
    %v1156 = vpow.pop %v1155
    %v1157 = vadd.f32 %v1156, 1.0
    %v1158 = vrcp.pop %v1157
    %v1159 = vmul.f32 1.0, %v1158
    %v1160 = vtanh.pop %v1146
    %v1161 = vxor.u32 %v1147, 2147483648
    %v1162 = vmul.f32 %v1161, 1.442695
    %v1163 = vpow.pop %v1162
    %v1164 = vadd.f32 %v1163, 1.0
    %v1165 = vrcp.pop %v1164
    %v1166 = vmul.f32 1.0, %v1165
    %v1167 = vmul.f32 %v1159, %v1001
    %v1168 = vmul.f32 %v1153, %v1160
    %v1169 = vadd.f32 %v1167, %v1168
    %v1170 = vtanh.pop %v1169
    %v1171 = vmul.f32 %v1166, %v1170
    %vm1172 = vcmp.gt.s32.totalorder %v690, 0
    %vm1173 = vcmp.gt.s32.totalorder %v690, 7
    %v1174 = vsel %vm1172, 1, 0
    %1175 = vset.pattern.permute.xlu0 0
    %1176 = vperm.xlu0 %1175, %v1174
    %v1177 = vpop.permute.xlu0 %1176
    %vm1178 = vcmp.eq.s32.totalorder %v1177, 1
    %v1179 = vsel %vm1178, %v994, %v823
    %1180 = vst [vmem:[#allocation4] sm:$0xff] %v1179
    %v1181 = vld [vmem:[#allocation5] sm:$0xff]
    %v1182 = vsel %vm1178, %v992, %v1181
    %1183 = vst [vmem:[#allocation5] sm:$0xff] %v1182
    %v1184 = vld [vmem:[#allocation6] sm:$0xff]
    %v1185 = vsel %vm1173, 1, 0
    %1186 = vset.pattern.permute.xlu0 0
    %1187 = vperm.xlu0 %1186, %v1185
    %v1188 = vpop.permute.xlu0 %1187
    %vm1189 = vcmp.eq.s32.totalorder %v1188, 1
    %v1190 = vsel %vm1189, %v1171, %v1184
    %1191 = vst [vmem:[#allocation6] sm:$0xff] %v1190
    %v1192 = vld [vmem:[#allocation7] sm:$0xff]
    %v1193 = vsel %vm1189, %v1169, %v1192
    %1194 = vst [vmem:[#allocation7] sm:$0xff] %v1193
    %s1195 = scalar_lea.vmem [#allocation2], 32
    %v1196 = vld [vmem:[%s1195] sm:$0xff]
    %v1197 = vld [vmem:[%s1195 + $0x8] sm:$0xff]
    %v1198 = vld [vmem:[%s1195 + $0x10] sm:$0xff]
    %v1199 = vld [vmem:[%s1195 + $0x18] sm:$0xff]
    %v1200 = vld [vmem:[#allocation4] sm:$0xff]
    %v1201 = vld [vmem:[#allocation5] sm:$0xff]
    %1202 = vmatprep.subr.mxu0 %v752
    %1203 = vmatpush1.msra.mxu0 %v751
    %1204 = vmatprep.subr.mxu0 %v748
    %1205 = vmatpush1.msra.mxu0 %v747
    %1206 = vmatprep.subr.mxu0 %v744
    %1207 = vmatpush1.msra.mxu0 %v743
    %1208 = vmatprep.subr.mxu0 %v740
    %1209 = vmatpush1.msra.mxu0 %v739
    %1210 = vmatprep.subr.mxu0 %v736
    %1211 = vmatpush1.msra.mxu0 %v735
    %1212 = vmatprep.subr.mxu0 %v732
    %1213 = vmatpush1.msra.mxu0 %v731
    %1214 = vmatprep.subr.mxu0 %v728
    %1215 = vmatpush1.msra.mxu0 %v727
    %1216 = vmatprep.subr.mxu0 %v724
    %1217 = vmatpush1.msra.mxu0 %v723
    %1218 = vmatprep.subr.mxu0 %v720
    %1219 = vmatpush1.msra.mxu0 %v719
    %1220 = vmatprep.subr.mxu0 %v716
    %1221 = vmatpush1.msra.mxu0 %v715
    %1222 = vmatprep.subr.mxu0 %v712
    %1223 = vmatpush1.msra.mxu0 %v711
    %1224 = vmatprep.subr.mxu0 %v708
    %1225 = vmatpush1.msra.mxu0 %v707
    %1226 = vmatprep.subr.mxu0 %v704
    %1227 = vmatpush1.msra.mxu0 %v703
    %1228 = vmatprep.subr.mxu0 %v700
    %1229 = vmatpush1.msra.mxu0 %v699
    %1230 = vmatprep.subr.mxu0 %v696
    %1231 = vmatpush1.msra.mxu0 %v695
    %1232 = vmatprep.subr.mxu0 %v692
    %1233 = vmatpush1.msra.mxu0 %v691
    %1234 = vmatprep.subr.mxu0 0.0
    %1235 = vmatpush2.msra.mxu0 0.0
    %1236 = vmatprep.subr.mxu0 0.0
    %1237 = vmatpush2.msra.mxu0 0.0
    %1238 = vmatprep.subr.mxu0 0.0
    %1239 = vmatpush2.msra.mxu0 0.0
    %1240 = vmatprep.subr.mxu0 0.0
    %1241 = vmatpush2.msra.mxu0 0.0
    %1242 = vmatprep.subr.mxu0 0.0
    %1243 = vmatpush2.msra.mxu0 0.0
    %1244 = vmatprep.subr.mxu0 0.0
    %1245 = vmatpush2.msra.mxu0 0.0
    %1246 = vmatprep.subr.mxu0 0.0
    %1247 = vmatpush2.msra.mxu0 0.0
    %1248 = vmatprep.subr.mxu0 0.0
    %1249 = vmatpush2.msra.mxu0 0.0
    %1250 = vmatprep.subr.mxu0 0.0
    %1251 = vmatpush2.msra.mxu0 0.0
    %1252 = vmatprep.subr.mxu0 0.0
    %1253 = vmatpush2.msra.mxu0 0.0
    %1254 = vmatprep.subr.mxu0 0.0
    %1255 = vmatpush2.msra.mxu0 0.0
    %1256 = vmatprep.subr.mxu0 0.0
    %1257 = vmatpush2.msra.mxu0 0.0
    %1258 = vmatprep.subr.mxu0 0.0
    %1259 = vmatpush2.msra.mxu0 0.0
    %1260 = vmatprep.subr.mxu0 0.0
    %1261 = vmatpush2.msra.mxu0 0.0
    %1262 = vmatprep.subr.mxu0 0.0
    %1263 = vmatpush2.msra.mxu0 0.0
    %1264 = vmatprep.subr.mxu0 0.0
    %1265 = vmatpush2.msra.mxu0 0.0
    %1266 = vmatprep.mubr.f32.mxu0 0.0
    %1267 = vmatmul.mubr.f32.gmra.mxu0 %v1200
    %v1268 = vpop.f32.mrf.mxu0
    %v1269 = vadd.f32 0.0, %v1268
    %v1270 = vpop.f32.mrf.mxu0
    %v1271 = vadd.f32 0.0, %v1270
    %1272 = vdwg.mxu0
    %1273 = vmatprep.subr.mxu0 %v754
    %1274 = vmatpush1.msra.mxu0 %v753
    %1275 = vmatprep.subr.mxu0 %v750
    %1276 = vmatpush1.msra.mxu0 %v749
    %1277 = vmatprep.subr.mxu0 %v746
    %1278 = vmatpush1.msra.mxu0 %v745
    %1279 = vmatprep.subr.mxu0 %v742
    %1280 = vmatpush1.msra.mxu0 %v741
    %1281 = vmatprep.subr.mxu0 %v738
    %1282 = vmatpush1.msra.mxu0 %v737
    %1283 = vmatprep.subr.mxu0 %v734
    %1284 = vmatpush1.msra.mxu0 %v733
    %1285 = vmatprep.subr.mxu0 %v730
    %1286 = vmatpush1.msra.mxu0 %v729
    %1287 = vmatprep.subr.mxu0 %v726
    %1288 = vmatpush1.msra.mxu0 %v725
    %1289 = vmatprep.subr.mxu0 %v722
    %1290 = vmatpush1.msra.mxu0 %v721
    %1291 = vmatprep.subr.mxu0 %v718
    %1292 = vmatpush1.msra.mxu0 %v717
    %1293 = vmatprep.subr.mxu0 %v714
    %1294 = vmatpush1.msra.mxu0 %v713
    %1295 = vmatprep.subr.mxu0 %v710
    %1296 = vmatpush1.msra.mxu0 %v709
    %1297 = vmatprep.subr.mxu0 %v706
    %1298 = vmatpush1.msra.mxu0 %v705
    %1299 = vmatprep.subr.mxu0 %v702
    %1300 = vmatpush1.msra.mxu0 %v701
    %1301 = vmatprep.subr.mxu0 %v698
    %1302 = vmatpush1.msra.mxu0 %v697
    %1303 = vmatprep.subr.mxu0 %v694
    %1304 = vmatpush1.msra.mxu0 %v693
    %1305 = vmatprep.subr.mxu0 0.0
    %1306 = vmatpush2.msra.mxu0 0.0
    %1307 = vmatprep.subr.mxu0 0.0
    %1308 = vmatpush2.msra.mxu0 0.0
    %1309 = vmatprep.subr.mxu0 0.0
    %1310 = vmatpush2.msra.mxu0 0.0
    %1311 = vmatprep.subr.mxu0 0.0
    %1312 = vmatpush2.msra.mxu0 0.0
    %1313 = vmatprep.subr.mxu0 0.0
    %1314 = vmatpush2.msra.mxu0 0.0
    %1315 = vmatprep.subr.mxu0 0.0
    %1316 = vmatpush2.msra.mxu0 0.0
    %1317 = vmatprep.subr.mxu0 0.0
    %1318 = vmatpush2.msra.mxu0 0.0
    %1319 = vmatprep.subr.mxu0 0.0
    %1320 = vmatpush2.msra.mxu0 0.0
    %1321 = vmatprep.subr.mxu0 0.0
    %1322 = vmatpush2.msra.mxu0 0.0
    %1323 = vmatprep.subr.mxu0 0.0
    %1324 = vmatpush2.msra.mxu0 0.0
    %1325 = vmatprep.subr.mxu0 0.0
    %1326 = vmatpush2.msra.mxu0 0.0
    %1327 = vmatprep.subr.mxu0 0.0
    %1328 = vmatpush2.msra.mxu0 0.0
    %1329 = vmatprep.subr.mxu0 0.0
    %1330 = vmatpush2.msra.mxu0 0.0
    %1331 = vmatprep.subr.mxu0 0.0
    %1332 = vmatpush2.msra.mxu0 0.0
    %1333 = vmatprep.subr.mxu0 0.0
    %1334 = vmatpush2.msra.mxu0 0.0
    %1335 = vmatprep.subr.mxu0 0.0
    %1336 = vmatpush2.msra.mxu0 0.0
    %1337 = vmatprep.mubr.f32.mxu0 0.0
    %1338 = vmatmul.mubr.f32.gmra.mxu0 %v1200
    %v1339 = vpop.f32.mrf.mxu0
    %v1340 = vadd.f32 0.0, %v1339
    %v1341 = vpop.f32.mrf.mxu0
    %v1342 = vadd.f32 0.0, %v1341
    %1343 = vdwg.mxu0
    %v1344 = vadd.f32 %v1196, %v1269
    %v1345 = vadd.f32 %v1197, %v1271
    %v1346 = vadd.f32 %v1198, %v1340
    %v1347 = vadd.f32 %v1199, %v1342
    %v1348 = vxor.u32 %v1344, 2147483648
    %v1349 = vmul.f32 %v1348, 1.442695
    %v1350 = vpow.pop %v1349
    %v1351 = vadd.f32 %v1350, 1.0
    %v1352 = vrcp.pop %v1351
    %v1353 = vmul.f32 1.0, %v1352
    %v1354 = vxor.u32 %v1345, 2147483648
    %v1355 = vmul.f32 %v1354, 1.442695
    %v1356 = vpow.pop %v1355
    %v1357 = vadd.f32 %v1356, 1.0
    %v1358 = vrcp.pop %v1357
    %v1359 = vmul.f32 1.0, %v1358
    %v1360 = vtanh.pop %v1346
    %v1361 = vxor.u32 %v1347, 2147483648
    %v1362 = vmul.f32 %v1361, 1.442695
    %v1363 = vpow.pop %v1362
    %v1364 = vadd.f32 %v1363, 1.0
    %v1365 = vrcp.pop %v1364
    %v1366 = vmul.f32 1.0, %v1365
    %v1367 = vmul.f32 %v1359, %v1201
    %v1368 = vmul.f32 %v1353, %v1360
    %v1369 = vadd.f32 %v1367, %v1368
    %v1370 = vtanh.pop %v1369
    %v1371 = vmul.f32 %v1366, %v1370
    %s1372 = scalar_lea.vmem [#allocation3], 192
    %v1373 = vld [vmem:[%s1372] sm:$0xff]
    %v1374 = vld [vmem:[%s1372 + $0x8] sm:$0xff]
    %v1375 = vld [vmem:[%s1372 + $0x10] sm:$0xff]
    %v1376 = vld [vmem:[%s1372 + $0x18] sm:$0xff]
    %v1377 = vld [vmem:[#allocation6] sm:$0xff]
    %v1378 = vld [vmem:[#allocation7] sm:$0xff]
    %1379 = vmatprep.subr.mxu0 %v816
    %1380 = vmatpush1.msra.mxu0 %v815
    %1381 = vmatprep.subr.mxu0 %v812
    %1382 = vmatpush1.msra.mxu0 %v811
    %1383 = vmatprep.subr.mxu0 %v808
    %1384 = vmatpush1.msra.mxu0 %v807
    %1385 = vmatprep.subr.mxu0 %v804
    %1386 = vmatpush1.msra.mxu0 %v803
    %1387 = vmatprep.subr.mxu0 %v800
    %1388 = vmatpush1.msra.mxu0 %v799
    %1389 = vmatprep.subr.mxu0 %v796
    %1390 = vmatpush1.msra.mxu0 %v795
    %1391 = vmatprep.subr.mxu0 %v792
    %1392 = vmatpush1.msra.mxu0 %v791
    %1393 = vmatprep.subr.mxu0 %v788
    %1394 = vmatpush1.msra.mxu0 %v787
    %1395 = vmatprep.subr.mxu0 %v784
    %1396 = vmatpush1.msra.mxu0 %v783
    %1397 = vmatprep.subr.mxu0 %v780
    %1398 = vmatpush1.msra.mxu0 %v779
    %1399 = vmatprep.subr.mxu0 %v776
    %1400 = vmatpush1.msra.mxu0 %v775
    %1401 = vmatprep.subr.mxu0 %v772
    %1402 = vmatpush1.msra.mxu0 %v771
    %1403 = vmatprep.subr.mxu0 %v768
    %1404 = vmatpush1.msra.mxu0 %v767
    %1405 = vmatprep.subr.mxu0 %v764
    %1406 = vmatpush1.msra.mxu0 %v763
    %1407 = vmatprep.subr.mxu0 %v760
    %1408 = vmatpush1.msra.mxu0 %v759
    %1409 = vmatprep.subr.mxu0 %v756
    %1410 = vmatpush1.msra.mxu0 %v755
    %1411 = vmatprep.subr.mxu0 0.0
    %1412 = vmatpush2.msra.mxu0 0.0
    %1413 = vmatprep.subr.mxu0 0.0
    %1414 = vmatpush2.msra.mxu0 0.0
    %1415 = vmatprep.subr.mxu0 0.0
    %1416 = vmatpush2.msra.mxu0 0.0
    %1417 = vmatprep.subr.mxu0 0.0
    %1418 = vmatpush2.msra.mxu0 0.0
    %1419 = vmatprep.subr.mxu0 0.0
    %1420 = vmatpush2.msra.mxu0 0.0
    %1421 = vmatprep.subr.mxu0 0.0
    %1422 = vmatpush2.msra.mxu0 0.0
    %1423 = vmatprep.subr.mxu0 0.0
    %1424 = vmatpush2.msra.mxu0 0.0
    %1425 = vmatprep.subr.mxu0 0.0
    %1426 = vmatpush2.msra.mxu0 0.0
    %1427 = vmatprep.subr.mxu0 0.0
    %1428 = vmatpush2.msra.mxu0 0.0
    %1429 = vmatprep.subr.mxu0 0.0
    %1430 = vmatpush2.msra.mxu0 0.0
    %1431 = vmatprep.subr.mxu0 0.0
    %1432 = vmatpush2.msra.mxu0 0.0
    %1433 = vmatprep.subr.mxu0 0.0
    %1434 = vmatpush2.msra.mxu0 0.0
    %1435 = vmatprep.subr.mxu0 0.0
    %1436 = vmatpush2.msra.mxu0 0.0
    %1437 = vmatprep.subr.mxu0 0.0
    %1438 = vmatpush2.msra.mxu0 0.0
    %1439 = vmatprep.subr.mxu0 0.0
    %1440 = vmatpush2.msra.mxu0 0.0
    %1441 = vmatprep.subr.mxu0 0.0
    %1442 = vmatpush2.msra.mxu0 0.0
    %1443 = vmatprep.mubr.f32.mxu0 0.0
    %1444 = vmatmul.mubr.f32.gmra.mxu0 %v1377
    %v1445 = vpop.f32.mrf.mxu0
    %v1446 = vadd.f32 0.0, %v1445
    %v1447 = vpop.f32.mrf.mxu0
    %v1448 = vadd.f32 0.0, %v1447
    %1449 = vdwg.mxu0
    %1450 = vmatprep.subr.mxu0 %v818
    %1451 = vmatpush1.msra.mxu0 %v817
    %1452 = vmatprep.subr.mxu0 %v814
    %1453 = vmatpush1.msra.mxu0 %v813
    %1454 = vmatprep.subr.mxu0 %v810
    %1455 = vmatpush1.msra.mxu0 %v809
    %1456 = vmatprep.subr.mxu0 %v806
    %1457 = vmatpush1.msra.mxu0 %v805
    %1458 = vmatprep.subr.mxu0 %v802
    %1459 = vmatpush1.msra.mxu0 %v801
    %1460 = vmatprep.subr.mxu0 %v798
    %1461 = vmatpush1.msra.mxu0 %v797
    %1462 = vmatprep.subr.mxu0 %v794
    %1463 = vmatpush1.msra.mxu0 %v793
    %1464 = vmatprep.subr.mxu0 %v790
    %1465 = vmatpush1.msra.mxu0 %v789
    %1466 = vmatprep.subr.mxu0 %v786
    %1467 = vmatpush1.msra.mxu0 %v785
    %1468 = vmatprep.subr.mxu0 %v782
    %1469 = vmatpush1.msra.mxu0 %v781
    %1470 = vmatprep.subr.mxu0 %v778
    %1471 = vmatpush1.msra.mxu0 %v777
    %1472 = vmatprep.subr.mxu0 %v774
    %1473 = vmatpush1.msra.mxu0 %v773
    %1474 = vmatprep.subr.mxu0 %v770
    %1475 = vmatpush1.msra.mxu0 %v769
    %1476 = vmatprep.subr.mxu0 %v766
    %1477 = vmatpush1.msra.mxu0 %v765
    %1478 = vmatprep.subr.mxu0 %v762
    %1479 = vmatpush1.msra.mxu0 %v761
    %1480 = vmatprep.subr.mxu0 %v758
    %1481 = vmatpush1.msra.mxu0 %v757
    %1482 = vmatprep.subr.mxu0 0.0
    %1483 = vmatpush2.msra.mxu0 0.0
    %1484 = vmatprep.subr.mxu0 0.0
    %1485 = vmatpush2.msra.mxu0 0.0
    %1486 = vmatprep.subr.mxu0 0.0
    %1487 = vmatpush2.msra.mxu0 0.0
    %1488 = vmatprep.subr.mxu0 0.0
    %1489 = vmatpush2.msra.mxu0 0.0
    %1490 = vmatprep.subr.mxu0 0.0
    %1491 = vmatpush2.msra.mxu0 0.0
    %1492 = vmatprep.subr.mxu0 0.0
    %1493 = vmatpush2.msra.mxu0 0.0
    %1494 = vmatprep.subr.mxu0 0.0
    %1495 = vmatpush2.msra.mxu0 0.0
    %1496 = vmatprep.subr.mxu0 0.0
    %1497 = vmatpush2.msra.mxu0 0.0
    %1498 = vmatprep.subr.mxu0 0.0
    %1499 = vmatpush2.msra.mxu0 0.0
    %1500 = vmatprep.subr.mxu0 0.0
    %1501 = vmatpush2.msra.mxu0 0.0
    %1502 = vmatprep.subr.mxu0 0.0
    %1503 = vmatpush2.msra.mxu0 0.0
    %1504 = vmatprep.subr.mxu0 0.0
    %1505 = vmatpush2.msra.mxu0 0.0
    %1506 = vmatprep.subr.mxu0 0.0
    %1507 = vmatpush2.msra.mxu0 0.0
    %1508 = vmatprep.subr.mxu0 0.0
    %1509 = vmatpush2.msra.mxu0 0.0
    %1510 = vmatprep.subr.mxu0 0.0
    %1511 = vmatpush2.msra.mxu0 0.0
    %1512 = vmatprep.subr.mxu0 0.0
    %1513 = vmatpush2.msra.mxu0 0.0
    %1514 = vmatprep.mubr.f32.mxu0 0.0
    %1515 = vmatmul.mubr.f32.gmra.mxu0 %v1377
    %v1516 = vpop.f32.mrf.mxu0
    %v1517 = vadd.f32 0.0, %v1516
    %v1518 = vpop.f32.mrf.mxu0
    %v1519 = vadd.f32 0.0, %v1518
    %1520 = vdwg.mxu0
    %v1521 = vadd.f32 %v1373, %v1446
    %v1522 = vadd.f32 %v1374, %v1448
    %v1523 = vadd.f32 %v1375, %v1517
    %v1524 = vadd.f32 %v1376, %v1519
    %v1525 = vxor.u32 %v1521, 2147483648
    %v1526 = vmul.f32 %v1525, 1.442695
    %v1527 = vpow.pop %v1526
    %v1528 = vadd.f32 %v1527, 1.0
    %v1529 = vrcp.pop %v1528
    %v1530 = vmul.f32 1.0, %v1529
    %v1531 = vxor.u32 %v1522, 2147483648
    %v1532 = vmul.f32 %v1531, 1.442695
    %v1533 = vpow.pop %v1532
    %v1534 = vadd.f32 %v1533, 1.0
    %v1535 = vrcp.pop %v1534
    %v1536 = vmul.f32 1.0, %v1535
    %v1537 = vtanh.pop %v1523
    %v1538 = vxor.u32 %v1524, 2147483648
    %v1539 = vmul.f32 %v1538, 1.442695
    %v1540 = vpow.pop %v1539
    %v1541 = vadd.f32 %v1540, 1.0
    %v1542 = vrcp.pop %v1541
    %v1543 = vmul.f32 1.0, %v1542
    %v1544 = vmul.f32 %v1536, %v1378
    %v1545 = vmul.f32 %v1530, %v1537
    %v1546 = vadd.f32 %v1544, %v1545
    %v1547 = vtanh.pop %v1546
    %v1548 = vmul.f32 %v1543, %v1547
    %vm1549 = vcmp.gt.s32.totalorder %v690, 1
    %vm1550 = vcmp.gt.s32.totalorder %v690, 6
    %v1551 = vsel %vm1549, 1, 0
    %1552 = vset.pattern.permute.xlu0 0
    %1553 = vperm.xlu0 %1552, %v1551
    %v1554 = vpop.permute.xlu0 %1553
    %vm1555 = vcmp.eq.s32.totalorder %v1554, 1
    %v1556 = vsel %vm1555, %v1371, %v1200
    %1557 = vst [vmem:[#allocation4] sm:$0xff] %v1556
    %v1558 = vld [vmem:[#allocation5] sm:$0xff]
    %v1559 = vsel %vm1555, %v1369, %v1558
    %1560 = vst [vmem:[#allocation5] sm:$0xff] %v1559
    %v1561 = vld [vmem:[#allocation6] sm:$0xff]
    %v1562 = vsel %vm1550, 1, 0
    %1563 = vset.pattern.permute.xlu0 0
    %1564 = vperm.xlu0 %1563, %v1562
    %v1565 = vpop.permute.xlu0 %1564
    %vm1566 = vcmp.eq.s32.totalorder %v1565, 1
    %v1567 = vsel %vm1566, %v1548, %v1561
    %1568 = vst [vmem:[#allocation6] sm:$0xff] %v1567
    %v1569 = vld [vmem:[#allocation7] sm:$0xff]
    %v1570 = vsel %vm1566, %v1546, %v1569
    %1571 = vst [vmem:[#allocation7] sm:$0xff] %v1570
    %s1572 = scalar_lea.vmem [#allocation2], 64
    %v1573 = vld [vmem:[%s1572] sm:$0xff]
    %v1574 = vld [vmem:[%s1572 + $0x8] sm:$0xff]
    %v1575 = vld [vmem:[%s1572 + $0x10] sm:$0xff]
    %v1576 = vld [vmem:[%s1572 + $0x18] sm:$0xff]
    %v1577 = vld [vmem:[#allocation4] sm:$0xff]
    %v1578 = vld [vmem:[#allocation5] sm:$0xff]
    %1579 = vmatprep.subr.mxu0 %v752
    %1580 = vmatpush1.msra.mxu0 %v751
    %1581 = vmatprep.subr.mxu0 %v748
    %1582 = vmatpush1.msra.mxu0 %v747
    %1583 = vmatprep.subr.mxu0 %v744
    %1584 = vmatpush1.msra.mxu0 %v743
    %1585 = vmatprep.subr.mxu0 %v740
    %1586 = vmatpush1.msra.mxu0 %v739
    %1587 = vmatprep.subr.mxu0 %v736
    %1588 = vmatpush1.msra.mxu0 %v735
    %1589 = vmatprep.subr.mxu0 %v732
    %1590 = vmatpush1.msra.mxu0 %v731
    %1591 = vmatprep.subr.mxu0 %v728
    %1592 = vmatpush1.msra.mxu0 %v727
    %1593 = vmatprep.subr.mxu0 %v724
    %1594 = vmatpush1.msra.mxu0 %v723
    %1595 = vmatprep.subr.mxu0 %v720
    %1596 = vmatpush1.msra.mxu0 %v719
    %1597 = vmatprep.subr.mxu0 %v716
    %1598 = vmatpush1.msra.mxu0 %v715
    %1599 = vmatprep.subr.mxu0 %v712
    %1600 = vmatpush1.msra.mxu0 %v711
    %1601 = vmatprep.subr.mxu0 %v708
    %1602 = vmatpush1.msra.mxu0 %v707
    %1603 = vmatprep.subr.mxu0 %v704
    %1604 = vmatpush1.msra.mxu0 %v703
    %1605 = vmatprep.subr.mxu0 %v700
    %1606 = vmatpush1.msra.mxu0 %v699
    %1607 = vmatprep.subr.mxu0 %v696
    %1608 = vmatpush1.msra.mxu0 %v695
    %1609 = vmatprep.subr.mxu0 %v692
    %1610 = vmatpush1.msra.mxu0 %v691
    %1611 = vmatprep.subr.mxu0 0.0
    %1612 = vmatpush2.msra.mxu0 0.0
    %1613 = vmatprep.subr.mxu0 0.0
    %1614 = vmatpush2.msra.mxu0 0.0
    %1615 = vmatprep.subr.mxu0 0.0
    %1616 = vmatpush2.msra.mxu0 0.0
    %1617 = vmatprep.subr.mxu0 0.0
    %1618 = vmatpush2.msra.mxu0 0.0
    %1619 = vmatprep.subr.mxu0 0.0
    %1620 = vmatpush2.msra.mxu0 0.0
    %1621 = vmatprep.subr.mxu0 0.0
    %1622 = vmatpush2.msra.mxu0 0.0
    %1623 = vmatprep.subr.mxu0 0.0
    %1624 = vmatpush2.msra.mxu0 0.0
    %1625 = vmatprep.subr.mxu0 0.0
    %1626 = vmatpush2.msra.mxu0 0.0
    %1627 = vmatprep.subr.mxu0 0.0
    %1628 = vmatpush2.msra.mxu0 0.0
    %1629 = vmatprep.subr.mxu0 0.0
    %1630 = vmatpush2.msra.mxu0 0.0
    %1631 = vmatprep.subr.mxu0 0.0
    %1632 = vmatpush2.msra.mxu0 0.0
    %1633 = vmatprep.subr.mxu0 0.0
    %1634 = vmatpush2.msra.mxu0 0.0
    %1635 = vmatprep.subr.mxu0 0.0
    %1636 = vmatpush2.msra.mxu0 0.0
    %1637 = vmatprep.subr.mxu0 0.0
    %1638 = vmatpush2.msra.mxu0 0.0
    %1639 = vmatprep.subr.mxu0 0.0
    %1640 = vmatpush2.msra.mxu0 0.0
    %1641 = vmatprep.subr.mxu0 0.0
    %1642 = vmatpush2.msra.mxu0 0.0
    %1643 = vmatprep.mubr.f32.mxu0 0.0
    %1644 = vmatmul.mubr.f32.gmra.mxu0 %v1577
    %v1645 = vpop.f32.mrf.mxu0
    %v1646 = vadd.f32 0.0, %v1645
    %v1647 = vpop.f32.mrf.mxu0
    %v1648 = vadd.f32 0.0, %v1647
    %1649 = vdwg.mxu0
    %1650 = vmatprep.subr.mxu0 %v754
    %1651 = vmatpush1.msra.mxu0 %v753
    %1652 = vmatprep.subr.mxu0 %v750
    %1653 = vmatpush1.msra.mxu0 %v749
    %1654 = vmatprep.subr.mxu0 %v746
    %1655 = vmatpush1.msra.mxu0 %v745
    %1656 = vmatprep.subr.mxu0 %v742
    %1657 = vmatpush1.msra.mxu0 %v741
    %1658 = vmatprep.subr.mxu0 %v738
    %1659 = vmatpush1.msra.mxu0 %v737
    %1660 = vmatprep.subr.mxu0 %v734
    %1661 = vmatpush1.msra.mxu0 %v733
    %1662 = vmatprep.subr.mxu0 %v730
    %1663 = vmatpush1.msra.mxu0 %v729
    %1664 = vmatprep.subr.mxu0 %v726
    %1665 = vmatpush1.msra.mxu0 %v725
    %1666 = vmatprep.subr.mxu0 %v722
    %1667 = vmatpush1.msra.mxu0 %v721
    %1668 = vmatprep.subr.mxu0 %v718
    %1669 = vmatpush1.msra.mxu0 %v717
    %1670 = vmatprep.subr.mxu0 %v714
    %1671 = vmatpush1.msra.mxu0 %v713
    %1672 = vmatprep.subr.mxu0 %v710
    %1673 = vmatpush1.msra.mxu0 %v709
    %1674 = vmatprep.subr.mxu0 %v706
    %1675 = vmatpush1.msra.mxu0 %v705
    %1676 = vmatprep.subr.mxu0 %v702
    %1677 = vmatpush1.msra.mxu0 %v701
    %1678 = vmatprep.subr.mxu0 %v698
    %1679 = vmatpush1.msra.mxu0 %v697
    %1680 = vmatprep.subr.mxu0 %v694
    %1681 = vmatpush1.msra.mxu0 %v693
    %1682 = vmatprep.subr.mxu0 0.0
    %1683 = vmatpush2.msra.mxu0 0.0
    %1684 = vmatprep.subr.mxu0 0.0
    %1685 = vmatpush2.msra.mxu0 0.0
    %1686 = vmatprep.subr.mxu0 0.0
    %1687 = vmatpush2.msra.mxu0 0.0
    %1688 = vmatprep.subr.mxu0 0.0
    %1689 = vmatpush2.msra.mxu0 0.0
    %1690 = vmatprep.subr.mxu0 0.0
    %1691 = vmatpush2.msra.mxu0 0.0
    %1692 = vmatprep.subr.mxu0 0.0
    %1693 = vmatpush2.msra.mxu0 0.0
    %1694 = vmatprep.subr.mxu0 0.0
    %1695 = vmatpush2.msra.mxu0 0.0
    %1696 = vmatprep.subr.mxu0 0.0
    %1697 = vmatpush2.msra.mxu0 0.0
    %1698 = vmatprep.subr.mxu0 0.0
    %1699 = vmatpush2.msra.mxu0 0.0
    %1700 = vmatprep.subr.mxu0 0.0
    %1701 = vmatpush2.msra.mxu0 0.0
    %1702 = vmatprep.subr.mxu0 0.0
    %1703 = vmatpush2.msra.mxu0 0.0
    %1704 = vmatprep.subr.mxu0 0.0
    %1705 = vmatpush2.msra.mxu0 0.0
    %1706 = vmatprep.subr.mxu0 0.0
    %1707 = vmatpush2.msra.mxu0 0.0
    %1708 = vmatprep.subr.mxu0 0.0
    %1709 = vmatpush2.msra.mxu0 0.0
    %1710 = vmatprep.subr.mxu0 0.0
    %1711 = vmatpush2.msra.mxu0 0.0
    %1712 = vmatprep.subr.mxu0 0.0
    %1713 = vmatpush2.msra.mxu0 0.0
    %1714 = vmatprep.mubr.f32.mxu0 0.0
    %1715 = vmatmul.mubr.f32.gmra.mxu0 %v1577
    %v1716 = vpop.f32.mrf.mxu0
    %v1717 = vadd.f32 0.0, %v1716
    %v1718 = vpop.f32.mrf.mxu0
    %v1719 = vadd.f32 0.0, %v1718
    %1720 = vdwg.mxu0
    %v1721 = vadd.f32 %v1573, %v1646
    %v1722 = vadd.f32 %v1574, %v1648
    %v1723 = vadd.f32 %v1575, %v1717
    %v1724 = vadd.f32 %v1576, %v1719
    %v1725 = vxor.u32 %v1721, 2147483648
    %v1726 = vmul.f32 %v1725, 1.442695
    %v1727 = vpow.pop %v1726
    %v1728 = vadd.f32 %v1727, 1.0
    %v1729 = vrcp.pop %v1728
    %v1730 = vmul.f32 1.0, %v1729
    %v1731 = vxor.u32 %v1722, 2147483648
    %v1732 = vmul.f32 %v1731, 1.442695
    %v1733 = vpow.pop %v1732
    %v1734 = vadd.f32 %v1733, 1.0
    %v1735 = vrcp.pop %v1734
    %v1736 = vmul.f32 1.0, %v1735
    %v1737 = vtanh.pop %v1723
    %v1738 = vxor.u32 %v1724, 2147483648
    %v1739 = vmul.f32 %v1738, 1.442695
    %v1740 = vpow.pop %v1739
    %v1741 = vadd.f32 %v1740, 1.0
    %v1742 = vrcp.pop %v1741
    %v1743 = vmul.f32 1.0, %v1742
    %v1744 = vmul.f32 %v1736, %v1578
    %v1745 = vmul.f32 %v1730, %v1737
    %v1746 = vadd.f32 %v1744, %v1745
    %v1747 = vtanh.pop %v1746
    %v1748 = vmul.f32 %v1743, %v1747
    %s1749 = scalar_lea.vmem [#allocation3], 160
    %v1750 = vld [vmem:[%s1749] sm:$0xff]
    %v1751 = vld [vmem:[%s1749 + $0x8] sm:$0xff]
    %v1752 = vld [vmem:[%s1749 + $0x10] sm:$0xff]
    %v1753 = vld [vmem:[%s1749 + $0x18] sm:$0xff]
    %v1754 = vld [vmem:[#allocation6] sm:$0xff]
    %v1755 = vld [vmem:[#allocation7] sm:$0xff]
    %1756 = vmatprep.subr.mxu0 %v816
    %1757 = vmatpush1.msra.mxu0 %v815
    %1758 = vmatprep.subr.mxu0 %v812
    %1759 = vmatpush1.msra.mxu0 %v811
    %1760 = vmatprep.subr.mxu0 %v808
    %1761 = vmatpush1.msra.mxu0 %v807
    %1762 = vmatprep.subr.mxu0 %v804
    %1763 = vmatpush1.msra.mxu0 %v803
    %1764 = vmatprep.subr.mxu0 %v800
    %1765 = vmatpush1.msra.mxu0 %v799
    %1766 = vmatprep.subr.mxu0 %v796
    %1767 = vmatpush1.msra.mxu0 %v795
    %1768 = vmatprep.subr.mxu0 %v792
    %1769 = vmatpush1.msra.mxu0 %v791
    %1770 = vmatprep.subr.mxu0 %v788
    %1771 = vmatpush1.msra.mxu0 %v787
    %1772 = vmatprep.subr.mxu0 %v784
    %1773 = vmatpush1.msra.mxu0 %v783
    %1774 = vmatprep.subr.mxu0 %v780
    %1775 = vmatpush1.msra.mxu0 %v779
    %1776 = vmatprep.subr.mxu0 %v776
    %1777 = vmatpush1.msra.mxu0 %v775
    %1778 = vmatprep.subr.mxu0 %v772
    %1779 = vmatpush1.msra.mxu0 %v771
    %1780 = vmatprep.subr.mxu0 %v768
    %1781 = vmatpush1.msra.mxu0 %v767
    %1782 = vmatprep.subr.mxu0 %v764
    %1783 = vmatpush1.msra.mxu0 %v763
    %1784 = vmatprep.subr.mxu0 %v760
    %1785 = vmatpush1.msra.mxu0 %v759
    %1786 = vmatprep.subr.mxu0 %v756
    %1787 = vmatpush1.msra.mxu0 %v755
    %1788 = vmatprep.subr.mxu0 0.0
    %1789 = vmatpush2.msra.mxu0 0.0
    %1790 = vmatprep.subr.mxu0 0.0
    %1791 = vmatpush2.msra.mxu0 0.0
    %1792 = vmatprep.subr.mxu0 0.0
    %1793 = vmatpush2.msra.mxu0 0.0
    %1794 = vmatprep.subr.mxu0 0.0
    %1795 = vmatpush2.msra.mxu0 0.0
    %1796 = vmatprep.subr.mxu0 0.0
    %1797 = vmatpush2.msra.mxu0 0.0
    %1798 = vmatprep.subr.mxu0 0.0
    %1799 = vmatpush2.msra.mxu0 0.0
    %1800 = vmatprep.subr.mxu0 0.0
    %1801 = vmatpush2.msra.mxu0 0.0
    %1802 = vmatprep.subr.mxu0 0.0
    %1803 = vmatpush2.msra.mxu0 0.0
    %1804 = vmatprep.subr.mxu0 0.0
    %1805 = vmatpush2.msra.mxu0 0.0
    %1806 = vmatprep.subr.mxu0 0.0
    %1807 = vmatpush2.msra.mxu0 0.0
    %1808 = vmatprep.subr.mxu0 0.0
    %1809 = vmatpush2.msra.mxu0 0.0
    %1810 = vmatprep.subr.mxu0 0.0
    %1811 = vmatpush2.msra.mxu0 0.0
    %1812 = vmatprep.subr.mxu0 0.0
    %1813 = vmatpush2.msra.mxu0 0.0
    %1814 = vmatprep.subr.mxu0 0.0
    %1815 = vmatpush2.msra.mxu0 0.0
    %1816 = vmatprep.subr.mxu0 0.0
    %1817 = vmatpush2.msra.mxu0 0.0
    %1818 = vmatprep.subr.mxu0 0.0
    %1819 = vmatpush2.msra.mxu0 0.0
    %1820 = vmatprep.mubr.f32.mxu0 0.0
    %1821 = vmatmul.mubr.f32.gmra.mxu0 %v1754
    %v1822 = vpop.f32.mrf.mxu0
    %v1823 = vadd.f32 0.0, %v1822
    %v1824 = vpop.f32.mrf.mxu0
    %v1825 = vadd.f32 0.0, %v1824
    %1826 = vdwg.mxu0
    %1827 = vmatprep.subr.mxu0 %v818
    %1828 = vmatpush1.msra.mxu0 %v817
    %1829 = vmatprep.subr.mxu0 %v814
    %1830 = vmatpush1.msra.mxu0 %v813
    %1831 = vmatprep.subr.mxu0 %v810
    %1832 = vmatpush1.msra.mxu0 %v809
    %1833 = vmatprep.subr.mxu0 %v806
    %1834 = vmatpush1.msra.mxu0 %v805
    %1835 = vmatprep.subr.mxu0 %v802
    %1836 = vmatpush1.msra.mxu0 %v801
    %1837 = vmatprep.subr.mxu0 %v798
    %1838 = vmatpush1.msra.mxu0 %v797
    %1839 = vmatprep.subr.mxu0 %v794
    %1840 = vmatpush1.msra.mxu0 %v793
    %1841 = vmatprep.subr.mxu0 %v790
    %1842 = vmatpush1.msra.mxu0 %v789
    %1843 = vmatprep.subr.mxu0 %v786
    %1844 = vmatpush1.msra.mxu0 %v785
    %1845 = vmatprep.subr.mxu0 %v782
    %1846 = vmatpush1.msra.mxu0 %v781
    %1847 = vmatprep.subr.mxu0 %v778
    %1848 = vmatpush1.msra.mxu0 %v777
    %1849 = vmatprep.subr.mxu0 %v774
    %1850 = vmatpush1.msra.mxu0 %v773
    %1851 = vmatprep.subr.mxu0 %v770
    %1852 = vmatpush1.msra.mxu0 %v769
    %1853 = vmatprep.subr.mxu0 %v766
    %1854 = vmatpush1.msra.mxu0 %v765
    %1855 = vmatprep.subr.mxu0 %v762
    %1856 = vmatpush1.msra.mxu0 %v761
    %1857 = vmatprep.subr.mxu0 %v758
    %1858 = vmatpush1.msra.mxu0 %v757
    %1859 = vmatprep.subr.mxu0 0.0
    %1860 = vmatpush2.msra.mxu0 0.0
    %1861 = vmatprep.subr.mxu0 0.0
    %1862 = vmatpush2.msra.mxu0 0.0
    %1863 = vmatprep.subr.mxu0 0.0
    %1864 = vmatpush2.msra.mxu0 0.0
    %1865 = vmatprep.subr.mxu0 0.0
    %1866 = vmatpush2.msra.mxu0 0.0
    %1867 = vmatprep.subr.mxu0 0.0
    %1868 = vmatpush2.msra.mxu0 0.0
    %1869 = vmatprep.subr.mxu0 0.0
    %1870 = vmatpush2.msra.mxu0 0.0
    %1871 = vmatprep.subr.mxu0 0.0
    %1872 = vmatpush2.msra.mxu0 0.0
    %1873 = vmatprep.subr.mxu0 0.0
    %1874 = vmatpush2.msra.mxu0 0.0
    %1875 = vmatprep.subr.mxu0 0.0
    %1876 = vmatpush2.msra.mxu0 0.0
    %1877 = vmatprep.subr.mxu0 0.0
    %1878 = vmatpush2.msra.mxu0 0.0
    %1879 = vmatprep.subr.mxu0 0.0
    %1880 = vmatpush2.msra.mxu0 0.0
    %1881 = vmatprep.subr.mxu0 0.0
    %1882 = vmatpush2.msra.mxu0 0.0
    %1883 = vmatprep.subr.mxu0 0.0
    %1884 = vmatpush2.msra.mxu0 0.0
    %1885 = vmatprep.subr.mxu0 0.0
    %1886 = vmatpush2.msra.mxu0 0.0
    %1887 = vmatprep.subr.mxu0 0.0
    %1888 = vmatpush2.msra.mxu0 0.0
    %1889 = vmatprep.subr.mxu0 0.0
    %1890 = vmatpush2.msra.mxu0 0.0
    %1891 = vmatprep.mubr.f32.mxu0 0.0
    %1892 = vmatmul.mubr.f32.gmra.mxu0 %v1754
    %v1893 = vpop.f32.mrf.mxu0
    %v1894 = vadd.f32 0.0, %v1893
    %v1895 = vpop.f32.mrf.mxu0
    %v1896 = vadd.f32 0.0, %v1895
    %1897 = vdwg.mxu0
    %v1898 = vadd.f32 %v1750, %v1823
    %v1899 = vadd.f32 %v1751, %v1825
    %v1900 = vadd.f32 %v1752, %v1894
    %v1901 = vadd.f32 %v1753, %v1896
    %v1902 = vxor.u32 %v1898, 2147483648
    %v1903 = vmul.f32 %v1902, 1.442695
    %v1904 = vpow.pop %v1903
    %v1905 = vadd.f32 %v1904, 1.0
    %v1906 = vrcp.pop %v1905
    %v1907 = vmul.f32 1.0, %v1906
    %v1908 = vxor.u32 %v1899, 2147483648
    %v1909 = vmul.f32 %v1908, 1.442695
    %v1910 = vpow.pop %v1909
    %v1911 = vadd.f32 %v1910, 1.0
    %v1912 = vrcp.pop %v1911
    %v1913 = vmul.f32 1.0, %v1912
    %v1914 = vtanh.pop %v1900
    %v1915 = vxor.u32 %v1901, 2147483648
    %v1916 = vmul.f32 %v1915, 1.442695
    %v1917 = vpow.pop %v1916
    %v1918 = vadd.f32 %v1917, 1.0
    %v1919 = vrcp.pop %v1918
    %v1920 = vmul.f32 1.0, %v1919
    %v1921 = vmul.f32 %v1913, %v1755
    %v1922 = vmul.f32 %v1907, %v1914
    %v1923 = vadd.f32 %v1921, %v1922
    %v1924 = vtanh.pop %v1923
    %v1925 = vmul.f32 %v1920, %v1924
    %vm1926 = vcmp.gt.s32.totalorder %v690, 2
    %vm1927 = vcmp.gt.s32.totalorder %v690, 5
    %v1928 = vsel %vm1926, 1, 0
    %1929 = vset.pattern.permute.xlu0 0
    %1930 = vperm.xlu0 %1929, %v1928
    %v1931 = vpop.permute.xlu0 %1930
    %vm1932 = vcmp.eq.s32.totalorder %v1931, 1
    %v1933 = vsel %vm1932, %v1748, %v1577
    %1934 = vst [vmem:[#allocation4] sm:$0xff] %v1933
    %v1935 = vld [vmem:[#allocation5] sm:$0xff]
    %v1936 = vsel %vm1932, %v1746, %v1935
    %1937 = vst [vmem:[#allocation5] sm:$0xff] %v1936
    %v1938 = vld [vmem:[#allocation6] sm:$0xff]
    %v1939 = vsel %vm1927, 1, 0
    %1940 = vset.pattern.permute.xlu0 0
    %1941 = vperm.xlu0 %1940, %v1939
    %v1942 = vpop.permute.xlu0 %1941
    %vm1943 = vcmp.eq.s32.totalorder %v1942, 1
    %v1944 = vsel %vm1943, %v1925, %v1938
    %1945 = vst [vmem:[#allocation6] sm:$0xff] %v1944
    %v1946 = vld [vmem:[#allocation7] sm:$0xff]
    %v1947 = vsel %vm1943, %v1923, %v1946
    %1948 = vst [vmem:[#allocation7] sm:$0xff] %v1947
    %s1949 = scalar_lea.vmem [#allocation2], 96
    %v1950 = vld [vmem:[%s1949] sm:$0xff]
    %v1951 = vld [vmem:[%s1949 + $0x8] sm:$0xff]
    %v1952 = vld [vmem:[%s1949 + $0x10] sm:$0xff]
    %v1953 = vld [vmem:[%s1949 + $0x18] sm:$0xff]
    %v1954 = vld [vmem:[#allocation4] sm:$0xff]
    %v1955 = vld [vmem:[#allocation5] sm:$0xff]
    %1956 = vmatprep.subr.mxu0 %v752
    %1957 = vmatpush1.msra.mxu0 %v751
    %1958 = vmatprep.subr.mxu0 %v748
    %1959 = vmatpush1.msra.mxu0 %v747
    %1960 = vmatprep.subr.mxu0 %v744
    %1961 = vmatpush1.msra.mxu0 %v743
    %1962 = vmatprep.subr.mxu0 %v740
    %1963 = vmatpush1.msra.mxu0 %v739
    %1964 = vmatprep.subr.mxu0 %v736
    %1965 = vmatpush1.msra.mxu0 %v735
    %1966 = vmatprep.subr.mxu0 %v732
    %1967 = vmatpush1.msra.mxu0 %v731
    %1968 = vmatprep.subr.mxu0 %v728
    %1969 = vmatpush1.msra.mxu0 %v727
    %1970 = vmatprep.subr.mxu0 %v724
    %1971 = vmatpush1.msra.mxu0 %v723
    %1972 = vmatprep.subr.mxu0 %v720
    %1973 = vmatpush1.msra.mxu0 %v719
    %1974 = vmatprep.subr.mxu0 %v716
    %1975 = vmatpush1.msra.mxu0 %v715
    %1976 = vmatprep.subr.mxu0 %v712
    %1977 = vmatpush1.msra.mxu0 %v711
    %1978 = vmatprep.subr.mxu0 %v708
    %1979 = vmatpush1.msra.mxu0 %v707
    %1980 = vmatprep.subr.mxu0 %v704
    %1981 = vmatpush1.msra.mxu0 %v703
    %1982 = vmatprep.subr.mxu0 %v700
    %1983 = vmatpush1.msra.mxu0 %v699
    %1984 = vmatprep.subr.mxu0 %v696
    %1985 = vmatpush1.msra.mxu0 %v695
    %1986 = vmatprep.subr.mxu0 %v692
    %1987 = vmatpush1.msra.mxu0 %v691
    %1988 = vmatprep.subr.mxu0 0.0
    %1989 = vmatpush2.msra.mxu0 0.0
    %1990 = vmatprep.subr.mxu0 0.0
    %1991 = vmatpush2.msra.mxu0 0.0
    %1992 = vmatprep.subr.mxu0 0.0
    %1993 = vmatpush2.msra.mxu0 0.0
    %1994 = vmatprep.subr.mxu0 0.0
    %1995 = vmatpush2.msra.mxu0 0.0
    %1996 = vmatprep.subr.mxu0 0.0
    %1997 = vmatpush2.msra.mxu0 0.0
    %1998 = vmatprep.subr.mxu0 0.0
    %1999 = vmatpush2.msra.mxu0 0.0
    %2000 = vmatprep.subr.mxu0 0.0
    %2001 = vmatpush2.msra.mxu0 0.0
    %2002 = vmatprep.subr.mxu0 0.0
    %2003 = vmatpush2.msra.mxu0 0.0
    %2004 = vmatprep.subr.mxu0 0.0
    %2005 = vmatpush2.msra.mxu0 0.0
    %2006 = vmatprep.subr.mxu0 0.0
    %2007 = vmatpush2.msra.mxu0 0.0
    %2008 = vmatprep.subr.mxu0 0.0
    %2009 = vmatpush2.msra.mxu0 0.0
    %2010 = vmatprep.subr.mxu0 0.0
    %2011 = vmatpush2.msra.mxu0 0.0
    %2012 = vmatprep.subr.mxu0 0.0
    %2013 = vmatpush2.msra.mxu0 0.0
    %2014 = vmatprep.subr.mxu0 0.0
    %2015 = vmatpush2.msra.mxu0 0.0
    %2016 = vmatprep.subr.mxu0 0.0
    %2017 = vmatpush2.msra.mxu0 0.0
    %2018 = vmatprep.subr.mxu0 0.0
    %2019 = vmatpush2.msra.mxu0 0.0
    %2020 = vmatprep.mubr.f32.mxu0 0.0
    %2021 = vmatmul.mubr.f32.gmra.mxu0 %v1954
    %v2022 = vpop.f32.mrf.mxu0
    %v2023 = vadd.f32 0.0, %v2022
    %v2024 = vpop.f32.mrf.mxu0
    %v2025 = vadd.f32 0.0, %v2024
    %2026 = vdwg.mxu0
    %2027 = vmatprep.subr.mxu0 %v754
    %2028 = vmatpush1.msra.mxu0 %v753
    %2029 = vmatprep.subr.mxu0 %v750
    %2030 = vmatpush1.msra.mxu0 %v749
    %2031 = vmatprep.subr.mxu0 %v746
    %2032 = vmatpush1.msra.mxu0 %v745
    %2033 = vmatprep.subr.mxu0 %v742
    %2034 = vmatpush1.msra.mxu0 %v741
    %2035 = vmatprep.subr.mxu0 %v738
    %2036 = vmatpush1.msra.mxu0 %v737
    %2037 = vmatprep.subr.mxu0 %v734
    %2038 = vmatpush1.msra.mxu0 %v733
    %2039 = vmatprep.subr.mxu0 %v730
    %2040 = vmatpush1.msra.mxu0 %v729
    %2041 = vmatprep.subr.mxu0 %v726
    %2042 = vmatpush1.msra.mxu0 %v725
    %2043 = vmatprep.subr.mxu0 %v722
    %2044 = vmatpush1.msra.mxu0 %v721
    %2045 = vmatprep.subr.mxu0 %v718
    %2046 = vmatpush1.msra.mxu0 %v717
    %2047 = vmatprep.subr.mxu0 %v714
    %2048 = vmatpush1.msra.mxu0 %v713
    %2049 = vmatprep.subr.mxu0 %v710
    %2050 = vmatpush1.msra.mxu0 %v709
    %2051 = vmatprep.subr.mxu0 %v706
    %2052 = vmatpush1.msra.mxu0 %v705
    %2053 = vmatprep.subr.mxu0 %v702
    %2054 = vmatpush1.msra.mxu0 %v701
    %2055 = vmatprep.subr.mxu0 %v698
    %2056 = vmatpush1.msra.mxu0 %v697
    %2057 = vmatprep.subr.mxu0 %v694
    %2058 = vmatpush1.msra.mxu0 %v693
    %2059 = vmatprep.subr.mxu0 0.0
    %2060 = vmatpush2.msra.mxu0 0.0
    %2061 = vmatprep.subr.mxu0 0.0
    %2062 = vmatpush2.msra.mxu0 0.0
    %2063 = vmatprep.subr.mxu0 0.0
    %2064 = vmatpush2.msra.mxu0 0.0
    %2065 = vmatprep.subr.mxu0 0.0
    %2066 = vmatpush2.msra.mxu0 0.0
    %2067 = vmatprep.subr.mxu0 0.0
    %2068 = vmatpush2.msra.mxu0 0.0
    %2069 = vmatprep.subr.mxu0 0.0
    %2070 = vmatpush2.msra.mxu0 0.0
    %2071 = vmatprep.subr.mxu0 0.0
    %2072 = vmatpush2.msra.mxu0 0.0
    %2073 = vmatprep.subr.mxu0 0.0
    %2074 = vmatpush2.msra.mxu0 0.0
    %2075 = vmatprep.subr.mxu0 0.0
    %2076 = vmatpush2.msra.mxu0 0.0
    %2077 = vmatprep.subr.mxu0 0.0
    %2078 = vmatpush2.msra.mxu0 0.0
    %2079 = vmatprep.subr.mxu0 0.0
    %2080 = vmatpush2.msra.mxu0 0.0
    %2081 = vmatprep.subr.mxu0 0.0
    %2082 = vmatpush2.msra.mxu0 0.0
    %2083 = vmatprep.subr.mxu0 0.0
    %2084 = vmatpush2.msra.mxu0 0.0
    %2085 = vmatprep.subr.mxu0 0.0
    %2086 = vmatpush2.msra.mxu0 0.0
    %2087 = vmatprep.subr.mxu0 0.0
    %2088 = vmatpush2.msra.mxu0 0.0
    %2089 = vmatprep.subr.mxu0 0.0
    %2090 = vmatpush2.msra.mxu0 0.0
    %2091 = vmatprep.mubr.f32.mxu0 0.0
    %2092 = vmatmul.mubr.f32.gmra.mxu0 %v1954
    %v2093 = vpop.f32.mrf.mxu0
    %v2094 = vadd.f32 0.0, %v2093
    %v2095 = vpop.f32.mrf.mxu0
    %v2096 = vadd.f32 0.0, %v2095
    %2097 = vdwg.mxu0
    %v2098 = vadd.f32 %v1950, %v2023
    %v2099 = vadd.f32 %v1951, %v2025
    %v2100 = vadd.f32 %v1952, %v2094
    %v2101 = vadd.f32 %v1953, %v2096
    %v2102 = vxor.u32 %v2098, 2147483648
    %v2103 = vmul.f32 %v2102, 1.442695
    %v2104 = vpow.pop %v2103
    %v2105 = vadd.f32 %v2104, 1.0
    %v2106 = vrcp.pop %v2105
    %v2107 = vmul.f32 1.0, %v2106
    %v2108 = vxor.u32 %v2099, 2147483648
    %v2109 = vmul.f32 %v2108, 1.442695
    %v2110 = vpow.pop %v2109
    %v2111 = vadd.f32 %v2110, 1.0
    %v2112 = vrcp.pop %v2111
    %v2113 = vmul.f32 1.0, %v2112
    %v2114 = vtanh.pop %v2100
    %v2115 = vxor.u32 %v2101, 2147483648
    %v2116 = vmul.f32 %v2115, 1.442695
    %v2117 = vpow.pop %v2116
    %v2118 = vadd.f32 %v2117, 1.0
    %v2119 = vrcp.pop %v2118
    %v2120 = vmul.f32 1.0, %v2119
    %v2121 = vmul.f32 %v2113, %v1955
    %v2122 = vmul.f32 %v2107, %v2114
    %v2123 = vadd.f32 %v2121, %v2122
    %v2124 = vtanh.pop %v2123
    %v2125 = vmul.f32 %v2120, %v2124
    %s2126 = scalar_lea.vmem [#allocation3], 128
    %v2127 = vld [vmem:[%s2126] sm:$0xff]
    %v2128 = vld [vmem:[%s2126 + $0x8] sm:$0xff]
    %v2129 = vld [vmem:[%s2126 + $0x10] sm:$0xff]
    %v2130 = vld [vmem:[%s2126 + $0x18] sm:$0xff]
    %v2131 = vld [vmem:[#allocation6] sm:$0xff]
    %v2132 = vld [vmem:[#allocation7] sm:$0xff]
    %2133 = vmatprep.subr.mxu0 %v816
    %2134 = vmatpush1.msra.mxu0 %v815
    %2135 = vmatprep.subr.mxu0 %v812
    %2136 = vmatpush1.msra.mxu0 %v811
    %2137 = vmatprep.subr.mxu0 %v808
    %2138 = vmatpush1.msra.mxu0 %v807
    %2139 = vmatprep.subr.mxu0 %v804
    %2140 = vmatpush1.msra.mxu0 %v803
    %2141 = vmatprep.subr.mxu0 %v800
    %2142 = vmatpush1.msra.mxu0 %v799
    %2143 = vmatprep.subr.mxu0 %v796
    %2144 = vmatpush1.msra.mxu0 %v795
    %2145 = vmatprep.subr.mxu0 %v792
    %2146 = vmatpush1.msra.mxu0 %v791
    %2147 = vmatprep.subr.mxu0 %v788
    %2148 = vmatpush1.msra.mxu0 %v787
    %2149 = vmatprep.subr.mxu0 %v784
    %2150 = vmatpush1.msra.mxu0 %v783
    %2151 = vmatprep.subr.mxu0 %v780
    %2152 = vmatpush1.msra.mxu0 %v779
    %2153 = vmatprep.subr.mxu0 %v776
    %2154 = vmatpush1.msra.mxu0 %v775
    %2155 = vmatprep.subr.mxu0 %v772
    %2156 = vmatpush1.msra.mxu0 %v771
    %2157 = vmatprep.subr.mxu0 %v768
    %2158 = vmatpush1.msra.mxu0 %v767
    %2159 = vmatprep.subr.mxu0 %v764
    %2160 = vmatpush1.msra.mxu0 %v763
    %2161 = vmatprep.subr.mxu0 %v760
    %2162 = vmatpush1.msra.mxu0 %v759
    %2163 = vmatprep.subr.mxu0 %v756
    %2164 = vmatpush1.msra.mxu0 %v755
    %2165 = vmatprep.subr.mxu0 0.0
    %2166 = vmatpush2.msra.mxu0 0.0
    %2167 = vmatprep.subr.mxu0 0.0
    %2168 = vmatpush2.msra.mxu0 0.0
    %2169 = vmatprep.subr.mxu0 0.0
    %2170 = vmatpush2.msra.mxu0 0.0
    %2171 = vmatprep.subr.mxu0 0.0
    %2172 = vmatpush2.msra.mxu0 0.0
    %2173 = vmatprep.subr.mxu0 0.0
    %2174 = vmatpush2.msra.mxu0 0.0
    %2175 = vmatprep.subr.mxu0 0.0
    %2176 = vmatpush2.msra.mxu0 0.0
    %2177 = vmatprep.subr.mxu0 0.0
    %2178 = vmatpush2.msra.mxu0 0.0
    %2179 = vmatprep.subr.mxu0 0.0
    %2180 = vmatpush2.msra.mxu0 0.0
    %2181 = vmatprep.subr.mxu0 0.0
    %2182 = vmatpush2.msra.mxu0 0.0
    %2183 = vmatprep.subr.mxu0 0.0
    %2184 = vmatpush2.msra.mxu0 0.0
    %2185 = vmatprep.subr.mxu0 0.0
    %2186 = vmatpush2.msra.mxu0 0.0
    %2187 = vmatprep.subr.mxu0 0.0
    %2188 = vmatpush2.msra.mxu0 0.0
    %2189 = vmatprep.subr.mxu0 0.0
    %2190 = vmatpush2.msra.mxu0 0.0
    %2191 = vmatprep.subr.mxu0 0.0
    %2192 = vmatpush2.msra.mxu0 0.0
    %2193 = vmatprep.subr.mxu0 0.0
    %2194 = vmatpush2.msra.mxu0 0.0
    %2195 = vmatprep.subr.mxu0 0.0
    %2196 = vmatpush2.msra.mxu0 0.0
    %2197 = vmatprep.mubr.f32.mxu0 0.0
    %2198 = vmatmul.mubr.f32.gmra.mxu0 %v2131
    %v2199 = vpop.f32.mrf.mxu0
    %v2200 = vadd.f32 0.0, %v2199
    %v2201 = vpop.f32.mrf.mxu0
    %v2202 = vadd.f32 0.0, %v2201
    %2203 = vdwg.mxu0
    %2204 = vmatprep.subr.mxu0 %v818
    %2205 = vmatpush1.msra.mxu0 %v817
    %2206 = vmatprep.subr.mxu0 %v814
    %2207 = vmatpush1.msra.mxu0 %v813
    %2208 = vmatprep.subr.mxu0 %v810
    %2209 = vmatpush1.msra.mxu0 %v809
    %2210 = vmatprep.subr.mxu0 %v806
    %2211 = vmatpush1.msra.mxu0 %v805
    %2212 = vmatprep.subr.mxu0 %v802
    %2213 = vmatpush1.msra.mxu0 %v801
    %2214 = vmatprep.subr.mxu0 %v798
    %2215 = vmatpush1.msra.mxu0 %v797
    %2216 = vmatprep.subr.mxu0 %v794
    %2217 = vmatpush1.msra.mxu0 %v793
    %2218 = vmatprep.subr.mxu0 %v790
    %2219 = vmatpush1.msra.mxu0 %v789
    %2220 = vmatprep.subr.mxu0 %v786
    %2221 = vmatpush1.msra.mxu0 %v785
    %2222 = vmatprep.subr.mxu0 %v782
    %2223 = vmatpush1.msra.mxu0 %v781
    %2224 = vmatprep.subr.mxu0 %v778
    %2225 = vmatpush1.msra.mxu0 %v777
    %2226 = vmatprep.subr.mxu0 %v774
    %2227 = vmatpush1.msra.mxu0 %v773
    %2228 = vmatprep.subr.mxu0 %v770
    %2229 = vmatpush1.msra.mxu0 %v769
    %2230 = vmatprep.subr.mxu0 %v766
    %2231 = vmatpush1.msra.mxu0 %v765
    %2232 = vmatprep.subr.mxu0 %v762
    %2233 = vmatpush1.msra.mxu0 %v761
    %2234 = vmatprep.subr.mxu0 %v758
    %2235 = vmatpush1.msra.mxu0 %v757
    %2236 = vmatprep.subr.mxu0 0.0
    %2237 = vmatpush2.msra.mxu0 0.0
    %2238 = vmatprep.subr.mxu0 0.0
    %2239 = vmatpush2.msra.mxu0 0.0
    %2240 = vmatprep.subr.mxu0 0.0
    %2241 = vmatpush2.msra.mxu0 0.0
    %2242 = vmatprep.subr.mxu0 0.0
    %2243 = vmatpush2.msra.mxu0 0.0
    %2244 = vmatprep.subr.mxu0 0.0
    %2245 = vmatpush2.msra.mxu0 0.0
    %2246 = vmatprep.subr.mxu0 0.0
    %2247 = vmatpush2.msra.mxu0 0.0
    %2248 = vmatprep.subr.mxu0 0.0
    %2249 = vmatpush2.msra.mxu0 0.0
    %2250 = vmatprep.subr.mxu0 0.0
    %2251 = vmatpush2.msra.mxu0 0.0
    %2252 = vmatprep.subr.mxu0 0.0
    %2253 = vmatpush2.msra.mxu0 0.0
    %2254 = vmatprep.subr.mxu0 0.0
    %2255 = vmatpush2.msra.mxu0 0.0
    %2256 = vmatprep.subr.mxu0 0.0
    %2257 = vmatpush2.msra.mxu0 0.0
    %2258 = vmatprep.subr.mxu0 0.0
    %2259 = vmatpush2.msra.mxu0 0.0
    %2260 = vmatprep.subr.mxu0 0.0
    %2261 = vmatpush2.msra.mxu0 0.0
    %2262 = vmatprep.subr.mxu0 0.0
    %2263 = vmatpush2.msra.mxu0 0.0
    %2264 = vmatprep.subr.mxu0 0.0
    %2265 = vmatpush2.msra.mxu0 0.0
    %2266 = vmatprep.subr.mxu0 0.0
    %2267 = vmatpush2.msra.mxu0 0.0
    %2268 = vmatprep.mubr.f32.mxu0 0.0
    %2269 = vmatmul.mubr.f32.gmra.mxu0 %v2131
    %v2270 = vpop.f32.mrf.mxu0
    %v2271 = vadd.f32 0.0, %v2270
    %v2272 = vpop.f32.mrf.mxu0
    %v2273 = vadd.f32 0.0, %v2272
    %2274 = vdwg.mxu0
    %v2275 = vadd.f32 %v2127, %v2200
    %v2276 = vadd.f32 %v2128, %v2202
    %v2277 = vadd.f32 %v2129, %v2271
    %v2278 = vadd.f32 %v2130, %v2273
    %v2279 = vxor.u32 %v2275, 2147483648
    %v2280 = vmul.f32 %v2279, 1.442695
    %v2281 = vpow.pop %v2280
    %v2282 = vadd.f32 %v2281, 1.0
    %v2283 = vrcp.pop %v2282
    %v2284 = vmul.f32 1.0, %v2283
    %v2285 = vxor.u32 %v2276, 2147483648
    %v2286 = vmul.f32 %v2285, 1.442695
    %v2287 = vpow.pop %v2286
    %v2288 = vadd.f32 %v2287, 1.0
    %v2289 = vrcp.pop %v2288
    %v2290 = vmul.f32 1.0, %v2289
    %v2291 = vtanh.pop %v2277
    %v2292 = vxor.u32 %v2278, 2147483648
    %v2293 = vmul.f32 %v2292, 1.442695
    %v2294 = vpow.pop %v2293
    %v2295 = vadd.f32 %v2294, 1.0
    %v2296 = vrcp.pop %v2295
    %v2297 = vmul.f32 1.0, %v2296
    %v2298 = vmul.f32 %v2290, %v2132
    %v2299 = vmul.f32 %v2284, %v2291
    %v2300 = vadd.f32 %v2298, %v2299
    %v2301 = vtanh.pop %v2300
    %v2302 = vmul.f32 %v2297, %v2301
    %vm2303 = vcmp.gt.s32.totalorder %v690, 3
    %vm2304 = vcmp.gt.s32.totalorder %v690, 4
    %v2305 = vsel %vm2303, 1, 0
    %2306 = vset.pattern.permute.xlu0 0
    %2307 = vperm.xlu0 %2306, %v2305
    %v2308 = vpop.permute.xlu0 %2307
    %vm2309 = vcmp.eq.s32.totalorder %v2308, 1
    %v2310 = vsel %vm2309, %v2125, %v1954
    %2311 = vst [vmem:[#allocation4] sm:$0xff] %v2310
    %v2312 = vld [vmem:[#allocation5] sm:$0xff]
    %v2313 = vsel %vm2309, %v2123, %v2312
    %2314 = vst [vmem:[#allocation5] sm:$0xff] %v2313
    %v2315 = vld [vmem:[#allocation6] sm:$0xff]
    %v2316 = vsel %vm2304, 1, 0
    %2317 = vset.pattern.permute.xlu0 0
    %2318 = vperm.xlu0 %2317, %v2316
    %v2319 = vpop.permute.xlu0 %2318
    %vm2320 = vcmp.eq.s32.totalorder %v2319, 1
    %v2321 = vsel %vm2320, %v2302, %v2315
    %2322 = vst [vmem:[#allocation6] sm:$0xff] %v2321
    %v2323 = vld [vmem:[#allocation7] sm:$0xff]
    %v2324 = vsel %vm2320, %v2300, %v2323
    %2325 = vst [vmem:[#allocation7] sm:$0xff] %v2324
    %s2326 = scalar_lea.vmem [#allocation2], 128
    %v2327 = vld [vmem:[%s2326] sm:$0xff]
    %v2328 = vld [vmem:[%s2326 + $0x8] sm:$0xff]
    %v2329 = vld [vmem:[%s2326 + $0x10] sm:$0xff]
    %v2330 = vld [vmem:[%s2326 + $0x18] sm:$0xff]
    %v2331 = vld [vmem:[#allocation4] sm:$0xff]
    %v2332 = vld [vmem:[#allocation5] sm:$0xff]
    %2333 = vmatprep.subr.mxu0 %v752
    %2334 = vmatpush1.msra.mxu0 %v751
    %2335 = vmatprep.subr.mxu0 %v748
    %2336 = vmatpush1.msra.mxu0 %v747
    %2337 = vmatprep.subr.mxu0 %v744
    %2338 = vmatpush1.msra.mxu0 %v743
    %2339 = vmatprep.subr.mxu0 %v740
    %2340 = vmatpush1.msra.mxu0 %v739
    %2341 = vmatprep.subr.mxu0 %v736
    %2342 = vmatpush1.msra.mxu0 %v735
    %2343 = vmatprep.subr.mxu0 %v732
    %2344 = vmatpush1.msra.mxu0 %v731
    %2345 = vmatprep.subr.mxu0 %v728
    %2346 = vmatpush1.msra.mxu0 %v727
    %2347 = vmatprep.subr.mxu0 %v724
    %2348 = vmatpush1.msra.mxu0 %v723
    %2349 = vmatprep.subr.mxu0 %v720
    %2350 = vmatpush1.msra.mxu0 %v719
    %2351 = vmatprep.subr.mxu0 %v716
    %2352 = vmatpush1.msra.mxu0 %v715
    %2353 = vmatprep.subr.mxu0 %v712
    %2354 = vmatpush1.msra.mxu0 %v711
    %2355 = vmatprep.subr.mxu0 %v708
    %2356 = vmatpush1.msra.mxu0 %v707
    %2357 = vmatprep.subr.mxu0 %v704
    %2358 = vmatpush1.msra.mxu0 %v703
    %2359 = vmatprep.subr.mxu0 %v700
    %2360 = vmatpush1.msra.mxu0 %v699
    %2361 = vmatprep.subr.mxu0 %v696
    %2362 = vmatpush1.msra.mxu0 %v695
    %2363 = vmatprep.subr.mxu0 %v692
    %2364 = vmatpush1.msra.mxu0 %v691
    %2365 = vmatprep.subr.mxu0 0.0
    %2366 = vmatpush2.msra.mxu0 0.0
    %2367 = vmatprep.subr.mxu0 0.0
    %2368 = vmatpush2.msra.mxu0 0.0
    %2369 = vmatprep.subr.mxu0 0.0
    %2370 = vmatpush2.msra.mxu0 0.0
    %2371 = vmatprep.subr.mxu0 0.0
    %2372 = vmatpush2.msra.mxu0 0.0
    %2373 = vmatprep.subr.mxu0 0.0
    %2374 = vmatpush2.msra.mxu0 0.0
    %2375 = vmatprep.subr.mxu0 0.0
    %2376 = vmatpush2.msra.mxu0 0.0
    %2377 = vmatprep.subr.mxu0 0.0
    %2378 = vmatpush2.msra.mxu0 0.0
    %2379 = vmatprep.subr.mxu0 0.0
    %2380 = vmatpush2.msra.mxu0 0.0
    %2381 = vmatprep.subr.mxu0 0.0
    %2382 = vmatpush2.msra.mxu0 0.0
    %2383 = vmatprep.subr.mxu0 0.0
    %2384 = vmatpush2.msra.mxu0 0.0
    %2385 = vmatprep.subr.mxu0 0.0
    %2386 = vmatpush2.msra.mxu0 0.0
    %2387 = vmatprep.subr.mxu0 0.0
    %2388 = vmatpush2.msra.mxu0 0.0
    %2389 = vmatprep.subr.mxu0 0.0
    %2390 = vmatpush2.msra.mxu0 0.0
    %2391 = vmatprep.subr.mxu0 0.0
    %2392 = vmatpush2.msra.mxu0 0.0
    %2393 = vmatprep.subr.mxu0 0.0
    %2394 = vmatpush2.msra.mxu0 0.0
    %2395 = vmatprep.subr.mxu0 0.0
    %2396 = vmatpush2.msra.mxu0 0.0
    %2397 = vmatprep.mubr.f32.mxu0 0.0
    %2398 = vmatmul.mubr.f32.gmra.mxu0 %v2331
    %v2399 = vpop.f32.mrf.mxu0
    %v2400 = vadd.f32 0.0, %v2399
    %v2401 = vpop.f32.mrf.mxu0
    %v2402 = vadd.f32 0.0, %v2401
    %2403 = vdwg.mxu0
    %2404 = vmatprep.subr.mxu0 %v754
    %2405 = vmatpush1.msra.mxu0 %v753
    %2406 = vmatprep.subr.mxu0 %v750
    %2407 = vmatpush1.msra.mxu0 %v749
    %2408 = vmatprep.subr.mxu0 %v746
    %2409 = vmatpush1.msra.mxu0 %v745
    %2410 = vmatprep.subr.mxu0 %v742
    %2411 = vmatpush1.msra.mxu0 %v741
    %2412 = vmatprep.subr.mxu0 %v738
    %2413 = vmatpush1.msra.mxu0 %v737
    %2414 = vmatprep.subr.mxu0 %v734
    %2415 = vmatpush1.msra.mxu0 %v733
    %2416 = vmatprep.subr.mxu0 %v730
    %2417 = vmatpush1.msra.mxu0 %v729
    %2418 = vmatprep.subr.mxu0 %v726
    %2419 = vmatpush1.msra.mxu0 %v725
    %2420 = vmatprep.subr.mxu0 %v722
    %2421 = vmatpush1.msra.mxu0 %v721
    %2422 = vmatprep.subr.mxu0 %v718
    %2423 = vmatpush1.msra.mxu0 %v717
    %2424 = vmatprep.subr.mxu0 %v714
    %2425 = vmatpush1.msra.mxu0 %v713
    %2426 = vmatprep.subr.mxu0 %v710
    %2427 = vmatpush1.msra.mxu0 %v709
    %2428 = vmatprep.subr.mxu0 %v706
    %2429 = vmatpush1.msra.mxu0 %v705
    %2430 = vmatprep.subr.mxu0 %v702
    %2431 = vmatpush1.msra.mxu0 %v701
    %2432 = vmatprep.subr.mxu0 %v698
    %2433 = vmatpush1.msra.mxu0 %v697
    %2434 = vmatprep.subr.mxu0 %v694
    %2435 = vmatpush1.msra.mxu0 %v693
    %2436 = vmatprep.subr.mxu0 0.0
    %2437 = vmatpush2.msra.mxu0 0.0
    %2438 = vmatprep.subr.mxu0 0.0
    %2439 = vmatpush2.msra.mxu0 0.0
    %2440 = vmatprep.subr.mxu0 0.0
    %2441 = vmatpush2.msra.mxu0 0.0
    %2442 = vmatprep.subr.mxu0 0.0
    %2443 = vmatpush2.msra.mxu0 0.0
    %2444 = vmatprep.subr.mxu0 0.0
    %2445 = vmatpush2.msra.mxu0 0.0
    %2446 = vmatprep.subr.mxu0 0.0
    %2447 = vmatpush2.msra.mxu0 0.0
    %2448 = vmatprep.subr.mxu0 0.0
    %2449 = vmatpush2.msra.mxu0 0.0
    %2450 = vmatprep.subr.mxu0 0.0
    %2451 = vmatpush2.msra.mxu0 0.0
    %2452 = vmatprep.subr.mxu0 0.0
    %2453 = vmatpush2.msra.mxu0 0.0
    %2454 = vmatprep.subr.mxu0 0.0
    %2455 = vmatpush2.msra.mxu0 0.0
    %2456 = vmatprep.subr.mxu0 0.0
    %2457 = vmatpush2.msra.mxu0 0.0
    %2458 = vmatprep.subr.mxu0 0.0
    %2459 = vmatpush2.msra.mxu0 0.0
    %2460 = vmatprep.subr.mxu0 0.0
    %2461 = vmatpush2.msra.mxu0 0.0
    %2462 = vmatprep.subr.mxu0 0.0
    %2463 = vmatpush2.msra.mxu0 0.0
    %2464 = vmatprep.subr.mxu0 0.0
    %2465 = vmatpush2.msra.mxu0 0.0
    %2466 = vmatprep.subr.mxu0 0.0
    %2467 = vmatpush2.msra.mxu0 0.0
    %2468 = vmatprep.mubr.f32.mxu0 0.0
    %2469 = vmatmul.mubr.f32.gmra.mxu0 %v2331
    %v2470 = vpop.f32.mrf.mxu0
    %v2471 = vadd.f32 0.0, %v2470
    %v2472 = vpop.f32.mrf.mxu0
    %v2473 = vadd.f32 0.0, %v2472
    %2474 = vdwg.mxu0
    %v2475 = vadd.f32 %v2327, %v2400
    %v2476 = vadd.f32 %v2328, %v2402
    %v2477 = vadd.f32 %v2329, %v2471
    %v2478 = vadd.f32 %v2330, %v2473
    %v2479 = vxor.u32 %v2475, 2147483648
    %v2480 = vmul.f32 %v2479, 1.442695
    %v2481 = vpow.pop %v2480
    %v2482 = vadd.f32 %v2481, 1.0
    %v2483 = vrcp.pop %v2482
    %v2484 = vmul.f32 1.0, %v2483
    %v2485 = vxor.u32 %v2476, 2147483648
    %v2486 = vmul.f32 %v2485, 1.442695
    %v2487 = vpow.pop %v2486
    %v2488 = vadd.f32 %v2487, 1.0
    %v2489 = vrcp.pop %v2488
    %v2490 = vmul.f32 1.0, %v2489
    %v2491 = vtanh.pop %v2477
    %v2492 = vxor.u32 %v2478, 2147483648
    %v2493 = vmul.f32 %v2492, 1.442695
    %v2494 = vpow.pop %v2493
    %v2495 = vadd.f32 %v2494, 1.0
    %v2496 = vrcp.pop %v2495
    %v2497 = vmul.f32 1.0, %v2496
    %v2498 = vmul.f32 %v2490, %v2332
    %v2499 = vmul.f32 %v2484, %v2491
    %v2500 = vadd.f32 %v2498, %v2499
    %v2501 = vtanh.pop %v2500
    %v2502 = vmul.f32 %v2497, %v2501
    %s2503 = scalar_lea.vmem [#allocation3], 96
    %v2504 = vld [vmem:[%s2503] sm:$0xff]
    %v2505 = vld [vmem:[%s2503 + $0x8] sm:$0xff]
    %v2506 = vld [vmem:[%s2503 + $0x10] sm:$0xff]
    %v2507 = vld [vmem:[%s2503 + $0x18] sm:$0xff]
    %v2508 = vld [vmem:[#allocation6] sm:$0xff]
    %v2509 = vld [vmem:[#allocation7] sm:$0xff]
    %2510 = vmatprep.subr.mxu0 %v816
    %2511 = vmatpush1.msra.mxu0 %v815
    %2512 = vmatprep.subr.mxu0 %v812
    %2513 = vmatpush1.msra.mxu0 %v811
    %2514 = vmatprep.subr.mxu0 %v808
    %2515 = vmatpush1.msra.mxu0 %v807
    %2516 = vmatprep.subr.mxu0 %v804
    %2517 = vmatpush1.msra.mxu0 %v803
    %2518 = vmatprep.subr.mxu0 %v800
    %2519 = vmatpush1.msra.mxu0 %v799
    %2520 = vmatprep.subr.mxu0 %v796
    %2521 = vmatpush1.msra.mxu0 %v795
    %2522 = vmatprep.subr.mxu0 %v792
    %2523 = vmatpush1.msra.mxu0 %v791
    %2524 = vmatprep.subr.mxu0 %v788
    %2525 = vmatpush1.msra.mxu0 %v787
    %2526 = vmatprep.subr.mxu0 %v784
    %2527 = vmatpush1.msra.mxu0 %v783
    %2528 = vmatprep.subr.mxu0 %v780
    %2529 = vmatpush1.msra.mxu0 %v779
    %2530 = vmatprep.subr.mxu0 %v776
    %2531 = vmatpush1.msra.mxu0 %v775
    %2532 = vmatprep.subr.mxu0 %v772
    %2533 = vmatpush1.msra.mxu0 %v771
    %2534 = vmatprep.subr.mxu0 %v768
    %2535 = vmatpush1.msra.mxu0 %v767
    %2536 = vmatprep.subr.mxu0 %v764
    %2537 = vmatpush1.msra.mxu0 %v763
    %2538 = vmatprep.subr.mxu0 %v760
    %2539 = vmatpush1.msra.mxu0 %v759
    %2540 = vmatprep.subr.mxu0 %v756
    %2541 = vmatpush1.msra.mxu0 %v755
    %2542 = vmatprep.subr.mxu0 0.0
    %2543 = vmatpush2.msra.mxu0 0.0
    %2544 = vmatprep.subr.mxu0 0.0
    %2545 = vmatpush2.msra.mxu0 0.0
    %2546 = vmatprep.subr.mxu0 0.0
    %2547 = vmatpush2.msra.mxu0 0.0
    %2548 = vmatprep.subr.mxu0 0.0
    %2549 = vmatpush2.msra.mxu0 0.0
    %2550 = vmatprep.subr.mxu0 0.0
    %2551 = vmatpush2.msra.mxu0 0.0
    %2552 = vmatprep.subr.mxu0 0.0
    %2553 = vmatpush2.msra.mxu0 0.0
    %2554 = vmatprep.subr.mxu0 0.0
    %2555 = vmatpush2.msra.mxu0 0.0
    %2556 = vmatprep.subr.mxu0 0.0
    %2557 = vmatpush2.msra.mxu0 0.0
    %2558 = vmatprep.subr.mxu0 0.0
    %2559 = vmatpush2.msra.mxu0 0.0
    %2560 = vmatprep.subr.mxu0 0.0
    %2561 = vmatpush2.msra.mxu0 0.0
    %2562 = vmatprep.subr.mxu0 0.0
    %2563 = vmatpush2.msra.mxu0 0.0
    %2564 = vmatprep.subr.mxu0 0.0
    %2565 = vmatpush2.msra.mxu0 0.0
    %2566 = vmatprep.subr.mxu0 0.0
    %2567 = vmatpush2.msra.mxu0 0.0
    %2568 = vmatprep.subr.mxu0 0.0
    %2569 = vmatpush2.msra.mxu0 0.0
    %2570 = vmatprep.subr.mxu0 0.0
    %2571 = vmatpush2.msra.mxu0 0.0
    %2572 = vmatprep.subr.mxu0 0.0
    %2573 = vmatpush2.msra.mxu0 0.0
    %2574 = vmatprep.mubr.f32.mxu0 0.0
    %2575 = vmatmul.mubr.f32.gmra.mxu0 %v2508
    %v2576 = vpop.f32.mrf.mxu0
    %v2577 = vadd.f32 0.0, %v2576
    %v2578 = vpop.f32.mrf.mxu0
    %v2579 = vadd.f32 0.0, %v2578
    %2580 = vdwg.mxu0
    %2581 = vmatprep.subr.mxu0 %v818
    %2582 = vmatpush1.msra.mxu0 %v817
    %2583 = vmatprep.subr.mxu0 %v814
    %2584 = vmatpush1.msra.mxu0 %v813
    %2585 = vmatprep.subr.mxu0 %v810
    %2586 = vmatpush1.msra.mxu0 %v809
    %2587 = vmatprep.subr.mxu0 %v806
    %2588 = vmatpush1.msra.mxu0 %v805
    %2589 = vmatprep.subr.mxu0 %v802
    %2590 = vmatpush1.msra.mxu0 %v801
    %2591 = vmatprep.subr.mxu0 %v798
    %2592 = vmatpush1.msra.mxu0 %v797
    %2593 = vmatprep.subr.mxu0 %v794
    %2594 = vmatpush1.msra.mxu0 %v793
    %2595 = vmatprep.subr.mxu0 %v790
    %2596 = vmatpush1.msra.mxu0 %v789
    %2597 = vmatprep.subr.mxu0 %v786
    %2598 = vmatpush1.msra.mxu0 %v785
    %2599 = vmatprep.subr.mxu0 %v782
    %2600 = vmatpush1.msra.mxu0 %v781
    %2601 = vmatprep.subr.mxu0 %v778
    %2602 = vmatpush1.msra.mxu0 %v777
    %2603 = vmatprep.subr.mxu0 %v774
    %2604 = vmatpush1.msra.mxu0 %v773
    %2605 = vmatprep.subr.mxu0 %v770
    %2606 = vmatpush1.msra.mxu0 %v769
    %2607 = vmatprep.subr.mxu0 %v766
    %2608 = vmatpush1.msra.mxu0 %v765
    %2609 = vmatprep.subr.mxu0 %v762
    %2610 = vmatpush1.msra.mxu0 %v761
    %2611 = vmatprep.subr.mxu0 %v758
    %2612 = vmatpush1.msra.mxu0 %v757
    %2613 = vmatprep.subr.mxu0 0.0
    %2614 = vmatpush2.msra.mxu0 0.0
    %2615 = vmatprep.subr.mxu0 0.0
    %2616 = vmatpush2.msra.mxu0 0.0
    %2617 = vmatprep.subr.mxu0 0.0
    %2618 = vmatpush2.msra.mxu0 0.0
    %2619 = vmatprep.subr.mxu0 0.0
    %2620 = vmatpush2.msra.mxu0 0.0
    %2621 = vmatprep.subr.mxu0 0.0
    %2622 = vmatpush2.msra.mxu0 0.0
    %2623 = vmatprep.subr.mxu0 0.0
    %2624 = vmatpush2.msra.mxu0 0.0
    %2625 = vmatprep.subr.mxu0 0.0
    %2626 = vmatpush2.msra.mxu0 0.0
    %2627 = vmatprep.subr.mxu0 0.0
    %2628 = vmatpush2.msra.mxu0 0.0
    %2629 = vmatprep.subr.mxu0 0.0
    %2630 = vmatpush2.msra.mxu0 0.0
    %2631 = vmatprep.subr.mxu0 0.0
    %2632 = vmatpush2.msra.mxu0 0.0
    %2633 = vmatprep.subr.mxu0 0.0
    %2634 = vmatpush2.msra.mxu0 0.0
    %2635 = vmatprep.subr.mxu0 0.0
    %2636 = vmatpush2.msra.mxu0 0.0
    %2637 = vmatprep.subr.mxu0 0.0
    %2638 = vmatpush2.msra.mxu0 0.0
    %2639 = vmatprep.subr.mxu0 0.0
    %2640 = vmatpush2.msra.mxu0 0.0
    %2641 = vmatprep.subr.mxu0 0.0
    %2642 = vmatpush2.msra.mxu0 0.0
    %2643 = vmatprep.subr.mxu0 0.0
    %2644 = vmatpush2.msra.mxu0 0.0
    %2645 = vmatprep.mubr.f32.mxu0 0.0
    %2646 = vmatmul.mubr.f32.gmra.mxu0 %v2508
    %v2647 = vpop.f32.mrf.mxu0
    %v2648 = vadd.f32 0.0, %v2647
    %v2649 = vpop.f32.mrf.mxu0
    %v2650 = vadd.f32 0.0, %v2649
    %2651 = vdwg.mxu0
    %v2652 = vadd.f32 %v2504, %v2577
    %v2653 = vadd.f32 %v2505, %v2579
    %v2654 = vadd.f32 %v2506, %v2648
    %v2655 = vadd.f32 %v2507, %v2650
    %v2656 = vxor.u32 %v2652, 2147483648
    %v2657 = vmul.f32 %v2656, 1.442695
    %v2658 = vpow.pop %v2657
    %v2659 = vadd.f32 %v2658, 1.0
    %v2660 = vrcp.pop %v2659
    %v2661 = vmul.f32 1.0, %v2660
    %v2662 = vxor.u32 %v2653, 2147483648
    %v2663 = vmul.f32 %v2662, 1.442695
    %v2664 = vpow.pop %v2663
    %v2665 = vadd.f32 %v2664, 1.0
    %v2666 = vrcp.pop %v2665
    %v2667 = vmul.f32 1.0, %v2666
    %v2668 = vtanh.pop %v2654
    %v2669 = vxor.u32 %v2655, 2147483648
    %v2670 = vmul.f32 %v2669, 1.442695
    %v2671 = vpow.pop %v2670
    %v2672 = vadd.f32 %v2671, 1.0
    %v2673 = vrcp.pop %v2672
    %v2674 = vmul.f32 1.0, %v2673
    %v2675 = vmul.f32 %v2667, %v2509
    %v2676 = vmul.f32 %v2661, %v2668
    %v2677 = vadd.f32 %v2675, %v2676
    %v2678 = vtanh.pop %v2677
    %v2679 = vmul.f32 %v2674, %v2678
    %v2680 = vsel %vm2320, %v2502, %v2331
    %2681 = vst [vmem:[#allocation4] sm:$0xff] %v2680
    %v2682 = vld [vmem:[#allocation5] sm:$0xff]
    %v2683 = vsel %vm2320, %v2500, %v2682
    %2684 = vst [vmem:[#allocation5] sm:$0xff] %v2683
    %v2685 = vld [vmem:[#allocation6] sm:$0xff]
    %v2686 = vsel %vm2309, %v2679, %v2685
    %2687 = vst [vmem:[#allocation6] sm:$0xff] %v2686
    %v2688 = vld [vmem:[#allocation7] sm:$0xff]
    %v2689 = vsel %vm2309, %v2677, %v2688
    %2690 = vst [vmem:[#allocation7] sm:$0xff] %v2689
    %s2691 = scalar_lea.vmem [#allocation2], 160
    %v2692 = vld [vmem:[%s2691] sm:$0xff]
    %v2693 = vld [vmem:[%s2691 + $0x8] sm:$0xff]
    %v2694 = vld [vmem:[%s2691 + $0x10] sm:$0xff]
    %v2695 = vld [vmem:[%s2691 + $0x18] sm:$0xff]
    %v2696 = vld [vmem:[#allocation4] sm:$0xff]
    %v2697 = vld [vmem:[#allocation5] sm:$0xff]
    %2698 = vmatprep.subr.mxu0 %v752
    %2699 = vmatpush1.msra.mxu0 %v751
    %2700 = vmatprep.subr.mxu0 %v748
    %2701 = vmatpush1.msra.mxu0 %v747
    %2702 = vmatprep.subr.mxu0 %v744
    %2703 = vmatpush1.msra.mxu0 %v743
    %2704 = vmatprep.subr.mxu0 %v740
    %2705 = vmatpush1.msra.mxu0 %v739
    %2706 = vmatprep.subr.mxu0 %v736
    %2707 = vmatpush1.msra.mxu0 %v735
    %2708 = vmatprep.subr.mxu0 %v732
    %2709 = vmatpush1.msra.mxu0 %v731
    %2710 = vmatprep.subr.mxu0 %v728
    %2711 = vmatpush1.msra.mxu0 %v727
    %2712 = vmatprep.subr.mxu0 %v724
    %2713 = vmatpush1.msra.mxu0 %v723
    %2714 = vmatprep.subr.mxu0 %v720
    %2715 = vmatpush1.msra.mxu0 %v719
    %2716 = vmatprep.subr.mxu0 %v716
    %2717 = vmatpush1.msra.mxu0 %v715
    %2718 = vmatprep.subr.mxu0 %v712
    %2719 = vmatpush1.msra.mxu0 %v711
    %2720 = vmatprep.subr.mxu0 %v708
    %2721 = vmatpush1.msra.mxu0 %v707
    %2722 = vmatprep.subr.mxu0 %v704
    %2723 = vmatpush1.msra.mxu0 %v703
    %2724 = vmatprep.subr.mxu0 %v700
    %2725 = vmatpush1.msra.mxu0 %v699
    %2726 = vmatprep.subr.mxu0 %v696
    %2727 = vmatpush1.msra.mxu0 %v695
    %2728 = vmatprep.subr.mxu0 %v692
    %2729 = vmatpush1.msra.mxu0 %v691
    %2730 = vmatprep.subr.mxu0 0.0
    %2731 = vmatpush2.msra.mxu0 0.0
    %2732 = vmatprep.subr.mxu0 0.0
    %2733 = vmatpush2.msra.mxu0 0.0
    %2734 = vmatprep.subr.mxu0 0.0
    %2735 = vmatpush2.msra.mxu0 0.0
    %2736 = vmatprep.subr.mxu0 0.0
    %2737 = vmatpush2.msra.mxu0 0.0
    %2738 = vmatprep.subr.mxu0 0.0
    %2739 = vmatpush2.msra.mxu0 0.0
    %2740 = vmatprep.subr.mxu0 0.0
    %2741 = vmatpush2.msra.mxu0 0.0
    %2742 = vmatprep.subr.mxu0 0.0
    %2743 = vmatpush2.msra.mxu0 0.0
    %2744 = vmatprep.subr.mxu0 0.0
    %2745 = vmatpush2.msra.mxu0 0.0
    %2746 = vmatprep.subr.mxu0 0.0
    %2747 = vmatpush2.msra.mxu0 0.0
    %2748 = vmatprep.subr.mxu0 0.0
    %2749 = vmatpush2.msra.mxu0 0.0
    %2750 = vmatprep.subr.mxu0 0.0
    %2751 = vmatpush2.msra.mxu0 0.0
    %2752 = vmatprep.subr.mxu0 0.0
    %2753 = vmatpush2.msra.mxu0 0.0
    %2754 = vmatprep.subr.mxu0 0.0
    %2755 = vmatpush2.msra.mxu0 0.0
    %2756 = vmatprep.subr.mxu0 0.0
    %2757 = vmatpush2.msra.mxu0 0.0
    %2758 = vmatprep.subr.mxu0 0.0
    %2759 = vmatpush2.msra.mxu0 0.0
    %2760 = vmatprep.subr.mxu0 0.0
    %2761 = vmatpush2.msra.mxu0 0.0
    %2762 = vmatprep.mubr.f32.mxu0 0.0
    %2763 = vmatmul.mubr.f32.gmra.mxu0 %v2696
    %v2764 = vpop.f32.mrf.mxu0
    %v2765 = vadd.f32 0.0, %v2764
    %v2766 = vpop.f32.mrf.mxu0
    %v2767 = vadd.f32 0.0, %v2766
    %2768 = vdwg.mxu0
    %2769 = vmatprep.subr.mxu0 %v754
    %2770 = vmatpush1.msra.mxu0 %v753
    %2771 = vmatprep.subr.mxu0 %v750
    %2772 = vmatpush1.msra.mxu0 %v749
    %2773 = vmatprep.subr.mxu0 %v746
    %2774 = vmatpush1.msra.mxu0 %v745
    %2775 = vmatprep.subr.mxu0 %v742
    %2776 = vmatpush1.msra.mxu0 %v741
    %2777 = vmatprep.subr.mxu0 %v738
    %2778 = vmatpush1.msra.mxu0 %v737
    %2779 = vmatprep.subr.mxu0 %v734
    %2780 = vmatpush1.msra.mxu0 %v733
    %2781 = vmatprep.subr.mxu0 %v730
    %2782 = vmatpush1.msra.mxu0 %v729
    %2783 = vmatprep.subr.mxu0 %v726
    %2784 = vmatpush1.msra.mxu0 %v725
    %2785 = vmatprep.subr.mxu0 %v722
    %2786 = vmatpush1.msra.mxu0 %v721
    %2787 = vmatprep.subr.mxu0 %v718
    %2788 = vmatpush1.msra.mxu0 %v717
    %2789 = vmatprep.subr.mxu0 %v714
    %2790 = vmatpush1.msra.mxu0 %v713
    %2791 = vmatprep.subr.mxu0 %v710
    %2792 = vmatpush1.msra.mxu0 %v709
    %2793 = vmatprep.subr.mxu0 %v706
    %2794 = vmatpush1.msra.mxu0 %v705
    %2795 = vmatprep.subr.mxu0 %v702
    %2796 = vmatpush1.msra.mxu0 %v701
    %2797 = vmatprep.subr.mxu0 %v698
    %2798 = vmatpush1.msra.mxu0 %v697
    %2799 = vmatprep.subr.mxu0 %v694
    %2800 = vmatpush1.msra.mxu0 %v693
    %2801 = vmatprep.subr.mxu0 0.0
    %2802 = vmatpush2.msra.mxu0 0.0
    %2803 = vmatprep.subr.mxu0 0.0
    %2804 = vmatpush2.msra.mxu0 0.0
    %2805 = vmatprep.subr.mxu0 0.0
    %2806 = vmatpush2.msra.mxu0 0.0
    %2807 = vmatprep.subr.mxu0 0.0
    %2808 = vmatpush2.msra.mxu0 0.0
    %2809 = vmatprep.subr.mxu0 0.0
    %2810 = vmatpush2.msra.mxu0 0.0
    %2811 = vmatprep.subr.mxu0 0.0
    %2812 = vmatpush2.msra.mxu0 0.0
    %2813 = vmatprep.subr.mxu0 0.0
    %2814 = vmatpush2.msra.mxu0 0.0
    %2815 = vmatprep.subr.mxu0 0.0
    %2816 = vmatpush2.msra.mxu0 0.0
    %2817 = vmatprep.subr.mxu0 0.0
    %2818 = vmatpush2.msra.mxu0 0.0
    %2819 = vmatprep.subr.mxu0 0.0
    %2820 = vmatpush2.msra.mxu0 0.0
    %2821 = vmatprep.subr.mxu0 0.0
    %2822 = vmatpush2.msra.mxu0 0.0
    %2823 = vmatprep.subr.mxu0 0.0
    %2824 = vmatpush2.msra.mxu0 0.0
    %2825 = vmatprep.subr.mxu0 0.0
    %2826 = vmatpush2.msra.mxu0 0.0
    %2827 = vmatprep.subr.mxu0 0.0
    %2828 = vmatpush2.msra.mxu0 0.0
    %2829 = vmatprep.subr.mxu0 0.0
    %2830 = vmatpush2.msra.mxu0 0.0
    %2831 = vmatprep.subr.mxu0 0.0
    %2832 = vmatpush2.msra.mxu0 0.0
    %2833 = vmatprep.mubr.f32.mxu0 0.0
    %2834 = vmatmul.mubr.f32.gmra.mxu0 %v2696
    %v2835 = vpop.f32.mrf.mxu0
    %v2836 = vadd.f32 0.0, %v2835
    %v2837 = vpop.f32.mrf.mxu0
    %v2838 = vadd.f32 0.0, %v2837
    %2839 = vdwg.mxu0
    %v2840 = vadd.f32 %v2692, %v2765
    %v2841 = vadd.f32 %v2693, %v2767
    %v2842 = vadd.f32 %v2694, %v2836
    %v2843 = vadd.f32 %v2695, %v2838
    %v2844 = vxor.u32 %v2840, 2147483648
    %v2845 = vmul.f32 %v2844, 1.442695
    %v2846 = vpow.pop %v2845
    %v2847 = vadd.f32 %v2846, 1.0
    %v2848 = vrcp.pop %v2847
    %v2849 = vmul.f32 1.0, %v2848
    %v2850 = vxor.u32 %v2841, 2147483648
    %v2851 = vmul.f32 %v2850, 1.442695
    %v2852 = vpow.pop %v2851
    %v2853 = vadd.f32 %v2852, 1.0
    %v2854 = vrcp.pop %v2853
    %v2855 = vmul.f32 1.0, %v2854
    %v2856 = vtanh.pop %v2842
    %v2857 = vxor.u32 %v2843, 2147483648
    %v2858 = vmul.f32 %v2857, 1.442695
    %v2859 = vpow.pop %v2858
    %v2860 = vadd.f32 %v2859, 1.0
    %v2861 = vrcp.pop %v2860
    %v2862 = vmul.f32 1.0, %v2861
    %v2863 = vmul.f32 %v2855, %v2697
    %v2864 = vmul.f32 %v2849, %v2856
    %v2865 = vadd.f32 %v2863, %v2864
    %v2866 = vtanh.pop %v2865
    %v2867 = vmul.f32 %v2862, %v2866
    %s2868 = scalar_lea.vmem [#allocation3], 64
    %v2869 = vld [vmem:[%s2868] sm:$0xff]
    %v2870 = vld [vmem:[%s2868 + $0x8] sm:$0xff]
    %v2871 = vld [vmem:[%s2868 + $0x10] sm:$0xff]
    %v2872 = vld [vmem:[%s2868 + $0x18] sm:$0xff]
    %v2873 = vld [vmem:[#allocation6] sm:$0xff]
    %v2874 = vld [vmem:[#allocation7] sm:$0xff]
    %2875 = vmatprep.subr.mxu0 %v816
    %2876 = vmatpush1.msra.mxu0 %v815
    %2877 = vmatprep.subr.mxu0 %v812
    %2878 = vmatpush1.msra.mxu0 %v811
    %2879 = vmatprep.subr.mxu0 %v808
    %2880 = vmatpush1.msra.mxu0 %v807
    %2881 = vmatprep.subr.mxu0 %v804
    %2882 = vmatpush1.msra.mxu0 %v803
    %2883 = vmatprep.subr.mxu0 %v800
    %2884 = vmatpush1.msra.mxu0 %v799
    %2885 = vmatprep.subr.mxu0 %v796
    %2886 = vmatpush1.msra.mxu0 %v795
    %2887 = vmatprep.subr.mxu0 %v792
    %2888 = vmatpush1.msra.mxu0 %v791
    %2889 = vmatprep.subr.mxu0 %v788
    %2890 = vmatpush1.msra.mxu0 %v787
    %2891 = vmatprep.subr.mxu0 %v784
    %2892 = vmatpush1.msra.mxu0 %v783
    %2893 = vmatprep.subr.mxu0 %v780
    %2894 = vmatpush1.msra.mxu0 %v779
    %2895 = vmatprep.subr.mxu0 %v776
    %2896 = vmatpush1.msra.mxu0 %v775
    %2897 = vmatprep.subr.mxu0 %v772
    %2898 = vmatpush1.msra.mxu0 %v771
    %2899 = vmatprep.subr.mxu0 %v768
    %2900 = vmatpush1.msra.mxu0 %v767
    %2901 = vmatprep.subr.mxu0 %v764
    %2902 = vmatpush1.msra.mxu0 %v763
    %2903 = vmatprep.subr.mxu0 %v760
    %2904 = vmatpush1.msra.mxu0 %v759
    %2905 = vmatprep.subr.mxu0 %v756
    %2906 = vmatpush1.msra.mxu0 %v755
    %2907 = vmatprep.subr.mxu0 0.0
    %2908 = vmatpush2.msra.mxu0 0.0
    %2909 = vmatprep.subr.mxu0 0.0
    %2910 = vmatpush2.msra.mxu0 0.0
    %2911 = vmatprep.subr.mxu0 0.0
    %2912 = vmatpush2.msra.mxu0 0.0
    %2913 = vmatprep.subr.mxu0 0.0
    %2914 = vmatpush2.msra.mxu0 0.0
    %2915 = vmatprep.subr.mxu0 0.0
    %2916 = vmatpush2.msra.mxu0 0.0
    %2917 = vmatprep.subr.mxu0 0.0
    %2918 = vmatpush2.msra.mxu0 0.0
    %2919 = vmatprep.subr.mxu0 0.0
    %2920 = vmatpush2.msra.mxu0 0.0
    %2921 = vmatprep.subr.mxu0 0.0
    %2922 = vmatpush2.msra.mxu0 0.0
    %2923 = vmatprep.subr.mxu0 0.0
    %2924 = vmatpush2.msra.mxu0 0.0
    %2925 = vmatprep.subr.mxu0 0.0
    %2926 = vmatpush2.msra.mxu0 0.0
    %2927 = vmatprep.subr.mxu0 0.0
    %2928 = vmatpush2.msra.mxu0 0.0
    %2929 = vmatprep.subr.mxu0 0.0
    %2930 = vmatpush2.msra.mxu0 0.0
    %2931 = vmatprep.subr.mxu0 0.0
    %2932 = vmatpush2.msra.mxu0 0.0
    %2933 = vmatprep.subr.mxu0 0.0
    %2934 = vmatpush2.msra.mxu0 0.0
    %2935 = vmatprep.subr.mxu0 0.0
    %2936 = vmatpush2.msra.mxu0 0.0
    %2937 = vmatprep.subr.mxu0 0.0
    %2938 = vmatpush2.msra.mxu0 0.0
    %2939 = vmatprep.mubr.f32.mxu0 0.0
    %2940 = vmatmul.mubr.f32.gmra.mxu0 %v2873
    %v2941 = vpop.f32.mrf.mxu0
    %v2942 = vadd.f32 0.0, %v2941
    %v2943 = vpop.f32.mrf.mxu0
    %v2944 = vadd.f32 0.0, %v2943
    %2945 = vdwg.mxu0
    %2946 = vmatprep.subr.mxu0 %v818
    %2947 = vmatpush1.msra.mxu0 %v817
    %2948 = vmatprep.subr.mxu0 %v814
    %2949 = vmatpush1.msra.mxu0 %v813
    %2950 = vmatprep.subr.mxu0 %v810
    %2951 = vmatpush1.msra.mxu0 %v809
    %2952 = vmatprep.subr.mxu0 %v806
    %2953 = vmatpush1.msra.mxu0 %v805
    %2954 = vmatprep.subr.mxu0 %v802
    %2955 = vmatpush1.msra.mxu0 %v801
    %2956 = vmatprep.subr.mxu0 %v798
    %2957 = vmatpush1.msra.mxu0 %v797
    %2958 = vmatprep.subr.mxu0 %v794
    %2959 = vmatpush1.msra.mxu0 %v793
    %2960 = vmatprep.subr.mxu0 %v790
    %2961 = vmatpush1.msra.mxu0 %v789
    %2962 = vmatprep.subr.mxu0 %v786
    %2963 = vmatpush1.msra.mxu0 %v785
    %2964 = vmatprep.subr.mxu0 %v782
    %2965 = vmatpush1.msra.mxu0 %v781
    %2966 = vmatprep.subr.mxu0 %v778
    %2967 = vmatpush1.msra.mxu0 %v777
    %2968 = vmatprep.subr.mxu0 %v774
    %2969 = vmatpush1.msra.mxu0 %v773
    %2970 = vmatprep.subr.mxu0 %v770
    %2971 = vmatpush1.msra.mxu0 %v769
    %2972 = vmatprep.subr.mxu0 %v766
    %2973 = vmatpush1.msra.mxu0 %v765
    %2974 = vmatprep.subr.mxu0 %v762
    %2975 = vmatpush1.msra.mxu0 %v761
    %2976 = vmatprep.subr.mxu0 %v758
    %2977 = vmatpush1.msra.mxu0 %v757
    %2978 = vmatprep.subr.mxu0 0.0
    %2979 = vmatpush2.msra.mxu0 0.0
    %2980 = vmatprep.subr.mxu0 0.0
    %2981 = vmatpush2.msra.mxu0 0.0
    %2982 = vmatprep.subr.mxu0 0.0
    %2983 = vmatpush2.msra.mxu0 0.0
    %2984 = vmatprep.subr.mxu0 0.0
    %2985 = vmatpush2.msra.mxu0 0.0
    %2986 = vmatprep.subr.mxu0 0.0
    %2987 = vmatpush2.msra.mxu0 0.0
    %2988 = vmatprep.subr.mxu0 0.0
    %2989 = vmatpush2.msra.mxu0 0.0
    %2990 = vmatprep.subr.mxu0 0.0
    %2991 = vmatpush2.msra.mxu0 0.0
    %2992 = vmatprep.subr.mxu0 0.0
    %2993 = vmatpush2.msra.mxu0 0.0
    %2994 = vmatprep.subr.mxu0 0.0
    %2995 = vmatpush2.msra.mxu0 0.0
    %2996 = vmatprep.subr.mxu0 0.0
    %2997 = vmatpush2.msra.mxu0 0.0
    %2998 = vmatprep.subr.mxu0 0.0
    %2999 = vmatpush2.msra.mxu0 0.0
    %3000 = vmatprep.subr.mxu0 0.0
    %3001 = vmatpush2.msra.mxu0 0.0
    %3002 = vmatprep.subr.mxu0 0.0
    %3003 = vmatpush2.msra.mxu0 0.0
    %3004 = vmatprep.subr.mxu0 0.0
    %3005 = vmatpush2.msra.mxu0 0.0
    %3006 = vmatprep.subr.mxu0 0.0
    %3007 = vmatpush2.msra.mxu0 0.0
    %3008 = vmatprep.subr.mxu0 0.0
    %3009 = vmatpush2.msra.mxu0 0.0
    %3010 = vmatprep.mubr.f32.mxu0 0.0
    %3011 = vmatmul.mubr.f32.gmra.mxu0 %v2873
    %v3012 = vpop.f32.mrf.mxu0
    %v3013 = vadd.f32 0.0, %v3012
    %v3014 = vpop.f32.mrf.mxu0
    %v3015 = vadd.f32 0.0, %v3014
    %3016 = vdwg.mxu0
    %v3017 = vadd.f32 %v2869, %v2942
    %v3018 = vadd.f32 %v2870, %v2944
    %v3019 = vadd.f32 %v2871, %v3013
    %v3020 = vadd.f32 %v2872, %v3015
    %v3021 = vxor.u32 %v3017, 2147483648
    %v3022 = vmul.f32 %v3021, 1.442695
    %v3023 = vpow.pop %v3022
    %v3024 = vadd.f32 %v3023, 1.0
    %v3025 = vrcp.pop %v3024
    %v3026 = vmul.f32 1.0, %v3025
    %v3027 = vxor.u32 %v3018, 2147483648
    %v3028 = vmul.f32 %v3027, 1.442695
    %v3029 = vpow.pop %v3028
    %v3030 = vadd.f32 %v3029, 1.0
    %v3031 = vrcp.pop %v3030
    %v3032 = vmul.f32 1.0, %v3031
    %v3033 = vtanh.pop %v3019
    %v3034 = vxor.u32 %v3020, 2147483648
    %v3035 = vmul.f32 %v3034, 1.442695
    %v3036 = vpow.pop %v3035
    %v3037 = vadd.f32 %v3036, 1.0
    %v3038 = vrcp.pop %v3037
    %v3039 = vmul.f32 1.0, %v3038
    %v3040 = vmul.f32 %v3032, %v2874
    %v3041 = vmul.f32 %v3026, %v3033
    %v3042 = vadd.f32 %v3040, %v3041
    %v3043 = vtanh.pop %v3042
    %v3044 = vmul.f32 %v3039, %v3043
    %v3045 = vsel %vm1943, %v2867, %v2696
    %3046 = vst [vmem:[#allocation4] sm:$0xff] %v3045
    %v3047 = vld [vmem:[#allocation5] sm:$0xff]
    %v3048 = vsel %vm1943, %v2865, %v3047
    %3049 = vst [vmem:[#allocation5] sm:$0xff] %v3048
    %v3050 = vld [vmem:[#allocation6] sm:$0xff]
    %v3051 = vsel %vm1932, %v3044, %v3050
    %3052 = vst [vmem:[#allocation6] sm:$0xff] %v3051
    %v3053 = vld [vmem:[#allocation7] sm:$0xff]
    %v3054 = vsel %vm1932, %v3042, %v3053
    %3055 = vst [vmem:[#allocation7] sm:$0xff] %v3054
    %s3056 = scalar_lea.vmem [#allocation2], 192
    %v3057 = vld [vmem:[%s3056] sm:$0xff]
    %v3058 = vld [vmem:[%s3056 + $0x8] sm:$0xff]
    %v3059 = vld [vmem:[%s3056 + $0x10] sm:$0xff]
    %v3060 = vld [vmem:[%s3056 + $0x18] sm:$0xff]
    %v3061 = vld [vmem:[#allocation4] sm:$0xff]
    %v3062 = vld [vmem:[#allocation5] sm:$0xff]
    %3063 = vmatprep.subr.mxu0 %v752
    %3064 = vmatpush1.msra.mxu0 %v751
    %3065 = vmatprep.subr.mxu0 %v748
    %3066 = vmatpush1.msra.mxu0 %v747
    %3067 = vmatprep.subr.mxu0 %v744
    %3068 = vmatpush1.msra.mxu0 %v743
    %3069 = vmatprep.subr.mxu0 %v740
    %3070 = vmatpush1.msra.mxu0 %v739
    %3071 = vmatprep.subr.mxu0 %v736
    %3072 = vmatpush1.msra.mxu0 %v735
    %3073 = vmatprep.subr.mxu0 %v732
    %3074 = vmatpush1.msra.mxu0 %v731
    %3075 = vmatprep.subr.mxu0 %v728
    %3076 = vmatpush1.msra.mxu0 %v727
    %3077 = vmatprep.subr.mxu0 %v724
    %3078 = vmatpush1.msra.mxu0 %v723
    %3079 = vmatprep.subr.mxu0 %v720
    %3080 = vmatpush1.msra.mxu0 %v719
    %3081 = vmatprep.subr.mxu0 %v716
    %3082 = vmatpush1.msra.mxu0 %v715
    %3083 = vmatprep.subr.mxu0 %v712
    %3084 = vmatpush1.msra.mxu0 %v711
    %3085 = vmatprep.subr.mxu0 %v708
    %3086 = vmatpush1.msra.mxu0 %v707
    %3087 = vmatprep.subr.mxu0 %v704
    %3088 = vmatpush1.msra.mxu0 %v703
    %3089 = vmatprep.subr.mxu0 %v700
    %3090 = vmatpush1.msra.mxu0 %v699
    %3091 = vmatprep.subr.mxu0 %v696
    %3092 = vmatpush1.msra.mxu0 %v695
    %3093 = vmatprep.subr.mxu0 %v692
    %3094 = vmatpush1.msra.mxu0 %v691
    %3095 = vmatprep.subr.mxu0 0.0
    %3096 = vmatpush2.msra.mxu0 0.0
    %3097 = vmatprep.subr.mxu0 0.0
    %3098 = vmatpush2.msra.mxu0 0.0
    %3099 = vmatprep.subr.mxu0 0.0
    %3100 = vmatpush2.msra.mxu0 0.0
    %3101 = vmatprep.subr.mxu0 0.0
    %3102 = vmatpush2.msra.mxu0 0.0
    %3103 = vmatprep.subr.mxu0 0.0
    %3104 = vmatpush2.msra.mxu0 0.0
    %3105 = vmatprep.subr.mxu0 0.0
    %3106 = vmatpush2.msra.mxu0 0.0
    %3107 = vmatprep.subr.mxu0 0.0
    %3108 = vmatpush2.msra.mxu0 0.0
    %3109 = vmatprep.subr.mxu0 0.0
    %3110 = vmatpush2.msra.mxu0 0.0
    %3111 = vmatprep.subr.mxu0 0.0
    %3112 = vmatpush2.msra.mxu0 0.0
    %3113 = vmatprep.subr.mxu0 0.0
    %3114 = vmatpush2.msra.mxu0 0.0
    %3115 = vmatprep.subr.mxu0 0.0
    %3116 = vmatpush2.msra.mxu0 0.0
    %3117 = vmatprep.subr.mxu0 0.0
    %3118 = vmatpush2.msra.mxu0 0.0
    %3119 = vmatprep.subr.mxu0 0.0
    %3120 = vmatpush2.msra.mxu0 0.0
    %3121 = vmatprep.subr.mxu0 0.0
    %3122 = vmatpush2.msra.mxu0 0.0
    %3123 = vmatprep.subr.mxu0 0.0
    %3124 = vmatpush2.msra.mxu0 0.0
    %3125 = vmatprep.subr.mxu0 0.0
    %3126 = vmatpush2.msra.mxu0 0.0
    %3127 = vmatprep.mubr.f32.mxu0 0.0
    %3128 = vmatmul.mubr.f32.gmra.mxu0 %v3061
    %v3129 = vpop.f32.mrf.mxu0
    %v3130 = vadd.f32 0.0, %v3129
    %v3131 = vpop.f32.mrf.mxu0
    %v3132 = vadd.f32 0.0, %v3131
    %3133 = vdwg.mxu0
    %3134 = vmatprep.subr.mxu0 %v754
    %3135 = vmatpush1.msra.mxu0 %v753
    %3136 = vmatprep.subr.mxu0 %v750
    %3137 = vmatpush1.msra.mxu0 %v749
    %3138 = vmatprep.subr.mxu0 %v746
    %3139 = vmatpush1.msra.mxu0 %v745
    %3140 = vmatprep.subr.mxu0 %v742
    %3141 = vmatpush1.msra.mxu0 %v741
    %3142 = vmatprep.subr.mxu0 %v738
    %3143 = vmatpush1.msra.mxu0 %v737
    %3144 = vmatprep.subr.mxu0 %v734
    %3145 = vmatpush1.msra.mxu0 %v733
    %3146 = vmatprep.subr.mxu0 %v730
    %3147 = vmatpush1.msra.mxu0 %v729
    %3148 = vmatprep.subr.mxu0 %v726
    %3149 = vmatpush1.msra.mxu0 %v725
    %3150 = vmatprep.subr.mxu0 %v722
    %3151 = vmatpush1.msra.mxu0 %v721
    %3152 = vmatprep.subr.mxu0 %v718
    %3153 = vmatpush1.msra.mxu0 %v717
    %3154 = vmatprep.subr.mxu0 %v714
    %3155 = vmatpush1.msra.mxu0 %v713
    %3156 = vmatprep.subr.mxu0 %v710
    %3157 = vmatpush1.msra.mxu0 %v709
    %3158 = vmatprep.subr.mxu0 %v706
    %3159 = vmatpush1.msra.mxu0 %v705
    %3160 = vmatprep.subr.mxu0 %v702
    %3161 = vmatpush1.msra.mxu0 %v701
    %3162 = vmatprep.subr.mxu0 %v698
    %3163 = vmatpush1.msra.mxu0 %v697
    %3164 = vmatprep.subr.mxu0 %v694
    %3165 = vmatpush1.msra.mxu0 %v693
    %3166 = vmatprep.subr.mxu0 0.0
    %3167 = vmatpush2.msra.mxu0 0.0
    %3168 = vmatprep.subr.mxu0 0.0
    %3169 = vmatpush2.msra.mxu0 0.0
    %3170 = vmatprep.subr.mxu0 0.0
    %3171 = vmatpush2.msra.mxu0 0.0
    %3172 = vmatprep.subr.mxu0 0.0
    %3173 = vmatpush2.msra.mxu0 0.0
    %3174 = vmatprep.subr.mxu0 0.0
    %3175 = vmatpush2.msra.mxu0 0.0
    %3176 = vmatprep.subr.mxu0 0.0
    %3177 = vmatpush2.msra.mxu0 0.0
    %3178 = vmatprep.subr.mxu0 0.0
    %3179 = vmatpush2.msra.mxu0 0.0
    %3180 = vmatprep.subr.mxu0 0.0
    %3181 = vmatpush2.msra.mxu0 0.0
    %3182 = vmatprep.subr.mxu0 0.0
    %3183 = vmatpush2.msra.mxu0 0.0
    %3184 = vmatprep.subr.mxu0 0.0
    %3185 = vmatpush2.msra.mxu0 0.0
    %3186 = vmatprep.subr.mxu0 0.0
    %3187 = vmatpush2.msra.mxu0 0.0
    %3188 = vmatprep.subr.mxu0 0.0
    %3189 = vmatpush2.msra.mxu0 0.0
    %3190 = vmatprep.subr.mxu0 0.0
    %3191 = vmatpush2.msra.mxu0 0.0
    %3192 = vmatprep.subr.mxu0 0.0
    %3193 = vmatpush2.msra.mxu0 0.0
    %3194 = vmatprep.subr.mxu0 0.0
    %3195 = vmatpush2.msra.mxu0 0.0
    %3196 = vmatprep.subr.mxu0 0.0
    %3197 = vmatpush2.msra.mxu0 0.0
    %3198 = vmatprep.mubr.f32.mxu0 0.0
    %3199 = vmatmul.mubr.f32.gmra.mxu0 %v3061
    %v3200 = vpop.f32.mrf.mxu0
    %v3201 = vadd.f32 0.0, %v3200
    %v3202 = vpop.f32.mrf.mxu0
    %v3203 = vadd.f32 0.0, %v3202
    %3204 = vdwg.mxu0
    %v3205 = vadd.f32 %v3057, %v3130
    %v3206 = vadd.f32 %v3058, %v3132
    %v3207 = vadd.f32 %v3059, %v3201
    %v3208 = vadd.f32 %v3060, %v3203
    %v3209 = vxor.u32 %v3205, 2147483648
    %v3210 = vmul.f32 %v3209, 1.442695
    %v3211 = vpow.pop %v3210
    %v3212 = vadd.f32 %v3211, 1.0
    %v3213 = vrcp.pop %v3212
    %v3214 = vmul.f32 1.0, %v3213
    %v3215 = vxor.u32 %v3206, 2147483648
    %v3216 = vmul.f32 %v3215, 1.442695
    %v3217 = vpow.pop %v3216
    %v3218 = vadd.f32 %v3217, 1.0
    %v3219 = vrcp.pop %v3218
    %v3220 = vmul.f32 1.0, %v3219
    %v3221 = vtanh.pop %v3207
    %v3222 = vxor.u32 %v3208, 2147483648
    %v3223 = vmul.f32 %v3222, 1.442695
    %v3224 = vpow.pop %v3223
    %v3225 = vadd.f32 %v3224, 1.0
    %v3226 = vrcp.pop %v3225
    %v3227 = vmul.f32 1.0, %v3226
    %v3228 = vmul.f32 %v3220, %v3062
    %v3229 = vmul.f32 %v3214, %v3221
    %v3230 = vadd.f32 %v3228, %v3229
    %v3231 = vtanh.pop %v3230
    %v3232 = vmul.f32 %v3227, %v3231
    %s3233 = scalar_lea.vmem [#allocation3], 32
    %v3234 = vld [vmem:[%s3233] sm:$0xff]
    %v3235 = vld [vmem:[%s3233 + $0x8] sm:$0xff]
    %v3236 = vld [vmem:[%s3233 + $0x10] sm:$0xff]
    %v3237 = vld [vmem:[%s3233 + $0x18] sm:$0xff]
    %v3238 = vld [vmem:[#allocation6] sm:$0xff]
    %v3239 = vld [vmem:[#allocation7] sm:$0xff]
    %3240 = vmatprep.subr.mxu0 %v816
    %3241 = vmatpush1.msra.mxu0 %v815
    %3242 = vmatprep.subr.mxu0 %v812
    %3243 = vmatpush1.msra.mxu0 %v811
    %3244 = vmatprep.subr.mxu0 %v808
    %3245 = vmatpush1.msra.mxu0 %v807
    %3246 = vmatprep.subr.mxu0 %v804
    %3247 = vmatpush1.msra.mxu0 %v803
    %3248 = vmatprep.subr.mxu0 %v800
    %3249 = vmatpush1.msra.mxu0 %v799
    %3250 = vmatprep.subr.mxu0 %v796
    %3251 = vmatpush1.msra.mxu0 %v795
    %3252 = vmatprep.subr.mxu0 %v792
    %3253 = vmatpush1.msra.mxu0 %v791
    %3254 = vmatprep.subr.mxu0 %v788
    %3255 = vmatpush1.msra.mxu0 %v787
    %3256 = vmatprep.subr.mxu0 %v784
    %3257 = vmatpush1.msra.mxu0 %v783
    %3258 = vmatprep.subr.mxu0 %v780
    %3259 = vmatpush1.msra.mxu0 %v779
    %3260 = vmatprep.subr.mxu0 %v776
    %3261 = vmatpush1.msra.mxu0 %v775
    %3262 = vmatprep.subr.mxu0 %v772
    %3263 = vmatpush1.msra.mxu0 %v771
    %3264 = vmatprep.subr.mxu0 %v768
    %3265 = vmatpush1.msra.mxu0 %v767
    %3266 = vmatprep.subr.mxu0 %v764
    %3267 = vmatpush1.msra.mxu0 %v763
    %3268 = vmatprep.subr.mxu0 %v760
    %3269 = vmatpush1.msra.mxu0 %v759
    %3270 = vmatprep.subr.mxu0 %v756
    %3271 = vmatpush1.msra.mxu0 %v755
    %3272 = vmatprep.subr.mxu0 0.0
    %3273 = vmatpush2.msra.mxu0 0.0
    %3274 = vmatprep.subr.mxu0 0.0
    %3275 = vmatpush2.msra.mxu0 0.0
    %3276 = vmatprep.subr.mxu0 0.0
    %3277 = vmatpush2.msra.mxu0 0.0
    %3278 = vmatprep.subr.mxu0 0.0
    %3279 = vmatpush2.msra.mxu0 0.0
    %3280 = vmatprep.subr.mxu0 0.0
    %3281 = vmatpush2.msra.mxu0 0.0
    %3282 = vmatprep.subr.mxu0 0.0
    %3283 = vmatpush2.msra.mxu0 0.0
    %3284 = vmatprep.subr.mxu0 0.0
    %3285 = vmatpush2.msra.mxu0 0.0
    %3286 = vmatprep.subr.mxu0 0.0
    %3287 = vmatpush2.msra.mxu0 0.0
    %3288 = vmatprep.subr.mxu0 0.0
    %3289 = vmatpush2.msra.mxu0 0.0
    %3290 = vmatprep.subr.mxu0 0.0
    %3291 = vmatpush2.msra.mxu0 0.0
    %3292 = vmatprep.subr.mxu0 0.0
    %3293 = vmatpush2.msra.mxu0 0.0
    %3294 = vmatprep.subr.mxu0 0.0
    %3295 = vmatpush2.msra.mxu0 0.0
    %3296 = vmatprep.subr.mxu0 0.0
    %3297 = vmatpush2.msra.mxu0 0.0
    %3298 = vmatprep.subr.mxu0 0.0
    %3299 = vmatpush2.msra.mxu0 0.0
    %3300 = vmatprep.subr.mxu0 0.0
    %3301 = vmatpush2.msra.mxu0 0.0
    %3302 = vmatprep.subr.mxu0 0.0
    %3303 = vmatpush2.msra.mxu0 0.0
    %3304 = vmatprep.mubr.f32.mxu0 0.0
    %3305 = vmatmul.mubr.f32.gmra.mxu0 %v3238
    %v3306 = vpop.f32.mrf.mxu0
    %v3307 = vadd.f32 0.0, %v3306
    %v3308 = vpop.f32.mrf.mxu0
    %v3309 = vadd.f32 0.0, %v3308
    %3310 = vdwg.mxu0
    %3311 = vmatprep.subr.mxu0 %v818
    %3312 = vmatpush1.msra.mxu0 %v817
    %3313 = vmatprep.subr.mxu0 %v814
    %3314 = vmatpush1.msra.mxu0 %v813
    %3315 = vmatprep.subr.mxu0 %v810
    %3316 = vmatpush1.msra.mxu0 %v809
    %3317 = vmatprep.subr.mxu0 %v806
    %3318 = vmatpush1.msra.mxu0 %v805
    %3319 = vmatprep.subr.mxu0 %v802
    %3320 = vmatpush1.msra.mxu0 %v801
    %3321 = vmatprep.subr.mxu0 %v798
    %3322 = vmatpush1.msra.mxu0 %v797
    %3323 = vmatprep.subr.mxu0 %v794
    %3324 = vmatpush1.msra.mxu0 %v793
    %3325 = vmatprep.subr.mxu0 %v790
    %3326 = vmatpush1.msra.mxu0 %v789
    %3327 = vmatprep.subr.mxu0 %v786
    %3328 = vmatpush1.msra.mxu0 %v785
    %3329 = vmatprep.subr.mxu0 %v782
    %3330 = vmatpush1.msra.mxu0 %v781
    %3331 = vmatprep.subr.mxu0 %v778
    %3332 = vmatpush1.msra.mxu0 %v777
    %3333 = vmatprep.subr.mxu0 %v774
    %3334 = vmatpush1.msra.mxu0 %v773
    %3335 = vmatprep.subr.mxu0 %v770
    %3336 = vmatpush1.msra.mxu0 %v769
    %3337 = vmatprep.subr.mxu0 %v766
    %3338 = vmatpush1.msra.mxu0 %v765
    %3339 = vmatprep.subr.mxu0 %v762
    %3340 = vmatpush1.msra.mxu0 %v761
    %3341 = vmatprep.subr.mxu0 %v758
    %3342 = vmatpush1.msra.mxu0 %v757
    %3343 = vmatprep.subr.mxu0 0.0
    %3344 = vmatpush2.msra.mxu0 0.0
    %3345 = vmatprep.subr.mxu0 0.0
    %3346 = vmatpush2.msra.mxu0 0.0
    %3347 = vmatprep.subr.mxu0 0.0
    %3348 = vmatpush2.msra.mxu0 0.0
    %3349 = vmatprep.subr.mxu0 0.0
    %3350 = vmatpush2.msra.mxu0 0.0
    %3351 = vmatprep.subr.mxu0 0.0
    %3352 = vmatpush2.msra.mxu0 0.0
    %3353 = vmatprep.subr.mxu0 0.0
    %3354 = vmatpush2.msra.mxu0 0.0
    %3355 = vmatprep.subr.mxu0 0.0
    %3356 = vmatpush2.msra.mxu0 0.0
    %3357 = vmatprep.subr.mxu0 0.0
    %3358 = vmatpush2.msra.mxu0 0.0
    %3359 = vmatprep.subr.mxu0 0.0
    %3360 = vmatpush2.msra.mxu0 0.0
    %3361 = vmatprep.subr.mxu0 0.0
    %3362 = vmatpush2.msra.mxu0 0.0
    %3363 = vmatprep.subr.mxu0 0.0
    %3364 = vmatpush2.msra.mxu0 0.0
    %3365 = vmatprep.subr.mxu0 0.0
    %3366 = vmatpush2.msra.mxu0 0.0
    %3367 = vmatprep.subr.mxu0 0.0
    %3368 = vmatpush2.msra.mxu0 0.0
    %3369 = vmatprep.subr.mxu0 0.0
    %3370 = vmatpush2.msra.mxu0 0.0
    %3371 = vmatprep.subr.mxu0 0.0
    %3372 = vmatpush2.msra.mxu0 0.0
    %3373 = vmatprep.subr.mxu0 0.0
    %3374 = vmatpush2.msra.mxu0 0.0
    %3375 = vmatprep.mubr.f32.mxu0 0.0
    %3376 = vmatmul.mubr.f32.gmra.mxu0 %v3238
    %v3377 = vpop.f32.mrf.mxu0
    %v3378 = vadd.f32 0.0, %v3377
    %v3379 = vpop.f32.mrf.mxu0
    %v3380 = vadd.f32 0.0, %v3379
    %3381 = vdwg.mxu0
    %v3382 = vadd.f32 %v3234, %v3307
    %v3383 = vadd.f32 %v3235, %v3309
    %v3384 = vadd.f32 %v3236, %v3378
    %v3385 = vadd.f32 %v3237, %v3380
    %v3386 = vxor.u32 %v3382, 2147483648
    %v3387 = vmul.f32 %v3386, 1.442695
    %v3388 = vpow.pop %v3387
    %v3389 = vadd.f32 %v3388, 1.0
    %v3390 = vrcp.pop %v3389
    %v3391 = vmul.f32 1.0, %v3390
    %v3392 = vxor.u32 %v3383, 2147483648
    %v3393 = vmul.f32 %v3392, 1.442695
    %v3394 = vpow.pop %v3393
    %v3395 = vadd.f32 %v3394, 1.0
    %v3396 = vrcp.pop %v3395
    %v3397 = vmul.f32 1.0, %v3396
    %v3398 = vtanh.pop %v3384
    %v3399 = vxor.u32 %v3385, 2147483648
    %v3400 = vmul.f32 %v3399, 1.442695
    %v3401 = vpow.pop %v3400
    %v3402 = vadd.f32 %v3401, 1.0
    %v3403 = vrcp.pop %v3402
    %v3404 = vmul.f32 1.0, %v3403
    %v3405 = vmul.f32 %v3397, %v3239
    %v3406 = vmul.f32 %v3391, %v3398
    %v3407 = vadd.f32 %v3405, %v3406
    %v3408 = vtanh.pop %v3407
    %v3409 = vmul.f32 %v3404, %v3408
    %v3410 = vsel %vm1566, %v3232, %v3061
    %3411 = vst [vmem:[#allocation4] sm:$0xff] %v3410
    %v3412 = vld [vmem:[#allocation5] sm:$0xff]
    %v3413 = vsel %vm1566, %v3230, %v3412
    %3414 = vst [vmem:[#allocation5] sm:$0xff] %v3413
    %v3415 = vld [vmem:[#allocation6] sm:$0xff]
    %v3416 = vsel %vm1555, %v3409, %v3415
    %3417 = vst [vmem:[#allocation6] sm:$0xff] %v3416
    %v3418 = vld [vmem:[#allocation7] sm:$0xff]
    %v3419 = vsel %vm1555, %v3407, %v3418
    %3420 = vst [vmem:[#allocation7] sm:$0xff] %v3419
    %s3421 = scalar_lea.vmem [#allocation2], 224
    %v3422 = vld [vmem:[%s3421] sm:$0xff]
    %v3423 = vld [vmem:[%s3421 + $0x8] sm:$0xff]
    %v3424 = vld [vmem:[%s3421 + $0x10] sm:$0xff]
    %v3425 = vld [vmem:[%s3421 + $0x18] sm:$0xff]
    %v3426 = vld [vmem:[#allocation4] sm:$0xff]
    %v3427 = vld [vmem:[#allocation5] sm:$0xff]
    %3428 = vmatprep.subr.mxu0 %v752
    %3429 = vmatpush1.msra.mxu0 %v751
    %3430 = vmatprep.subr.mxu0 %v748
    %3431 = vmatpush1.msra.mxu0 %v747
    %3432 = vmatprep.subr.mxu0 %v744
    %3433 = vmatpush1.msra.mxu0 %v743
    %3434 = vmatprep.subr.mxu0 %v740
    %3435 = vmatpush1.msra.mxu0 %v739
    %3436 = vmatprep.subr.mxu0 %v736
    %3437 = vmatpush1.msra.mxu0 %v735
    %3438 = vmatprep.subr.mxu0 %v732
    %3439 = vmatpush1.msra.mxu0 %v731
    %3440 = vmatprep.subr.mxu0 %v728
    %3441 = vmatpush1.msra.mxu0 %v727
    %3442 = vmatprep.subr.mxu0 %v724
    %3443 = vmatpush1.msra.mxu0 %v723
    %3444 = vmatprep.subr.mxu0 %v720
    %3445 = vmatpush1.msra.mxu0 %v719
    %3446 = vmatprep.subr.mxu0 %v716
    %3447 = vmatpush1.msra.mxu0 %v715
    %3448 = vmatprep.subr.mxu0 %v712
    %3449 = vmatpush1.msra.mxu0 %v711
    %3450 = vmatprep.subr.mxu0 %v708
    %3451 = vmatpush1.msra.mxu0 %v707
    %3452 = vmatprep.subr.mxu0 %v704
    %3453 = vmatpush1.msra.mxu0 %v703
    %3454 = vmatprep.subr.mxu0 %v700
    %3455 = vmatpush1.msra.mxu0 %v699
    %3456 = vmatprep.subr.mxu0 %v696
    %3457 = vmatpush1.msra.mxu0 %v695
    %3458 = vmatprep.subr.mxu0 %v692
    %3459 = vmatpush1.msra.mxu0 %v691
    %3460 = vmatprep.subr.mxu0 0.0
    %3461 = vmatpush2.msra.mxu0 0.0
    %3462 = vmatprep.subr.mxu0 0.0
    %3463 = vmatpush2.msra.mxu0 0.0
    %3464 = vmatprep.subr.mxu0 0.0
    %3465 = vmatpush2.msra.mxu0 0.0
    %3466 = vmatprep.subr.mxu0 0.0
    %3467 = vmatpush2.msra.mxu0 0.0
    %3468 = vmatprep.subr.mxu0 0.0
    %3469 = vmatpush2.msra.mxu0 0.0
    %3470 = vmatprep.subr.mxu0 0.0
    %3471 = vmatpush2.msra.mxu0 0.0
    %3472 = vmatprep.subr.mxu0 0.0
    %3473 = vmatpush2.msra.mxu0 0.0
    %3474 = vmatprep.subr.mxu0 0.0
    %3475 = vmatpush2.msra.mxu0 0.0
    %3476 = vmatprep.subr.mxu0 0.0
    %3477 = vmatpush2.msra.mxu0 0.0
    %3478 = vmatprep.subr.mxu0 0.0
    %3479 = vmatpush2.msra.mxu0 0.0
    %3480 = vmatprep.subr.mxu0 0.0
    %3481 = vmatpush2.msra.mxu0 0.0
    %3482 = vmatprep.subr.mxu0 0.0
    %3483 = vmatpush2.msra.mxu0 0.0
    %3484 = vmatprep.subr.mxu0 0.0
    %3485 = vmatpush2.msra.mxu0 0.0
    %3486 = vmatprep.subr.mxu0 0.0
    %3487 = vmatpush2.msra.mxu0 0.0
    %3488 = vmatprep.subr.mxu0 0.0
    %3489 = vmatpush2.msra.mxu0 0.0
    %3490 = vmatprep.subr.mxu0 0.0
    %3491 = vmatpush2.msra.mxu0 0.0
    %3492 = vmatprep.mubr.f32.mxu0 0.0
    %3493 = vmatmul.mubr.f32.gmra.mxu0 %v3426
    %v3494 = vpop.f32.mrf.mxu0
    %v3495 = vadd.f32 0.0, %v3494
    %v3496 = vpop.f32.mrf.mxu0
    %v3497 = vadd.f32 0.0, %v3496
    %3498 = vdwg.mxu0
    %3499 = vmatprep.subr.mxu0 %v754
    %3500 = vmatpush1.msra.mxu0 %v753
    %3501 = vmatprep.subr.mxu0 %v750
    %3502 = vmatpush1.msra.mxu0 %v749
    %3503 = vmatprep.subr.mxu0 %v746
    %3504 = vmatpush1.msra.mxu0 %v745
    %3505 = vmatprep.subr.mxu0 %v742
    %3506 = vmatpush1.msra.mxu0 %v741
    %3507 = vmatprep.subr.mxu0 %v738
    %3508 = vmatpush1.msra.mxu0 %v737
    %3509 = vmatprep.subr.mxu0 %v734
    %3510 = vmatpush1.msra.mxu0 %v733
    %3511 = vmatprep.subr.mxu0 %v730
    %3512 = vmatpush1.msra.mxu0 %v729
    %3513 = vmatprep.subr.mxu0 %v726
    %3514 = vmatpush1.msra.mxu0 %v725
    %3515 = vmatprep.subr.mxu0 %v722
    %3516 = vmatpush1.msra.mxu0 %v721
    %3517 = vmatprep.subr.mxu0 %v718
    %3518 = vmatpush1.msra.mxu0 %v717
    %3519 = vmatprep.subr.mxu0 %v714
    %3520 = vmatpush1.msra.mxu0 %v713
    %3521 = vmatprep.subr.mxu0 %v710
    %3522 = vmatpush1.msra.mxu0 %v709
    %3523 = vmatprep.subr.mxu0 %v706
    %3524 = vmatpush1.msra.mxu0 %v705
    %3525 = vmatprep.subr.mxu0 %v702
    %3526 = vmatpush1.msra.mxu0 %v701
    %3527 = vmatprep.subr.mxu0 %v698
    %3528 = vmatpush1.msra.mxu0 %v697
    %3529 = vmatprep.subr.mxu0 %v694
    %3530 = vmatpush1.msra.mxu0 %v693
    %3531 = vmatprep.subr.mxu0 0.0
    %3532 = vmatpush2.msra.mxu0 0.0
    %3533 = vmatprep.subr.mxu0 0.0
    %3534 = vmatpush2.msra.mxu0 0.0
    %3535 = vmatprep.subr.mxu0 0.0
    %3536 = vmatpush2.msra.mxu0 0.0
    %3537 = vmatprep.subr.mxu0 0.0
    %3538 = vmatpush2.msra.mxu0 0.0
    %3539 = vmatprep.subr.mxu0 0.0
    %3540 = vmatpush2.msra.mxu0 0.0
    %3541 = vmatprep.subr.mxu0 0.0
    %3542 = vmatpush2.msra.mxu0 0.0
    %3543 = vmatprep.subr.mxu0 0.0
    %3544 = vmatpush2.msra.mxu0 0.0
    %3545 = vmatprep.subr.mxu0 0.0
    %3546 = vmatpush2.msra.mxu0 0.0
    %3547 = vmatprep.subr.mxu0 0.0
    %3548 = vmatpush2.msra.mxu0 0.0
    %3549 = vmatprep.subr.mxu0 0.0
    %3550 = vmatpush2.msra.mxu0 0.0
    %3551 = vmatprep.subr.mxu0 0.0
    %3552 = vmatpush2.msra.mxu0 0.0
    %3553 = vmatprep.subr.mxu0 0.0
    %3554 = vmatpush2.msra.mxu0 0.0
    %3555 = vmatprep.subr.mxu0 0.0
    %3556 = vmatpush2.msra.mxu0 0.0
    %3557 = vmatprep.subr.mxu0 0.0
    %3558 = vmatpush2.msra.mxu0 0.0
    %3559 = vmatprep.subr.mxu0 0.0
    %3560 = vmatpush2.msra.mxu0 0.0
    %3561 = vmatprep.subr.mxu0 0.0
    %3562 = vmatpush2.msra.mxu0 0.0
    %3563 = vmatprep.mubr.f32.mxu0 0.0
    %3564 = vmatmul.mubr.f32.gmra.mxu0 %v3426
    %v3565 = vpop.f32.mrf.mxu0
    %v3566 = vadd.f32 0.0, %v3565
    %v3567 = vpop.f32.mrf.mxu0
    %v3568 = vadd.f32 0.0, %v3567
    %3569 = vdwg.mxu0
    %v3570 = vadd.f32 %v3422, %v3495
    %v3571 = vadd.f32 %v3423, %v3497
    %v3572 = vadd.f32 %v3424, %v3566
    %v3573 = vadd.f32 %v3425, %v3568
    %v3574 = vxor.u32 %v3570, 2147483648
    %v3575 = vmul.f32 %v3574, 1.442695
    %v3576 = vpow.pop %v3575
    %v3577 = vadd.f32 %v3576, 1.0
    %v3578 = vrcp.pop %v3577
    %v3579 = vmul.f32 1.0, %v3578
    %v3580 = vxor.u32 %v3571, 2147483648
    %v3581 = vmul.f32 %v3580, 1.442695
    %v3582 = vpow.pop %v3581
    %v3583 = vadd.f32 %v3582, 1.0
    %v3584 = vrcp.pop %v3583
    %v3585 = vmul.f32 1.0, %v3584
    %v3586 = vtanh.pop %v3572
    %v3587 = vxor.u32 %v3573, 2147483648
    %v3588 = vmul.f32 %v3587, 1.442695
    %v3589 = vpow.pop %v3588
    %v3590 = vadd.f32 %v3589, 1.0
    %v3591 = vrcp.pop %v3590
    %v3592 = vmul.f32 1.0, %v3591
    %v3593 = vmul.f32 %v3585, %v3427
    %v3594 = vmul.f32 %v3579, %v3586
    %v3595 = vadd.f32 %v3593, %v3594
    %v3596 = vtanh.pop %v3595
    %v3597 = vmul.f32 %v3592, %v3596
    %v3598 = vld [vmem:[#allocation3] sm:$0xff]
    %v3599 = vld [vmem:[#allocation3 + $0x8] sm:$0xff]
    %v3600 = vld [vmem:[#allocation3 + $0x10] sm:$0xff]
    %v3601 = vld [vmem:[#allocation3 + $0x18] sm:$0xff]
    %v3602 = vld [vmem:[#allocation6] sm:$0xff]
    %v3603 = vld [vmem:[#allocation7] sm:$0xff]
    %3604 = vmatprep.subr.mxu0 %v816
    %3605 = vmatpush1.msra.mxu0 %v815
    %3606 = vmatprep.subr.mxu0 %v812
    %3607 = vmatpush1.msra.mxu0 %v811
    %3608 = vmatprep.subr.mxu0 %v808
    %3609 = vmatpush1.msra.mxu0 %v807
    %3610 = vmatprep.subr.mxu0 %v804
    %3611 = vmatpush1.msra.mxu0 %v803
    %3612 = vmatprep.subr.mxu0 %v800
    %3613 = vmatpush1.msra.mxu0 %v799
    %3614 = vmatprep.subr.mxu0 %v796
    %3615 = vmatpush1.msra.mxu0 %v795
    %3616 = vmatprep.subr.mxu0 %v792
    %3617 = vmatpush1.msra.mxu0 %v791
    %3618 = vmatprep.subr.mxu0 %v788
    %3619 = vmatpush1.msra.mxu0 %v787
    %3620 = vmatprep.subr.mxu0 %v784
    %3621 = vmatpush1.msra.mxu0 %v783
    %3622 = vmatprep.subr.mxu0 %v780
    %3623 = vmatpush1.msra.mxu0 %v779
    %3624 = vmatprep.subr.mxu0 %v776
    %3625 = vmatpush1.msra.mxu0 %v775
    %3626 = vmatprep.subr.mxu0 %v772
    %3627 = vmatpush1.msra.mxu0 %v771
    %3628 = vmatprep.subr.mxu0 %v768
    %3629 = vmatpush1.msra.mxu0 %v767
    %3630 = vmatprep.subr.mxu0 %v764
    %3631 = vmatpush1.msra.mxu0 %v763
    %3632 = vmatprep.subr.mxu0 %v760
    %3633 = vmatpush1.msra.mxu0 %v759
    %3634 = vmatprep.subr.mxu0 %v756
    %3635 = vmatpush1.msra.mxu0 %v755
    %3636 = vmatprep.subr.mxu0 0.0
    %3637 = vmatpush2.msra.mxu0 0.0
    %3638 = vmatprep.subr.mxu0 0.0
    %3639 = vmatpush2.msra.mxu0 0.0
    %3640 = vmatprep.subr.mxu0 0.0
    %3641 = vmatpush2.msra.mxu0 0.0
    %3642 = vmatprep.subr.mxu0 0.0
    %3643 = vmatpush2.msra.mxu0 0.0
    %3644 = vmatprep.subr.mxu0 0.0
    %3645 = vmatpush2.msra.mxu0 0.0
    %3646 = vmatprep.subr.mxu0 0.0
    %3647 = vmatpush2.msra.mxu0 0.0
    %3648 = vmatprep.subr.mxu0 0.0
    %3649 = vmatpush2.msra.mxu0 0.0
    %3650 = vmatprep.subr.mxu0 0.0
    %3651 = vmatpush2.msra.mxu0 0.0
    %3652 = vmatprep.subr.mxu0 0.0
    %3653 = vmatpush2.msra.mxu0 0.0
    %3654 = vmatprep.subr.mxu0 0.0
    %3655 = vmatpush2.msra.mxu0 0.0
    %3656 = vmatprep.subr.mxu0 0.0
    %3657 = vmatpush2.msra.mxu0 0.0
    %3658 = vmatprep.subr.mxu0 0.0
    %3659 = vmatpush2.msra.mxu0 0.0
    %3660 = vmatprep.subr.mxu0 0.0
    %3661 = vmatpush2.msra.mxu0 0.0
    %3662 = vmatprep.subr.mxu0 0.0
    %3663 = vmatpush2.msra.mxu0 0.0
    %3664 = vmatprep.subr.mxu0 0.0
    %3665 = vmatpush2.msra.mxu0 0.0
    %3666 = vmatprep.subr.mxu0 0.0
    %3667 = vmatpush2.msra.mxu0 0.0
    %3668 = vmatprep.mubr.f32.mxu0 0.0
    %3669 = vmatmul.mubr.f32.gmra.mxu0 %v3602
    %v3670 = vpop.f32.mrf.mxu0
    %v3671 = vadd.f32 0.0, %v3670
    %v3672 = vpop.f32.mrf.mxu0
    %v3673 = vadd.f32 0.0, %v3672
    %3674 = vdwg.mxu0
    %3675 = vmatprep.subr.mxu0 %v818
    %3676 = vmatpush1.msra.mxu0 %v817
    %3677 = vmatprep.subr.mxu0 %v814
    %3678 = vmatpush1.msra.mxu0 %v813
    %3679 = vmatprep.subr.mxu0 %v810
    %3680 = vmatpush1.msra.mxu0 %v809
    %3681 = vmatprep.subr.mxu0 %v806
    %3682 = vmatpush1.msra.mxu0 %v805
    %3683 = vmatprep.subr.mxu0 %v802
    %3684 = vmatpush1.msra.mxu0 %v801
    %3685 = vmatprep.subr.mxu0 %v798
    %3686 = vmatpush1.msra.mxu0 %v797
    %3687 = vmatprep.subr.mxu0 %v794
    %3688 = vmatpush1.msra.mxu0 %v793
    %3689 = vmatprep.subr.mxu0 %v790
    %3690 = vmatpush1.msra.mxu0 %v789
    %3691 = vmatprep.subr.mxu0 %v786
    %3692 = vmatpush1.msra.mxu0 %v785
    %3693 = vmatprep.subr.mxu0 %v782
    %3694 = vmatpush1.msra.mxu0 %v781
    %3695 = vmatprep.subr.mxu0 %v778
    %3696 = vmatpush1.msra.mxu0 %v777
    %3697 = vmatprep.subr.mxu0 %v774
    %3698 = vmatpush1.msra.mxu0 %v773
    %3699 = vmatprep.subr.mxu0 %v770
    %3700 = vmatpush1.msra.mxu0 %v769
    %3701 = vmatprep.subr.mxu0 %v766
    %3702 = vmatpush1.msra.mxu0 %v765
    %3703 = vmatprep.subr.mxu0 %v762
    %3704 = vmatpush1.msra.mxu0 %v761
    %3705 = vmatprep.subr.mxu0 %v758
    %3706 = vmatpush1.msra.mxu0 %v757
    %3707 = vmatprep.subr.mxu0 0.0
    %3708 = vmatpush2.msra.mxu0 0.0
    %3709 = vmatprep.subr.mxu0 0.0
    %3710 = vmatpush2.msra.mxu0 0.0
    %3711 = vmatprep.subr.mxu0 0.0
    %3712 = vmatpush2.msra.mxu0 0.0
    %3713 = vmatprep.subr.mxu0 0.0
    %3714 = vmatpush2.msra.mxu0 0.0
    %3715 = vmatprep.subr.mxu0 0.0
    %3716 = vmatpush2.msra.mxu0 0.0
    %3717 = vmatprep.subr.mxu0 0.0
    %3718 = vmatpush2.msra.mxu0 0.0
    %3719 = vmatprep.subr.mxu0 0.0
    %3720 = vmatpush2.msra.mxu0 0.0
    %3721 = vmatprep.subr.mxu0 0.0
    %3722 = vmatpush2.msra.mxu0 0.0
    %3723 = vmatprep.subr.mxu0 0.0
    %3724 = vmatpush2.msra.mxu0 0.0
    %3725 = vmatprep.subr.mxu0 0.0
    %3726 = vmatpush2.msra.mxu0 0.0
    %3727 = vmatprep.subr.mxu0 0.0
    %3728 = vmatpush2.msra.mxu0 0.0
    %3729 = vmatprep.subr.mxu0 0.0
    %3730 = vmatpush2.msra.mxu0 0.0
    %3731 = vmatprep.subr.mxu0 0.0
    %3732 = vmatpush2.msra.mxu0 0.0
    %3733 = vmatprep.subr.mxu0 0.0
    %3734 = vmatpush2.msra.mxu0 0.0
    %3735 = vmatprep.subr.mxu0 0.0
    %3736 = vmatpush2.msra.mxu0 0.0
    %3737 = vmatprep.subr.mxu0 0.0
    %3738 = vmatpush2.msra.mxu0 0.0
    %3739 = vmatprep.mubr.f32.mxu0 0.0
    %3740 = vmatmul.mubr.f32.gmra.mxu0 %v3602
    %v3741 = vpop.f32.mrf.mxu0
    %v3742 = vadd.f32 0.0, %v3741
    %v3743 = vpop.f32.mrf.mxu0
    %v3744 = vadd.f32 0.0, %v3743
    %3745 = vdwg.mxu0
    %v3746 = vadd.f32 %v3598, %v3671
    %v3747 = vadd.f32 %v3599, %v3673
    %v3748 = vadd.f32 %v3600, %v3742
    %v3749 = vadd.f32 %v3601, %v3744
    %v3750 = vxor.u32 %v3746, 2147483648
    %v3751 = vmul.f32 %v3750, 1.442695
    %v3752 = vpow.pop %v3751
    %v3753 = vadd.f32 %v3752, 1.0
    %v3754 = vrcp.pop %v3753
    %v3755 = vmul.f32 1.0, %v3754
    %v3756 = vxor.u32 %v3747, 2147483648
    %v3757 = vmul.f32 %v3756, 1.442695
    %v3758 = vpow.pop %v3757
    %v3759 = vadd.f32 %v3758, 1.0
    %v3760 = vrcp.pop %v3759
    %v3761 = vmul.f32 1.0, %v3760
    %v3762 = vtanh.pop %v3748
    %v3763 = vxor.u32 %v3749, 2147483648
    %v3764 = vmul.f32 %v3763, 1.442695
    %v3765 = vpow.pop %v3764
    %v3766 = vadd.f32 %v3765, 1.0
    %v3767 = vrcp.pop %v3766
    %v3768 = vmul.f32 1.0, %v3767
    %v3769 = vmul.f32 %v3761, %v3603
    %v3770 = vmul.f32 %v3755, %v3762
    %v3771 = vadd.f32 %v3769, %v3770
    %v3772 = vtanh.pop %v3771
    %v3773 = vmul.f32 %v3768, %v3772
    %v3774 = vsel %vm1189, %v3597, %v3426
    %3775 = vst [vmem:[#allocation4] sm:$0xff] %v3774
    %v3776 = vld [vmem:[#allocation5] sm:$0xff]
    %v3777 = vsel %vm1189, %v3595, %v3776
    %3778 = vst [vmem:[#allocation5] sm:$0xff] %v3777
    %v3779 = vld [vmem:[#allocation6] sm:$0xff]
    %v3780 = vsel %vm1178, %v3773, %v3779
    %3781 = vst [vmem:[#allocation6] sm:$0xff] %v3780
    %v3782 = vld [vmem:[#allocation7] sm:$0xff]
    %v3783 = vsel %vm1178, %v3771, %v3782
    %3784 = vst [vmem:[#allocation7] sm:$0xff] %v3783
    %v3785 = vld [vmem:[#allocation4] sm:$0xff]
    %3786 = vst [vmem:[#allocation16] sm:$0xff] %v3785
    %v3787 = vld [vmem:[#allocation6] sm:$0xff]
    %s3788 = scalar_lea.vmem [#allocation16], 8
    %3789 = vst [vmem:[%s3788] sm:$0xff] %v3787
    // Predicated region
    $region42: #{tpu_custom_call.1} parent=1 // pred_check
      _
    $region43: #{tpu_custom_call.1} parent=1 // pred_check_branch
      %3791 = sbr.rel (0) target = $region45
    $region44: #{tpu_custom_call.1} parent=1 // pred_region
      %s3793 = ssub.s32 256, 256
      %3794 = vsyncadd [#allocation10], %s3793
      %s3795 = sshll.u32 [#allocation16], 4
      %s3796 = int_to_ptr.vmem [resolvable:$true] %s3795
      %3801 = dma.vmem_to_hbm [thread:$0]  %s3796, 256, %s6, [#allocation10], 128, 128, 8
    $region45: #{tpu_custom_call.1} parent=1 // pred_fallthru
      _
    // Predicated region
    $region46: #{tpu_custom_call.1} parent=1 // pred_check
      _
    $region47: #{tpu_custom_call.1} parent=1 // pred_check_branch
      %3803 = sbr.rel (0) target = $region49
    $region48: #{tpu_custom_call.1} parent=1 // pred_region
      %3804 = dma.done [#allocation10], 256
    $region49: #{tpu_custom_call.1} parent=1 // pred_fallthru
      _
    %3805 = vsyncpa [#allocation9], 1
    %3806 = vsyncpa [#allocation12], 1
    %3807 = vsyncpa [#allocation15], 1
    %3808 = vsyncpa [#allocation10], 1

</llo_original>
